<compile_context>
chip_gen: v6e
topology: v6e:2x2x1
jax: 0.10.0
libtpu: 0.0.40
codegen_flags: <defaults>
</compile_context>

<pallas_src>
import jax
import jax.numpy as jnp
from jax.experimental import pallas as pl
from jax.experimental.pallas import tpu as pltpu

# ---- small, deterministic "opt" configuration ------------------------------
N_CLASSES = 8          # opt.n_classes
N_DOMAINS = 4          # opt.n_domains
LATENT_DIM = 32        # opt.latent_dim
CHANNELS = 1           # opt.channels
IMG_SIZE = 16          # opt.img_size
IMG_PROD = CHANNELS * IMG_SIZE * IMG_SIZE
BATCH = 8

# Linear layer dims, exactly as in the PyTorch Sequential
LAYER_DIMS = [LATENT_DIM + N_CLASSES, 128, 256, 256, 512, 512, 1024, IMG_PROD]
BN_EPS = 0.8           # nn.BatchNorm1d(out_feat, 0.8) -> eps = 0.8
LEAKY_SLOPE = 0.2


# ---------------------------------------------------------------------------
# Packed-vector layout: bias0, scale0 | (gamma, beta, scale) x 5 | bias6, scale6
# Every size is a multiple of 128, so all offsets are 128-lane aligned.
# ---------------------------------------------------------------------------
def _build_vec_layout():
    layout, off = {}, 0

    def add(key, n):
        nonlocal off
        layout[key] = (off, n)
        off += n

    add(("bias", 0), LAYER_DIMS[1])
    add(("scale", 0), LAYER_DIMS[1])
    for li in range(1, 6):
        out_f = LAYER_DIMS[li + 1]
        add(("gamma", li), out_f)
        add(("beta", li), out_f)
        add(("scale", li), out_f)
    add(("bias", 6), LAYER_DIMS[7])
    add(("scale", 6), LAYER_DIMS[7])
    return layout, off


VEC_LAYOUT, VEC_TOTAL = _build_vec_layout()   # VEC_TOTAL == 8448 (66 * 128)


# ---------------------------------------------------------------------------
# Pallas kernel: fused embedding lookup + MLP
#   onehot-gather -> (Linear -> LeakyReLU)
#   -> 5x (Linear -> BN(train, eps=0.8) -> LeakyReLU) -> Linear -> Tanh
# Weights are int8 in HBM/VMEM, dequantized to bf16 in-kernel; activations and
# MXU accumulation stay f32.
# ---------------------------------------------------------------------------
def generator_mlp_kernel(labels_ref, domain_ref, lemb_ref, demb_ref,
                         w0a, w0b, w1, w2, w3, w4, w5, w6, vec_ref, out_ref):
    tb = out_ref.shape[0]
    inv_b = 1.0 / float(tb)

    def vslice(name, li):
        off, size = VEC_LAYOUT[(name, li)]
        return vec_ref[:, off:off + size]

    def deq(ref):
        # int8 values are exactly representable in bf16; scale applied post-matmul.
        return ref[...].astype(jnp.float32).astype(jnp.bfloat16)

    # ---- fused embedding lookups: exact one-hot matmuls (replaces jnp.take+concat)
    lbl = labels_ref[...]                                      # (TB, 1) int32
    dom = domain_ref[...]                                      # (TB, 1) int32
    lbl_oh = (lbl == jax.lax.broadcasted_iota(jnp.int32, (tb, N_CLASSES), 1)
              ).astype(jnp.float32)                            # (TB, 8)
    dom_oh = (dom == jax.lax.broadcasted_iota(jnp.int32, (tb, N_DOMAINS), 1)
              ).astype(jnp.float32)                            # (TB, 4)
    le = jnp.dot(lbl_oh, lemb_ref[...], preferred_element_type=jnp.float32)
    de = jnp.dot(dom_oh, demb_ref[...], preferred_element_type=jnp.float32)

    # ---- block 0: split Linear (label rows + domain rows of W0) -> +bias -> LReLU
    h = (jnp.dot(le.astype(jnp.bfloat16), deq(w0a), preferred_element_type=jnp.float32)
         + jnp.dot(de.astype(jnp.bfloat16), deq(w0b), preferred_element_type=jnp.float32))
    h = h * vslice("scale", 0) + vslice("bias", 0)
    h = jnp.where(h > 0, h, LEAKY_SLOPE * h)

    # ---- blocks 1..5: Linear (bias folded away by BN) -> fused one-pass BN -> LReLU
    w_refs = (None, w1, w2, w3, w4, w5, w6)
    for li in range(1, 6):
        h = jnp.dot(h.astype(jnp.bfloat16), deq(w_refs[li]),
                    preferred_element_type=jnp.float32)
        h = h * vslice("scale", li)
        gamma = vslice("gamma", li)
        beta = vslice("beta", li)
        s1 = jnp.sum(h, axis=0, keepdims=True)
        s2 = jnp.sum(h * h, axis=0, keepdims=True)
        mean = s1 * inv_b
        var = jnp.maximum(s2 * inv_b - mean * mean, 0.0)      # clamp (cheap, safe)
        scale = gamma * jax.lax.rsqrt(var + BN_EPS)
        shift = beta - mean * scale
        h = h * scale + shift
        h = jnp.where(h > 0, h, LEAKY_SLOPE * h)

    # ---- final Linear(1024, prod(img_shape)) + Tanh
    h = jnp.dot(h.astype(jnp.bfloat16), deq(w_refs[6]),
                preferred_element_type=jnp.float32)
    h = h * vslice("scale", 6) + vslice("bias", 6)
    out_ref[...] = jnp.tanh(h)


# ---------------------------------------------------------------------------
# Parameter construction (deterministic, synthetic) + per-channel int8 quant
# ---------------------------------------------------------------------------
def _quantize_int8(w):
    amax = jnp.max(jnp.abs(w), axis=0, keepdims=True)          # (1, out)
    scale = jnp.where(amax > 0, amax / 127.0, 1.0)
    w_q = jnp.clip(jnp.round(w / scale), -127, 127).astype(jnp.int8)
    return w_q, scale.astype(jnp.float32)


def init_params(key):
    params = {}
    key, k1, k2 = jax.random.split(key, 3)
    params["label_emb"] = jax.random.normal(k1, (N_CLASSES, N_CLASSES), jnp.float32)
    params["domain_emb"] = jax.random.normal(k2, (N_DOMAINS, LATENT_DIM), jnp.float32)

    weights = []                       # [w0a, w0b, w1..w6] as int8
    vec = jnp.zeros((1, VEC_TOTAL), jnp.float32)
    ref_bn_bias = {}                   # redundant Linear biases of BN layers (ref only)

    for li in range(7):
        fan_in, fan_out = LAYER_DIMS[li], LAYER_DIMS[li + 1]
        key, kw, kb = jax.random.split(key, 3)
        bound = 1.0 / float(fan_in) ** 0.5
        w = jax.random.uniform(kw, (fan_in, fan_out), jnp.float32, -bound, bound)
        b = jax.random.uniform(kb, (1, fan_out), jnp.float32, -bound, bound)

        w_q, scale = _quantize_int8(w)
        soff, ssz = VEC_LAYOUT[("scale", li)]
        vec = vec.at[:, soff:soff + ssz].set(scale)
        if li == 0:
            weights.append(w_q[:N_CLASSES])    # rows hit by label_emb features
            weights.append(w_q[N_CLASSES:])    # rows hit by domain_emb features
        else:
            weights.append(w_q)

        if li in (0, 6):                       # the only biases that survive BN
            off, size = VEC_LAYOUT[("bias", li)]
            vec = vec.at[:, off:off + size].set(b)
        else:                                  # kept only to validate cancellation
            ref_bn_bias[li] = b

        if 1 <= li <= 5:                       # BatchNorm affine params
            key, kg, kbe = jax.random.split(key, 3)
            gamma = 1.0 + 0.1 * jax.random.normal(kg, (1, fan_out), jnp.float32)
            beta = 0.1 * jax.random.normal(kbe, (1, fan_out), jnp.float32)
            goff, gsz = VEC_LAYOUT[("gamma", li)]
            boff, bsz = VEC_LAYOUT[("beta", li)]
            vec = vec.at[:, goff:goff + gsz].set(gamma)
            vec = vec.at[:, boff:boff + bsz].set(beta)

    params["weights"] = weights
    params["vec"] = vec
    params["ref_bn_bias"] = ref_bn_bias
    return params


# ---------------------------------------------------------------------------
# Wrapper: single fused pallas_call (batch grid, weights VMEM-resident)
# ---------------------------------------------------------------------------
@jax.jit
def generator_forward(domain, labels, label_emb, domain_emb, vec, *weights):
    b = labels.shape[0]
    tb = b if b <= 128 else 128
    assert b % tb == 0, "demo wrapper assumes batch divisible by the tile"
    grid = (b // tb,)

    labels2 = labels.reshape(b, 1).astype(jnp.int32)
    domain2 = domain.reshape(b, 1).astype(jnp.int32)

    row_map = lambda i: (i, 0)        # batch-tiled operands
    const_map = lambda i: (0, 0)      # VMEM-resident operands (loaded once/call)

    in_specs = (
        [pl.BlockSpec((tb, 1), row_map),                 # labels
         pl.BlockSpec((tb, 1), row_map),                 # domain
         pl.BlockSpec(label_emb.shape, const_map),       # label_emb
         pl.BlockSpec(domain_emb.shape, const_map)]      # domain_emb
        + [pl.BlockSpec(w.shape, const_map) for w in weights]
        + [pl.BlockSpec(vec.shape, const_map)]
    )
    out_specs = pl.BlockSpec((tb, IMG_PROD), row_map)

    total_w_elems = sum(int(w.size) for w in weights)    # int8 -> elems == bytes
    cost = pl.CostEstimate(
        flops=2 * b * total_w_elems,
        transcendentals=b * IMG_PROD,
        bytes_accessed=total_w_elems + VEC_TOTAL * 4 + b * IMG_PROD * 4,
    )

    out = pl.pallas_call(
        generator_mlp_kernel,
        out_shape=jax.ShapeDtypeStruct((b, IMG_PROD), jnp.float32),
        grid_spec=pltpu.PrefetchScalarGridSpec(
            num_scalar_prefetch=0,
            grid=grid,
            in_specs=in_specs,
            out_specs=out_specs,
        ),
        compiler_params=pltpu.CompilerParams(
            dimension_semantics=("parallel",)),          # megacore batch shard on v7x
        cost_estimate=cost,
    )(labels2, domain2, label_emb, domain_emb, *weights, vec)

    # img.view(B, C, H, W) to match the PyTorch module.
    # TODO(synk): consumers that accept the flat (B, 256) slab should skip this
    #             lane-sparse NCHW relayout.
    return out.reshape(b, CHANNELS, IMG_SIZE, IMG_SIZE)


# ---------------------------------------------------------------------------
# Pure-JAX reference: faithful original-module structure (gather + concat,
# Linear WITH bias on BN layers, two-pass BatchNorm), same int8 weights/scales.
# ---------------------------------------------------------------------------
def reference_forward(domain, labels, params):
    le = jnp.take(params["label_emb"], labels, axis=0)
    de = jnp.take(params["domain_emb"], domain, axis=0)
    h = jnp.concatenate([le, de], axis=-1)
    vec = params["vec"]
    weights = params["weights"]

    def vget(name, li):
        off, size = VEC_LAYOUT[(name, li)]
        return vec[:, off:off + size]

    def deq_dot(x, w_q):
        wb = w_q.astype(jnp.float32).astype(jnp.bfloat16)
        return jnp.dot(x.astype(jnp.bfloat16), wb, preferred_element_type=jnp.float32)

    w0_q = jnp.concatenate([weights[0], weights[1]], axis=0)
    h = deq_dot(h, w0_q) * vget("scale", 0) + vget("bias", 0)
    h = jnp.where(h > 0, h, LEAKY_SLOPE * h)

    for li in range(1, 6):
        h = deq_dot(h, weights[li + 1]) * vget("scale", li)
        h = h + params["ref_bn_bias"][li]            # cancelled by BN below
        mean = jnp.mean(h, axis=0, keepdims=True)
        var = jnp.mean((h - mean) ** 2, axis=0, keepdims=True)
        h = (h - mean) * jax.lax.rsqrt(var + BN_EPS) * vget("gamma", li) \
            + vget("beta", li)
        h = jnp.where(h > 0, h, LEAKY_SLOPE * h)

    h = deq_dot(h, weights[7]) * vget("scale", 6) + vget("bias", 6)
    h = jnp.tanh(h)
    return h.reshape(h.shape[0], CHANNELS, IMG_SIZE, IMG_SIZE)


if __name__ == "__main__":
    key = jax.random.PRNGKey(0)
    params = init_params(key)

    key, kd, kl = jax.random.split(key, 3)
    domain = jax.random.randint(kd, (BATCH,), 0, N_DOMAINS, dtype=jnp.int32)
    labels = jax.random.randint(kl, (BATCH,), 0, N_CLASSES, dtype=jnp.int32)

    img = generator_forward(
        domain, labels, params["label_emb"], params["domain_emb"],
        params["vec"], *params["weights"]
    )
    img = jax.block_until_ready(img)

    ref = reference_forward(domain, labels, params)
    assert img.shape == (BATCH, CHANNELS, IMG_SIZE, IMG_SIZE)
    max_err = float(jnp.max(jnp.abs(img - ref)))
    assert jnp.allclose(img, ref, rtol=5e-3, atol=5e-3), max_err

    print("KERNEL_OK")
</pallas_src>

<mosaic_0001>
module attributes {stable_mosaic.version = 11 : i64} {
  func.func @generator_mlp_kernel(%arg0: i32, %arg1: memref<8x1xi32, #tpu.memory_space<vmem>>, %arg2: memref<8x1xi32, #tpu.memory_space<vmem>>, %arg3: memref<8x8xf32, #tpu.memory_space<vmem>>, %arg4: memref<4x32xf32, #tpu.memory_space<vmem>>, %arg5: memref<8x128xi8, #tpu.memory_space<vmem>>, %arg6: memref<32x128xi8, #tpu.memory_space<vmem>>, %arg7: memref<128x256xi8, #tpu.memory_space<vmem>>, %arg8: memref<256x256xi8, #tpu.memory_space<vmem>>, %arg9: memref<256x512xi8, #tpu.memory_space<vmem>>, %arg10: memref<512x512xi8, #tpu.memory_space<vmem>>, %arg11: memref<512x1024xi8, #tpu.memory_space<vmem>>, %arg12: memref<1024x256xi8, #tpu.memory_space<vmem>>, %arg13: memref<1x8448xf32, #tpu.memory_space<vmem>>, %arg14: memref<8x256xf32, #tpu.memory_space<vmem>>) attributes {dimension_semantics = [#tpu.dimension_semantics<parallel>], iteration_bounds = array<i64: 1>, scalar_prefetch = 0 : i64, scratch_operands = 0 : i64, tpu.core_type = #tpu.core_type<tc>, window_params = [{transform_indices = @transform_0, window_bounds = array<i64: 8, 1>}, {transform_indices = @transform_1, window_bounds = array<i64: 8, 1>}, {pipeline_mode = #tpu.pipeline_mode<synchronous>, transform_indices = @transform_2, window_bounds = array<i64: 8, 8>}, {pipeline_mode = #tpu.pipeline_mode<synchronous>, transform_indices = @transform_3, window_bounds = array<i64: 4, 32>}, {pipeline_mode = #tpu.pipeline_mode<synchronous>, transform_indices = @transform_4, window_bounds = array<i64: 8, 128>}, {pipeline_mode = #tpu.pipeline_mode<synchronous>, transform_indices = @transform_5, window_bounds = array<i64: 32, 128>}, {pipeline_mode = #tpu.pipeline_mode<synchronous>, transform_indices = @transform_6, window_bounds = array<i64: 128, 256>}, {pipeline_mode = #tpu.pipeline_mode<synchronous>, transform_indices = @transform_7, window_bounds = array<i64: 256, 256>}, {pipeline_mode = #tpu.pipeline_mode<synchronous>, transform_indices = @transform_8, window_bounds = array<i64: 256, 512>}, {pipeline_mode = #tpu.pipeline_mode<synchronous>, transform_indices = @transform_9, window_bounds = array<i64: 512, 512>}, {pipeline_mode = #tpu.pipeline_mode<synchronous>, transform_indices = @transform_10, window_bounds = array<i64: 512, 1024>}, {pipeline_mode = #tpu.pipeline_mode<synchronous>, transform_indices = @transform_11, window_bounds = array<i64: 1024, 256>}, {pipeline_mode = #tpu.pipeline_mode<synchronous>, transform_indices = @transform_12, window_bounds = array<i64: 1, 8448>}, {transform_indices = @transform_13, window_bounds = array<i64: 8, 256>}]} {
    %c0 = arith.constant 0 : index
    %c0_0 = arith.constant 0 : index
    %0 = vector.load %arg1[%c0, %c0_0] : memref<8x1xi32, #tpu.memory_space<vmem>>, vector<8x1xi32>
    %c0_1 = arith.constant 0 : index
    %c0_2 = arith.constant 0 : index
    %1 = vector.load %arg2[%c0_1, %c0_2] : memref<8x1xi32, #tpu.memory_space<vmem>>, vector<8x1xi32>
    %2 = tpu.iota {dimensions = array<i32: 1>} : vector<8x8xi32>
    %3 = vector.broadcast %0 : vector<8x1xi32> to vector<8x8xi32>
    %4 = arith.cmpi eq, %3, %2 : vector<8x8xi32>
    %5 = arith.extui %4 : vector<8x8xi1> to vector<8x8xi32>
    %6 = arith.sitofp %5 : vector<8x8xi32> to vector<8x8xf32>
    %7 = tpu.iota {dimensions = array<i32: 1>} : vector<8x4xi32>
    %8 = vector.broadcast %1 : vector<8x1xi32> to vector<8x4xi32>
    %9 = arith.cmpi eq, %8, %7 : vector<8x4xi32>
    %10 = arith.extui %9 : vector<8x4xi1> to vector<8x4xi32>
    %11 = arith.sitofp %10 : vector<8x4xi32> to vector<8x4xf32>
    %c0_3 = arith.constant 0 : index
    %c0_4 = arith.constant 0 : index
    %12 = vector.load %arg3[%c0_3, %c0_4] : memref<8x8xf32, #tpu.memory_space<vmem>>, vector<8x8xf32>
    %cst = arith.constant dense<0.000000e+00> : vector<8x8xf32>
    %13 = tpu.matmul %6, %12, %cst {dimension_numbers = #tpu.dot_dimension_numbers<[1], [0], [0], [1], [0, 0, 1, 1], [], []>} : vector<8x8xf32>, vector<8x8xf32>, vector<8x8xf32> -> vector<8x8xf32>
    %c0_5 = arith.constant 0 : index
    %c0_6 = arith.constant 0 : index
    %14 = vector.load %arg4[%c0_5, %c0_6] : memref<4x32xf32, #tpu.memory_space<vmem>>, vector<4x32xf32>
    %cst_7 = arith.constant dense<0.000000e+00> : vector<8x32xf32>
    %15 = tpu.matmul %11, %14, %cst_7 {dimension_numbers = #tpu.dot_dimension_numbers<[1], [0], [0], [1], [0, 0, 1, 1], [], []>} : vector<8x4xf32>, vector<4x32xf32>, vector<8x32xf32> -> vector<8x32xf32>
    %16 = arith.truncf %13 : vector<8x8xf32> to vector<8x8xbf16>
    %c0_8 = arith.constant 0 : index
    %c0_9 = arith.constant 0 : index
    %17 = vector.load %arg5[%c0_8, %c0_9] : memref<8x128xi8, #tpu.memory_space<vmem>>, vector<8x128xi8>
    %18 = arith.sitofp %17 : vector<8x128xi8> to vector<8x128xf32>
    %19 = arith.truncf %18 : vector<8x128xf32> to vector<8x128xbf16>
    %cst_10 = arith.constant dense<0.000000e+00> : vector<8x128xf32>
    %20 = tpu.matmul %16, %19, %cst_10 {dimension_numbers = #tpu.dot_dimension_numbers<[1], [0], [0], [1], [0, 0, 1, 1], [], []>} : vector<8x8xbf16>, vector<8x128xbf16>, vector<8x128xf32> -> vector<8x128xf32>
    %21 = arith.truncf %15 : vector<8x32xf32> to vector<8x32xbf16>
    %c0_11 = arith.constant 0 : index
    %c0_12 = arith.constant 0 : index
    %22 = vector.load %arg6[%c0_11, %c0_12] : memref<32x128xi8, #tpu.memory_space<vmem>>, vector<32x128xi8>
    %23 = arith.sitofp %22 : vector<32x128xi8> to vector<32x128xf32>
    %24 = arith.truncf %23 : vector<32x128xf32> to vector<32x128xbf16>
    %cst_13 = arith.constant dense<0.000000e+00> : vector<8x128xf32>
    %25 = tpu.matmul %21, %24, %cst_13 {dimension_numbers = #tpu.dot_dimension_numbers<[1], [0], [0], [1], [0, 0, 1, 1], [], []>} : vector<8x32xbf16>, vector<32x128xbf16>, vector<8x128xf32> -> vector<8x128xf32>
    %26 = arith.addf %20, %25 : vector<8x128xf32>
    %c0_14 = arith.constant 0 : index
    %c128 = arith.constant 128 : index
    %27 = vector.load %arg13[%c0_14, %c128] : memref<1x8448xf32, #tpu.memory_space<vmem>>, vector<1x128xf32>
    %28 = vector.broadcast %27 : vector<1x128xf32> to vector<8x128xf32>
    %29 = arith.mulf %26, %28 : vector<8x128xf32>
    %c0_15 = arith.constant 0 : index
    %c0_16 = arith.constant 0 : index
    %30 = vector.load %arg13[%c0_15, %c0_16] : memref<1x8448xf32, #tpu.memory_space<vmem>>, vector<1x128xf32>
    %31 = vector.broadcast %30 : vector<1x128xf32> to vector<8x128xf32>
    %32 = arith.addf %29, %31 : vector<8x128xf32>
    %cst_17 = arith.constant 0.000000e+00 : f32
    %33 = vector.broadcast %cst_17 : f32 to vector<8x128xf32>
    %34 = arith.cmpf ogt, %32, %33 : vector<8x128xf32>
    %cst_18 = arith.constant 2.000000e-01 : f32
    %35 = vector.broadcast %cst_18 : f32 to vector<8x128xf32>
    %36 = arith.mulf %35, %32 : vector<8x128xf32>
    %37 = arith.select %34, %32, %36 : vector<8x128xi1>, vector<8x128xf32>
    %38 = arith.truncf %37 : vector<8x128xf32> to vector<8x128xbf16>
    %c0_19 = arith.constant 0 : index
    %c0_20 = arith.constant 0 : index
    %39 = vector.load %arg7[%c0_19, %c0_20] : memref<128x256xi8, #tpu.memory_space<vmem>>, vector<128x256xi8>
    %40 = arith.sitofp %39 : vector<128x256xi8> to vector<128x256xf32>
    %41 = arith.truncf %40 : vector<128x256xf32> to vector<128x256xbf16>
    %cst_21 = arith.constant dense<0.000000e+00> : vector<8x256xf32>
    %42 = tpu.matmul %38, %41, %cst_21 {dimension_numbers = #tpu.dot_dimension_numbers<[1], [0], [0], [1], [0, 0, 1, 1], [], []>} : vector<8x128xbf16>, vector<128x256xbf16>, vector<8x256xf32> -> vector<8x256xf32>
    %c0_22 = arith.constant 0 : index
    %c768 = arith.constant 768 : index
    %43 = vector.load %arg13[%c0_22, %c768] : memref<1x8448xf32, #tpu.memory_space<vmem>>, vector<1x256xf32>
    %44 = vector.broadcast %43 : vector<1x256xf32> to vector<8x256xf32>
    %45 = arith.mulf %42, %44 : vector<8x256xf32>
    %c0_23 = arith.constant 0 : index
    %c256 = arith.constant 256 : index
    %46 = vector.load %arg13[%c0_23, %c256] : memref<1x8448xf32, #tpu.memory_space<vmem>>, vector<1x256xf32>
    %c0_24 = arith.constant 0 : index
    %c512 = arith.constant 512 : index
    %47 = vector.load %arg13[%c0_24, %c512] : memref<1x8448xf32, #tpu.memory_space<vmem>>, vector<1x256xf32>
    %cst_25 = arith.constant dense<0.000000e+00> : vector<256xf32>
    %48 = vector.multi_reduction <add>, %45, %cst_25 [0] : vector<8x256xf32> to vector<256xf32>
    %49 = vector.shape_cast %48 : vector<256xf32> to vector<1x256xf32>
    %50 = arith.mulf %45, %45 : vector<8x256xf32>
    %cst_26 = arith.constant dense<0.000000e+00> : vector<256xf32>
    %51 = vector.multi_reduction <add>, %50, %cst_26 [0] : vector<8x256xf32> to vector<256xf32>
    %52 = vector.shape_cast %51 : vector<256xf32> to vector<1x256xf32>
    %cst_27 = arith.constant 1.250000e-01 : f32
    %53 = vector.broadcast %cst_27 : f32 to vector<1x256xf32>
    %54 = arith.mulf %49, %53 : vector<1x256xf32>
    %cst_28 = arith.constant 1.250000e-01 : f32
    %55 = vector.broadcast %cst_28 : f32 to vector<1x256xf32>
    %56 = arith.mulf %52, %55 : vector<1x256xf32>
    %57 = arith.mulf %54, %54 : vector<1x256xf32>
    %58 = arith.subf %56, %57 : vector<1x256xf32>
    %cst_29 = arith.constant 0.000000e+00 : f32
    %59 = vector.broadcast %cst_29 : f32 to vector<1x256xf32>
    %60 = arith.maximumf %58, %59 : vector<1x256xf32>
    %cst_30 = arith.constant 8.000000e-01 : f32
    %61 = vector.broadcast %cst_30 : f32 to vector<1x256xf32>
    %62 = arith.addf %60, %61 : vector<1x256xf32>
    %63 = math.rsqrt %62 : vector<1x256xf32>
    %64 = arith.mulf %46, %63 : vector<1x256xf32>
    %65 = arith.mulf %54, %64 : vector<1x256xf32>
    %66 = arith.subf %47, %65 : vector<1x256xf32>
    %67 = vector.broadcast %64 : vector<1x256xf32> to vector<8x256xf32>
    %68 = arith.mulf %45, %67 : vector<8x256xf32>
    %69 = vector.broadcast %66 : vector<1x256xf32> to vector<8x256xf32>
    %70 = arith.addf %68, %69 : vector<8x256xf32>
    %cst_31 = arith.constant 0.000000e+00 : f32
    %71 = vector.broadcast %cst_31 : f32 to vector<8x256xf32>
    %72 = arith.cmpf ogt, %70, %71 : vector<8x256xf32>
    %cst_32 = arith.constant 2.000000e-01 : f32
    %73 = vector.broadcast %cst_32 : f32 to vector<8x256xf32>
    %74 = arith.mulf %73, %70 : vector<8x256xf32>
    %75 = arith.select %72, %70, %74 : vector<8x256xi1>, vector<8x256xf32>
    %76 = arith.truncf %75 : vector<8x256xf32> to vector<8x256xbf16>
    %c0_33 = arith.constant 0 : index
    %c0_34 = arith.constant 0 : index
    %77 = vector.load %arg8[%c0_33, %c0_34] : memref<256x256xi8, #tpu.memory_space<vmem>>, vector<256x256xi8>
    %78 = arith.sitofp %77 : vector<256x256xi8> to vector<256x256xf32>
    %79 = arith.truncf %78 : vector<256x256xf32> to vector<256x256xbf16>
    %cst_35 = arith.constant dense<0.000000e+00> : vector<8x256xf32>
    %80 = tpu.matmul %76, %79, %cst_35 {dimension_numbers = #tpu.dot_dimension_numbers<[1], [0], [0], [1], [0, 0, 1, 1], [], []>} : vector<8x256xbf16>, vector<256x256xbf16>, vector<8x256xf32> -> vector<8x256xf32>
    %c0_36 = arith.constant 0 : index
    %c1536 = arith.constant 1536 : index
    %81 = vector.load %arg13[%c0_36, %c1536] : memref<1x8448xf32, #tpu.memory_space<vmem>>, vector<1x256xf32>
    %82 = vector.broadcast %81 : vector<1x256xf32> to vector<8x256xf32>
    %83 = arith.mulf %80, %82 : vector<8x256xf32>
    %c0_37 = arith.constant 0 : index
    %c1024 = arith.constant 1024 : index
    %84 = vector.load %arg13[%c0_37, %c1024] : memref<1x8448xf32, #tpu.memory_space<vmem>>, vector<1x256xf32>
    %c0_38 = arith.constant 0 : index
    %c1280 = arith.constant 1280 : index
    %85 = vector.load %arg13[%c0_38, %c1280] : memref<1x8448xf32, #tpu.memory_space<vmem>>, vector<1x256xf32>
    %cst_39 = arith.constant dense<0.000000e+00> : vector<256xf32>
    %86 = vector.multi_reduction <add>, %83, %cst_39 [0] : vector<8x256xf32> to vector<256xf32>
    %87 = vector.shape_cast %86 : vector<256xf32> to vector<1x256xf32>
    %88 = arith.mulf %83, %83 : vector<8x256xf32>
    %cst_40 = arith.constant dense<0.000000e+00> : vector<256xf32>
    %89 = vector.multi_reduction <add>, %88, %cst_40 [0] : vector<8x256xf32> to vector<256xf32>
    %90 = vector.shape_cast %89 : vector<256xf32> to vector<1x256xf32>
    %cst_41 = arith.constant 1.250000e-01 : f32
    %91 = vector.broadcast %cst_41 : f32 to vector<1x256xf32>
    %92 = arith.mulf %87, %91 : vector<1x256xf32>
    %cst_42 = arith.constant 1.250000e-01 : f32
    %93 = vector.broadcast %cst_42 : f32 to vector<1x256xf32>
    %94 = arith.mulf %90, %93 : vector<1x256xf32>
    %95 = arith.mulf %92, %92 : vector<1x256xf32>
    %96 = arith.subf %94, %95 : vector<1x256xf32>
    %cst_43 = arith.constant 0.000000e+00 : f32
    %97 = vector.broadcast %cst_43 : f32 to vector<1x256xf32>
    %98 = arith.maximumf %96, %97 : vector<1x256xf32>
    %cst_44 = arith.constant 8.000000e-01 : f32
    %99 = vector.broadcast %cst_44 : f32 to vector<1x256xf32>
    %100 = arith.addf %98, %99 : vector<1x256xf32>
    %101 = math.rsqrt %100 : vector<1x256xf32>
    %102 = arith.mulf %84, %101 : vector<1x256xf32>
    %103 = arith.mulf %92, %102 : vector<1x256xf32>
    %104 = arith.subf %85, %103 : vector<1x256xf32>
    %105 = vector.broadcast %102 : vector<1x256xf32> to vector<8x256xf32>
    %106 = arith.mulf %83, %105 : vector<8x256xf32>
    %107 = vector.broadcast %104 : vector<1x256xf32> to vector<8x256xf32>
    %108 = arith.addf %106, %107 : vector<8x256xf32>
    %cst_45 = arith.constant 0.000000e+00 : f32
    %109 = vector.broadcast %cst_45 : f32 to vector<8x256xf32>
    %110 = arith.cmpf ogt, %108, %109 : vector<8x256xf32>
    %cst_46 = arith.constant 2.000000e-01 : f32
    %111 = vector.broadcast %cst_46 : f32 to vector<8x256xf32>
    %112 = arith.mulf %111, %108 : vector<8x256xf32>
    %113 = arith.select %110, %108, %112 : vector<8x256xi1>, vector<8x256xf32>
    %114 = arith.truncf %113 : vector<8x256xf32> to vector<8x256xbf16>
    %c0_47 = arith.constant 0 : index
    %c0_48 = arith.constant 0 : index
    %115 = vector.load %arg9[%c0_47, %c0_48] : memref<256x512xi8, #tpu.memory_space<vmem>>, vector<256x512xi8>
    %116 = arith.sitofp %115 : vector<256x512xi8> to vector<256x512xf32>
    %117 = arith.truncf %116 : vector<256x512xf32> to vector<256x512xbf16>
    %cst_49 = arith.constant dense<0.000000e+00> : vector<8x512xf32>
    %118 = tpu.matmul %114, %117, %cst_49 {dimension_numbers = #tpu.dot_dimension_numbers<[1], [0], [0], [1], [0, 0, 1, 1], [], []>} : vector<8x256xbf16>, vector<256x512xbf16>, vector<8x512xf32> -> vector<8x512xf32>
    %c0_50 = arith.constant 0 : index
    %c2816 = arith.constant 2816 : index
    %119 = vector.load %arg13[%c0_50, %c2816] : memref<1x8448xf32, #tpu.memory_space<vmem>>, vector<1x512xf32>
    %120 = vector.broadcast %119 : vector<1x512xf32> to vector<8x512xf32>
    %121 = arith.mulf %118, %120 : vector<8x512xf32>
    %c0_51 = arith.constant 0 : index
    %c1792 = arith.constant 1792 : index
    %122 = vector.load %arg13[%c0_51, %c1792] : memref<1x8448xf32, #tpu.memory_space<vmem>>, vector<1x512xf32>
    %c0_52 = arith.constant 0 : index
    %c2304 = arith.constant 2304 : index
    %123 = vector.load %arg13[%c0_52, %c2304] : memref<1x8448xf32, #tpu.memory_space<vmem>>, vector<1x512xf32>
    %cst_53 = arith.constant dense<0.000000e+00> : vector<512xf32>
    %124 = vector.multi_reduction <add>, %121, %cst_53 [0] : vector<8x512xf32> to vector<512xf32>
    %125 = vector.shape_cast %124 : vector<512xf32> to vector<1x512xf32>
    %126 = arith.mulf %121, %121 : vector<8x512xf32>
    %cst_54 = arith.constant dense<0.000000e+00> : vector<512xf32>
    %127 = vector.multi_reduction <add>, %126, %cst_54 [0] : vector<8x512xf32> to vector<512xf32>
    %128 = vector.shape_cast %127 : vector<512xf32> to vector<1x512xf32>
    %cst_55 = arith.constant 1.250000e-01 : f32
    %129 = vector.broadcast %cst_55 : f32 to vector<1x512xf32>
    %130 = arith.mulf %125, %129 : vector<1x512xf32>
    %cst_56 = arith.constant 1.250000e-01 : f32
    %131 = vector.broadcast %cst_56 : f32 to vector<1x512xf32>
    %132 = arith.mulf %128, %131 : vector<1x512xf32>
    %133 = arith.mulf %130, %130 : vector<1x512xf32>
    %134 = arith.subf %132, %133 : vector<1x512xf32>
    %cst_57 = arith.constant 0.000000e+00 : f32
    %135 = vector.broadcast %cst_57 : f32 to vector<1x512xf32>
    %136 = arith.maximumf %134, %135 : vector<1x512xf32>
    %cst_58 = arith.constant 8.000000e-01 : f32
    %137 = vector.broadcast %cst_58 : f32 to vector<1x512xf32>
    %138 = arith.addf %136, %137 : vector<1x512xf32>
    %139 = math.rsqrt %138 : vector<1x512xf32>
    %140 = arith.mulf %122, %139 : vector<1x512xf32>
    %141 = arith.mulf %130, %140 : vector<1x512xf32>
    %142 = arith.subf %123, %141 : vector<1x512xf32>
    %143 = vector.broadcast %140 : vector<1x512xf32> to vector<8x512xf32>
    %144 = arith.mulf %121, %143 : vector<8x512xf32>
    %145 = vector.broadcast %142 : vector<1x512xf32> to vector<8x512xf32>
    %146 = arith.addf %144, %145 : vector<8x512xf32>
    %cst_59 = arith.constant 0.000000e+00 : f32
    %147 = vector.broadcast %cst_59 : f32 to vector<8x512xf32>
    %148 = arith.cmpf ogt, %146, %147 : vector<8x512xf32>
    %cst_60 = arith.constant 2.000000e-01 : f32
    %149 = vector.broadcast %cst_60 : f32 to vector<8x512xf32>
    %150 = arith.mulf %149, %146 : vector<8x512xf32>
    %151 = arith.select %148, %146, %150 : vector<8x512xi1>, vector<8x512xf32>
    %152 = arith.truncf %151 : vector<8x512xf32> to vector<8x512xbf16>
    %c0_61 = arith.constant 0 : index
    %c0_62 = arith.constant 0 : index
    %153 = vector.load %arg10[%c0_61, %c0_62] : memref<512x512xi8, #tpu.memory_space<vmem>>, vector<512x512xi8>
    %154 = arith.sitofp %153 : vector<512x512xi8> to vector<512x512xf32>
    %155 = arith.truncf %154 : vector<512x512xf32> to vector<512x512xbf16>
    %cst_63 = arith.constant dense<0.000000e+00> : vector<8x512xf32>
    %156 = tpu.matmul %152, %155, %cst_63 {dimension_numbers = #tpu.dot_dimension_numbers<[1], [0], [0], [1], [0, 0, 1, 1], [], []>} : vector<8x512xbf16>, vector<512x512xbf16>, vector<8x512xf32> -> vector<8x512xf32>
    %c0_64 = arith.constant 0 : index
    %c4352 = arith.constant 4352 : index
    %157 = vector.load %arg13[%c0_64, %c4352] : memref<1x8448xf32, #tpu.memory_space<vmem>>, vector<1x512xf32>
    %158 = vector.broadcast %157 : vector<1x512xf32> to vector<8x512xf32>
    %159 = arith.mulf %156, %158 : vector<8x512xf32>
    %c0_65 = arith.constant 0 : index
    %c3328 = arith.constant 3328 : index
    %160 = vector.load %arg13[%c0_65, %c3328] : memref<1x8448xf32, #tpu.memory_space<vmem>>, vector<1x512xf32>
    %c0_66 = arith.constant 0 : index
    %c3840 = arith.constant 3840 : index
    %161 = vector.load %arg13[%c0_66, %c3840] : memref<1x8448xf32, #tpu.memory_space<vmem>>, vector<1x512xf32>
    %cst_67 = arith.constant dense<0.000000e+00> : vector<512xf32>
    %162 = vector.multi_reduction <add>, %159, %cst_67 [0] : vector<8x512xf32> to vector<512xf32>
    %163 = vector.shape_cast %162 : vector<512xf32> to vector<1x512xf32>
    %164 = arith.mulf %159, %159 : vector<8x512xf32>
    %cst_68 = arith.constant dense<0.000000e+00> : vector<512xf32>
    %165 = vector.multi_reduction <add>, %164, %cst_68 [0] : vector<8x512xf32> to vector<512xf32>
    %166 = vector.shape_cast %165 : vector<512xf32> to vector<1x512xf32>
    %cst_69 = arith.constant 1.250000e-01 : f32
    %167 = vector.broadcast %cst_69 : f32 to vector<1x512xf32>
    %168 = arith.mulf %163, %167 : vector<1x512xf32>
    %cst_70 = arith.constant 1.250000e-01 : f32
    %169 = vector.broadcast %cst_70 : f32 to vector<1x512xf32>
    %170 = arith.mulf %166, %169 : vector<1x512xf32>
    %171 = arith.mulf %168, %168 : vector<1x512xf32>
    %172 = arith.subf %170, %171 : vector<1x512xf32>
    %cst_71 = arith.constant 0.000000e+00 : f32
    %173 = vector.broadcast %cst_71 : f32 to vector<1x512xf32>
    %174 = arith.maximumf %172, %173 : vector<1x512xf32>
    %cst_72 = arith.constant 8.000000e-01 : f32
    %175 = vector.broadcast %cst_72 : f32 to vector<1x512xf32>
    %176 = arith.addf %174, %175 : vector<1x512xf32>
    %177 = math.rsqrt %176 : vector<1x512xf32>
    %178 = arith.mulf %160, %177 : vector<1x512xf32>
    %179 = arith.mulf %168, %178 : vector<1x512xf32>
    %180 = arith.subf %161, %179 : vector<1x512xf32>
    %181 = vector.broadcast %178 : vector<1x512xf32> to vector<8x512xf32>
    %182 = arith.mulf %159, %181 : vector<8x512xf32>
    %183 = vector.broadcast %180 : vector<1x512xf32> to vector<8x512xf32>
    %184 = arith.addf %182, %183 : vector<8x512xf32>
    %cst_73 = arith.constant 0.000000e+00 : f32
    %185 = vector.broadcast %cst_73 : f32 to vector<8x512xf32>
    %186 = arith.cmpf ogt, %184, %185 : vector<8x512xf32>
    %cst_74 = arith.constant 2.000000e-01 : f32
    %187 = vector.broadcast %cst_74 : f32 to vector<8x512xf32>
    %188 = arith.mulf %187, %184 : vector<8x512xf32>
    %189 = arith.select %186, %184, %188 : vector<8x512xi1>, vector<8x512xf32>
    %190 = arith.truncf %189 : vector<8x512xf32> to vector<8x512xbf16>
    %c0_75 = arith.constant 0 : index
    %c0_76 = arith.constant 0 : index
    %191 = vector.load %arg11[%c0_75, %c0_76] : memref<512x1024xi8, #tpu.memory_space<vmem>>, vector<512x1024xi8>
    %192 = arith.sitofp %191 : vector<512x1024xi8> to vector<512x1024xf32>
    %193 = arith.truncf %192 : vector<512x1024xf32> to vector<512x1024xbf16>
    %cst_77 = arith.constant dense<0.000000e+00> : vector<8x1024xf32>
    %194 = tpu.matmul %190, %193, %cst_77 {dimension_numbers = #tpu.dot_dimension_numbers<[1], [0], [0], [1], [0, 0, 1, 1], [], []>} : vector<8x512xbf16>, vector<512x1024xbf16>, vector<8x1024xf32> -> vector<8x1024xf32>
    %c0_78 = arith.constant 0 : index
    %c6912 = arith.constant 6912 : index
    %195 = vector.load %arg13[%c0_78, %c6912] : memref<1x8448xf32, #tpu.memory_space<vmem>>, vector<1x1024xf32>
    %196 = vector.broadcast %195 : vector<1x1024xf32> to vector<8x1024xf32>
    %197 = arith.mulf %194, %196 : vector<8x1024xf32>
    %c0_79 = arith.constant 0 : index
    %c4864 = arith.constant 4864 : index
    %198 = vector.load %arg13[%c0_79, %c4864] : memref<1x8448xf32, #tpu.memory_space<vmem>>, vector<1x1024xf32>
    %c0_80 = arith.constant 0 : index
    %c5888 = arith.constant 5888 : index
    %199 = vector.load %arg13[%c0_80, %c5888] : memref<1x8448xf32, #tpu.memory_space<vmem>>, vector<1x1024xf32>
    %cst_81 = arith.constant dense<0.000000e+00> : vector<1024xf32>
    %200 = vector.multi_reduction <add>, %197, %cst_81 [0] : vector<8x1024xf32> to vector<1024xf32>
    %201 = vector.shape_cast %200 : vector<1024xf32> to vector<1x1024xf32>
    %202 = arith.mulf %197, %197 : vector<8x1024xf32>
    %cst_82 = arith.constant dense<0.000000e+00> : vector<1024xf32>
    %203 = vector.multi_reduction <add>, %202, %cst_82 [0] : vector<8x1024xf32> to vector<1024xf32>
    %204 = vector.shape_cast %203 : vector<1024xf32> to vector<1x1024xf32>
    %cst_83 = arith.constant 1.250000e-01 : f32
    %205 = vector.broadcast %cst_83 : f32 to vector<1x1024xf32>
    %206 = arith.mulf %201, %205 : vector<1x1024xf32>
    %cst_84 = arith.constant 1.250000e-01 : f32
    %207 = vector.broadcast %cst_84 : f32 to vector<1x1024xf32>
    %208 = arith.mulf %204, %207 : vector<1x1024xf32>
    %209 = arith.mulf %206, %206 : vector<1x1024xf32>
    %210 = arith.subf %208, %209 : vector<1x1024xf32>
    %cst_85 = arith.constant 0.000000e+00 : f32
    %211 = vector.broadcast %cst_85 : f32 to vector<1x1024xf32>
    %212 = arith.maximumf %210, %211 : vector<1x1024xf32>
    %cst_86 = arith.constant 8.000000e-01 : f32
    %213 = vector.broadcast %cst_86 : f32 to vector<1x1024xf32>
    %214 = arith.addf %212, %213 : vector<1x1024xf32>
    %215 = math.rsqrt %214 : vector<1x1024xf32>
    %216 = arith.mulf %198, %215 : vector<1x1024xf32>
    %217 = arith.mulf %206, %216 : vector<1x1024xf32>
    %218 = arith.subf %199, %217 : vector<1x1024xf32>
    %219 = vector.broadcast %216 : vector<1x1024xf32> to vector<8x1024xf32>
    %220 = arith.mulf %197, %219 : vector<8x1024xf32>
    %221 = vector.broadcast %218 : vector<1x1024xf32> to vector<8x1024xf32>
    %222 = arith.addf %220, %221 : vector<8x1024xf32>
    %cst_87 = arith.constant 0.000000e+00 : f32
    %223 = vector.broadcast %cst_87 : f32 to vector<8x1024xf32>
    %224 = arith.cmpf ogt, %222, %223 : vector<8x1024xf32>
    %cst_88 = arith.constant 2.000000e-01 : f32
    %225 = vector.broadcast %cst_88 : f32 to vector<8x1024xf32>
    %226 = arith.mulf %225, %222 : vector<8x1024xf32>
    %227 = arith.select %224, %222, %226 : vector<8x1024xi1>, vector<8x1024xf32>
    %228 = arith.truncf %227 : vector<8x1024xf32> to vector<8x1024xbf16>
    %c0_89 = arith.constant 0 : index
    %c0_90 = arith.constant 0 : index
    %229 = vector.load %arg12[%c0_89, %c0_90] : memref<1024x256xi8, #tpu.memory_space<vmem>>, vector<1024x256xi8>
    %230 = arith.sitofp %229 : vector<1024x256xi8> to vector<1024x256xf32>
    %231 = arith.truncf %230 : vector<1024x256xf32> to vector<1024x256xbf16>
    %cst_91 = arith.constant dense<0.000000e+00> : vector<8x256xf32>
    %232 = tpu.matmul %228, %231, %cst_91 {dimension_numbers = #tpu.dot_dimension_numbers<[1], [0], [0], [1], [0, 0, 1, 1], [], []>} : vector<8x1024xbf16>, vector<1024x256xbf16>, vector<8x256xf32> -> vector<8x256xf32>
    %c0_92 = arith.constant 0 : index
    %c8192 = arith.constant 8192 : index
    %233 = vector.load %arg13[%c0_92, %c8192] : memref<1x8448xf32, #tpu.memory_space<vmem>>, vector<1x256xf32>
    %234 = vector.broadcast %233 : vector<1x256xf32> to vector<8x256xf32>
    %235 = arith.mulf %232, %234 : vector<8x256xf32>
    %c0_93 = arith.constant 0 : index
    %c7936 = arith.constant 7936 : index
    %236 = vector.load %arg13[%c0_93, %c7936] : memref<1x8448xf32, #tpu.memory_space<vmem>>, vector<1x256xf32>
    %237 = vector.broadcast %236 : vector<1x256xf32> to vector<8x256xf32>
    %238 = arith.addf %235, %237 : vector<8x256xf32>
    %239 = math.tanh %238 : vector<8x256xf32>
    %c0_94 = arith.constant 0 : index
    %c0_95 = arith.constant 0 : index
    %240 = vector.load %arg14[%c0_94, %c0_95] : memref<8x256xf32, #tpu.memory_space<vmem>>, vector<8x256xf32>
    tpu.vector_store %arg14[%c0_94, %c0_95], %239 {strides = array<i32>} : memref<8x256xf32, #tpu.memory_space<vmem>>, vector<8x256xf32>,
    return
  }
  func.func @transform_0(%arg0: i32) -> (i32, i32) {
    %c0_i32 = arith.constant 0 : i32
    %c0_i32_0 = arith.constant 0 : i32
    return %arg0, %c0_i32 : i32, i32
  }
  func.func @transform_1(%arg0: i32) -> (i32, i32) {
    %c0_i32 = arith.constant 0 : i32
    %c0_i32_0 = arith.constant 0 : i32
    return %arg0, %c0_i32 : i32, i32
  }
  func.func @transform_2(%arg0: i32) -> (i32, i32) {
    %c0_i32 = arith.constant 0 : i32
    %c0_i32_0 = arith.constant 0 : i32
    %c0_i32_1 = arith.constant 0 : i32
    return %c0_i32, %c0_i32_0 : i32, i32
  }
  func.func @transform_3(%arg0: i32) -> (i32, i32) {
    %c0_i32 = arith.constant 0 : i32
    %c0_i32_0 = arith.constant 0 : i32
    %c0_i32_1 = arith.constant 0 : i32
    return %c0_i32, %c0_i32_0 : i32, i32
  }
  func.func @transform_4(%arg0: i32) -> (i32, i32) {
    %c0_i32 = arith.constant 0 : i32
    %c0_i32_0 = arith.constant 0 : i32
    %c0_i32_1 = arith.constant 0 : i32
    return %c0_i32, %c0_i32_0 : i32, i32
  }
  func.func @transform_5(%arg0: i32) -> (i32, i32) {
    %c0_i32 = arith.constant 0 : i32
    %c0_i32_0 = arith.constant 0 : i32
    %c0_i32_1 = arith.constant 0 : i32
    return %c0_i32, %c0_i32_0 : i32, i32
  }
  func.func @transform_6(%arg0: i32) -> (i32, i32) {
    %c0_i32 = arith.constant 0 : i32
    %c0_i32_0 = arith.constant 0 : i32
    %c0_i32_1 = arith.constant 0 : i32
    return %c0_i32, %c0_i32_0 : i32, i32
  }
  func.func @transform_7(%arg0: i32) -> (i32, i32) {
    %c0_i32 = arith.constant 0 : i32
    %c0_i32_0 = arith.constant 0 : i32
    %c0_i32_1 = arith.constant 0 : i32
    return %c0_i32, %c0_i32_0 : i32, i32
  }
  func.func @transform_8(%arg0: i32) -> (i32, i32) {
    %c0_i32 = arith.constant 0 : i32
    %c0_i32_0 = arith.constant 0 : i32
    %c0_i32_1 = arith.constant 0 : i32
    return %c0_i32, %c0_i32_0 : i32, i32
  }
  func.func @transform_9(%arg0: i32) -> (i32, i32) {
    %c0_i32 = arith.constant 0 : i32
    %c0_i32_0 = arith.constant 0 : i32
    %c0_i32_1 = arith.constant 0 : i32
    return %c0_i32, %c0_i32_0 : i32, i32
  }
  func.func @transform_10(%arg0: i32) -> (i32, i32) {
    %c0_i32 = arith.constant 0 : i32
    %c0_i32_0 = arith.constant 0 : i32
    %c0_i32_1 = arith.constant 0 : i32
    return %c0_i32, %c0_i32_0 : i32, i32
  }
  func.func @transform_11(%arg0: i32) -> (i32, i32) {
    %c0_i32 = arith.constant 0 : i32
    %c0_i32_0 = arith.constant 0 : i32
    %c0_i32_1 = arith.constant 0 : i32
    return %c0_i32, %c0_i32_0 : i32, i32
  }
  func.func @transform_12(%arg0: i32) -> (i32, i32) {
    %c0_i32 = arith.constant 0 : i32
    %c0_i32_0 = arith.constant 0 : i32
    %c0_i32_1 = arith.constant 0 : i32
    return %c0_i32, %c0_i32_0 : i32, i32
  }
  func.func @transform_13(%arg0: i32) -> (i32, i32) {
    %c0_i32 = arith.constant 0 : i32
    %c0_i32_0 = arith.constant 0 : i32
    return %arg0, %c0_i32 : i32, i32
  }
}

</mosaic_0001>

<llo_original>
// kernel: generator_forward.1
$region0: #{generator_forward.1}
  #allocation0 [shape = 'u32[]', space=smem, size = 0x4, offset = 0x4, fixed_abs, tag = 'smem constant byte address 0x4 - core index']
  #allocation1 [shape = 'u32[144,128]{1,0:T(1,128)}', space=vmem, size = 0x12000, scoped, tag = 'internal scratch']
  %s0 = inlined_call_operand.vmem [shape: s32[8,1], index: 0, kind: input, shape index: {}]
  %s1 = inlined_call_operand.vmem [shape: s32[8,1], index: 1, kind: input, shape index: {}]
  %s2 = inlined_call_operand.vmem [shape: f32[8,8], index: 2, kind: input, shape index: {}]
  %s3 = inlined_call_operand.vmem [shape: f32[4,32], index: 3, kind: input, shape index: {}]
  %s4 = inlined_call_operand.vmem [shape: s8[8,128], index: 4, kind: input, shape index: {}]
  %s5 = inlined_call_operand.vmem [shape: s8[32,128], index: 5, kind: input, shape index: {}]
  %s6 = inlined_call_operand.hbm [shape: s8[128,256], index: 6, kind: input, shape index: {}]
  %s7 = inlined_call_operand.hbm [shape: s8[256,256], index: 7, kind: input, shape index: {}]
  %s8 = inlined_call_operand.hbm [shape: s8[256,512], index: 8, kind: input, shape index: {}]
  %s9 = inlined_call_operand.hbm [shape: s8[512,512], index: 9, kind: input, shape index: {}]
  %s10 = inlined_call_operand.hbm [shape: s8[512,1024], index: 10, kind: input, shape index: {}]
  %s11 = inlined_call_operand.hbm [shape: s8[1024,256], index: 11, kind: input, shape index: {}]
  %s12 = inlined_call_operand.hbm [shape: f32[1,8448], index: 12, kind: input, shape index: {}]
  %s13 = inlined_call_operand.vmem [shape: f32[8,256], index: 13, kind: output, shape index: {}]
  %s14 = sld [smem:[#allocation0]]
  $region90: #{generator_forward.1} parent=0
    _
  %s16 = ssub.s32 1, %s14
  %s17 = scalar_select 0, %s16, %s14
  $region1: #{generator_forward.1} parent=0
    #allocation2 [shape = 'u8[32768]{0}', space=vmem, size = 0x8000, scoped, tag = 'input window, operand 6, single buffered']
    #allocation3 [shape = 's32[1]{0}', space=sflag, size = 0x4, scoped, tag = 'scoped memory for generator_forward.1']
    #allocation4 [shape = 'u8[65536]{0}', space=vmem, size = 0x10000, scoped, tag = 'input window, operand 7, single buffered']
    #allocation5 [shape = 's32[1]{0}', space=sflag, size = 0x4, scoped, tag = 'scoped memory for generator_forward.1']
    #allocation6 [shape = 'u8[131072]{0}', space=vmem, size = 0x20000, scoped, tag = 'input window, operand 8, single buffered']
    #allocation7 [shape = 'u8[262144]{0}', space=vmem, size = 0x40000, scoped, tag = 'input window, operand 9, single buffered']
    #allocation8 [shape = 's32[1]{0}', space=sflag, size = 0x4, scoped, tag = 'scoped memory for generator_forward.1']
    #allocation9 [shape = 'u8[524288]{0}', space=vmem, size = 0x80000, scoped, tag = 'input window, operand 10, single buffered']
    #allocation10 [shape = 'u8[262144]{0}', space=vmem, size = 0x40000, scoped, tag = 'input window, operand 11, single buffered']
    #allocation11 [shape = 's32[1]{0}', space=sflag, size = 0x4, scoped, tag = 'scoped memory for generator_forward.1']
    #allocation12 [shape = 'u8[33792]{0}', space=vmem, size = 0x8400, scoped, tag = 'input window, operand 12, single buffered']
    %18 = vsyncpa [#allocation3], 0
    %19 = vsyncpa [#allocation5], 0
    %20 = vsyncpa [#allocation8], 0
    %21 = vsyncpa [#allocation11], 0
    // Predicated region
    $region2: #{generator_forward.1} parent=1 // pred_check
      _
    $region3: #{generator_forward.1} parent=1 // pred_check_branch
      %23 = sbr.rel (0) target = $region5
    $region4: #{generator_forward.1} parent=1 // pred_region
      _
    $region5: #{generator_forward.1} parent=1 // pred_fallthru
      _
    // Predicated region
    $region6: #{generator_forward.1} parent=1 // pred_check
      _
    $region7: #{generator_forward.1} parent=1 // pred_check_branch
      %25 = sbr.rel (0) target = $region9
    $region8: #{generator_forward.1} parent=1 // pred_region
      _
    $region9: #{generator_forward.1} parent=1 // pred_fallthru
      _
    // Predicated region
    $region10: #{generator_forward.1} parent=1 // pred_check
      _
    $region11: #{generator_forward.1} parent=1 // pred_check_branch
      %27 = sbr.rel (0) target = $region13
    $region12: #{generator_forward.1} parent=1 // pred_region
      _
    $region13: #{generator_forward.1} parent=1 // pred_fallthru
      _
    // Predicated region
    $region14: #{generator_forward.1} parent=1 // pred_check
      _
    $region15: #{generator_forward.1} parent=1 // pred_check_branch
      %29 = sbr.rel (0) target = $region17
    $region16: #{generator_forward.1} parent=1 // pred_region
      _
    $region17: #{generator_forward.1} parent=1 // pred_fallthru
      _
    // Predicated region
    $region18: #{generator_forward.1} parent=1 // pred_check
      _
    $region19: #{generator_forward.1} parent=1 // pred_check_branch
      %31 = sbr.rel (0) target = $region21
    $region20: #{generator_forward.1} parent=1 // pred_region
      _
    $region21: #{generator_forward.1} parent=1 // pred_fallthru
      _
    // Predicated region
    $region22: #{generator_forward.1} parent=1 // pred_check
      _
    $region23: #{generator_forward.1} parent=1 // pred_check_branch
      %33 = sbr.rel (0) target = $region25
    $region24: #{generator_forward.1} parent=1 // pred_region
      _
    $region25: #{generator_forward.1} parent=1 // pred_fallthru
      _
    // Predicated region
    $region26: #{generator_forward.1} parent=1 // pred_check
      _
    $region27: #{generator_forward.1} parent=1 // pred_check_branch
      %35 = sbr.rel (0) target = $region29
    $region28: #{generator_forward.1} parent=1 // pred_region
      %s37 = ssub.s32 1024, 1024
      %38 = vsyncadd [#allocation3], %s37
      %s39 = sshll.u32 [#allocation2], 4
      %s40 = int_to_ptr.vmem [resolvable:$true] %s39
      %45 = dma.hbm_to_vmem [thread:$0]  %s6, 1024, %s40, [#allocation3], 256, 256, 16
    $region29: #{generator_forward.1} parent=1 // pred_fallthru
      _
    // Predicated region
    $region30: #{generator_forward.1} parent=1 // pred_check
      _
    $region31: #{generator_forward.1} parent=1 // pred_check_branch
      %47 = sbr.rel (0) target = $region33
    $region32: #{generator_forward.1} parent=1 // pred_region
      %s49 = ssub.s32 2048, 2048
      %50 = vsyncadd [#allocation5], %s49
      %s51 = sshll.u32 [#allocation4], 4
      %s52 = int_to_ptr.vmem [resolvable:$true] %s51
      %57 = dma.hbm_to_vmem [thread:$0]  %s7, 2048, %s52, [#allocation5], 256, 256, 16
    $region33: #{generator_forward.1} parent=1 // pred_fallthru
      _
    // Predicated region
    $region34: #{generator_forward.1} parent=1 // pred_check
      _
    $region35: #{generator_forward.1} parent=1 // pred_check_branch
      %59 = sbr.rel (0) target = $region37
    $region36: #{generator_forward.1} parent=1 // pred_region
      %s61 = ssub.s32 4096, 4096
      %62 = vsyncadd [#allocation5], %s61
      %s63 = sshll.u32 [#allocation6], 4
      %s64 = int_to_ptr.vmem [resolvable:$true] %s63
      %69 = dma.hbm_to_vmem [thread:$0]  %s8, 4096, %s64, [#allocation5], 512, 512, 32
    $region37: #{generator_forward.1} parent=1 // pred_fallthru
      _
    // Predicated region
    $region38: #{generator_forward.1} parent=1 // pred_check
      _
    $region39: #{generator_forward.1} parent=1 // pred_check_branch
      %71 = sbr.rel (0) target = $region41
    $region40: #{generator_forward.1} parent=1 // pred_region
      %s73 = ssub.s32 8192, 8192
      %74 = vsyncadd [#allocation8], %s73
      %s75 = sshll.u32 [#allocation7], 4
      %s76 = int_to_ptr.vmem [resolvable:$true] %s75
      %81 = dma.hbm_to_vmem [thread:$0]  %s9, 8192, %s76, [#allocation8], 512, 512, 32
    $region41: #{generator_forward.1} parent=1 // pred_fallthru
      _
    // Predicated region
    $region42: #{generator_forward.1} parent=1 // pred_check
      _
    $region43: #{generator_forward.1} parent=1 // pred_check_branch
      %83 = sbr.rel (0) target = $region45
    $region44: #{generator_forward.1} parent=1 // pred_region
      %s85 = ssub.s32 16384, 16384
      %86 = vsyncadd [#allocation8], %s85
      %s87 = sshll.u32 [#allocation9], 4
      %s88 = int_to_ptr.vmem [resolvable:$true] %s87
      %93 = dma.hbm_to_vmem [thread:$0]  %s10, 16384, %s88, [#allocation8], 1024, 1024, 64
    $region45: #{generator_forward.1} parent=1 // pred_fallthru
      _
    // Predicated region
    $region46: #{generator_forward.1} parent=1 // pred_check
      _
    $region47: #{generator_forward.1} parent=1 // pred_check_branch
      %95 = sbr.rel (0) target = $region49
    $region48: #{generator_forward.1} parent=1 // pred_region
      %s97 = ssub.s32 8192, 8192
      %98 = vsyncadd [#allocation11], %s97
      %s99 = sshll.u32 [#allocation10], 4
      %s100 = int_to_ptr.vmem [resolvable:$true] %s99
      %105 = dma.hbm_to_vmem [thread:$0]  %s11, 8192, %s100, [#allocation11], 256, 256, 16
    $region49: #{generator_forward.1} parent=1 // pred_fallthru
      _
    // Predicated region
    $region50: #{generator_forward.1} parent=1 // pred_check
      _
    $region51: #{generator_forward.1} parent=1 // pred_check_branch
      %107 = sbr.rel (0) target = $region53
    $region52: #{generator_forward.1} parent=1 // pred_region
      %s109 = ssub.s32 1056, 1056
      %110 = vsyncadd [#allocation11], %s109
      %s112 = sshll.u32 [#allocation12], 4
      %s113 = int_to_ptr.vmem [resolvable:$true] %s112
      %115 = dma.hbm_to_vmem [thread:$0]  %s12, 1056, %s113, [#allocation11]
    $region53: #{generator_forward.1} parent=1 // pred_fallthru
      _
    // Predicated region
    $region54: #{generator_forward.1} parent=1 // pred_check
      _
    $region55: #{generator_forward.1} parent=1 // pred_check_branch
      %117 = sbr.rel (0) target = $region57
    $region56: #{generator_forward.1} parent=1 // pred_region
      %118 = dma.done [#allocation3], 1024
    $region57: #{generator_forward.1} parent=1 // pred_fallthru
      _
    // Predicated region
    $region58: #{generator_forward.1} parent=1 // pred_check
      _
    $region59: #{generator_forward.1} parent=1 // pred_check_branch
      %120 = sbr.rel (0) target = $region61
    $region60: #{generator_forward.1} parent=1 // pred_region
      %121 = dma.done [#allocation5], 2048
    $region61: #{generator_forward.1} parent=1 // pred_fallthru
      _
    // Predicated region
    $region62: #{generator_forward.1} parent=1 // pred_check
      _
    $region63: #{generator_forward.1} parent=1 // pred_check_branch
      %123 = sbr.rel (0) target = $region65
    $region64: #{generator_forward.1} parent=1 // pred_region
      %124 = dma.done [#allocation5], 4096
    $region65: #{generator_forward.1} parent=1 // pred_fallthru
      _
    // Predicated region
    $region66: #{generator_forward.1} parent=1 // pred_check
      _
    $region67: #{generator_forward.1} parent=1 // pred_check_branch
      %126 = sbr.rel (0) target = $region69
    $region68: #{generator_forward.1} parent=1 // pred_region
      %127 = dma.done [#allocation8], 8192
    $region69: #{generator_forward.1} parent=1 // pred_fallthru
      _
    // Predicated region
    $region70: #{generator_forward.1} parent=1 // pred_check
      _
    $region71: #{generator_forward.1} parent=1 // pred_check_branch
      %129 = sbr.rel (0) target = $region73
    $region72: #{generator_forward.1} parent=1 // pred_region
      %130 = dma.done [#allocation8], 16384
    $region73: #{generator_forward.1} parent=1 // pred_fallthru
      _
    // Predicated region
    $region74: #{generator_forward.1} parent=1 // pred_check
      _
    $region75: #{generator_forward.1} parent=1 // pred_check_branch
      %132 = sbr.rel (0) target = $region77
    $region76: #{generator_forward.1} parent=1 // pred_region
      %133 = dma.done [#allocation11], 8192
    $region77: #{generator_forward.1} parent=1 // pred_fallthru
      _
    // Predicated region
    $region78: #{generator_forward.1} parent=1 // pred_check
      _
    $region79: #{generator_forward.1} parent=1 // pred_check_branch
      %135 = sbr.rel (0) target = $region81
    $region80: #{generator_forward.1} parent=1 // pred_region
      %136 = dma.done [#allocation11], 1056
    $region81: #{generator_forward.1} parent=1 // pred_fallthru
      _
    %v138 = vld [vmem:[%s0] sm:$0xff]
    %v139 = vld [vmem:[%s1] sm:$0xff]
    %v140 = vlaneseq
    %v141 = vand.u32 %v140, 127
    %142 = vset.pattern.permute.xlu0 0
    %143 = vperm.xlu0 %142, %v138
    %v144 = vpop.permute.xlu0 %143
    %vm145 = vcmp.eq.s32.totalorder %v144, %v141
    %v146 = vsel %vm145, 1, 0
    %v147 = vcvt.s32.f32 %v146
    %148 = vset.pattern.permute.xlu0 0
    %149 = vperm.xlu0 %148, %v139
    %v150 = vpop.permute.xlu0 %149
    %vm151 = vcmp.eq.s32.totalorder %v150, %v141
    %v152 = vsel %vm151, 1, 0
    %v153 = vcvt.s32.f32 %v152
    %v154 = vld [vmem:[%s2] sm:$0xff]
    %vm155 = vcmask 64512
    %v157 = vsel %vm155, %v147, 0
    %159 = vmatprep.subr.mxu0 0.0
    %160 = vmatpush1.msra.mxu0 0.0
    %161 = vmatprep.subr.mxu0 0.0
    %162 = vmatpush1.msra.mxu0 0.0
    %163 = vmatprep.subr.mxu0 0.0
    %164 = vmatpush1.msra.mxu0 0.0
    %165 = vmatprep.subr.mxu0 0.0
    %166 = vmatpush1.msra.mxu0 0.0
    %167 = vmatprep.subr.mxu0 0.0
    %168 = vmatpush1.msra.mxu0 0.0
    %169 = vmatprep.subr.mxu0 0.0
    %170 = vmatpush1.msra.mxu0 0.0
    %171 = vmatprep.subr.mxu0 0.0
    %172 = vmatpush1.msra.mxu0 0.0
    %173 = vmatprep.subr.mxu0 0.0
    %174 = vmatpush1.msra.mxu0 0.0
    %175 = vmatprep.subr.mxu0 0.0
    %176 = vmatpush1.msra.mxu0 0.0
    %177 = vmatprep.subr.mxu0 0.0
    %178 = vmatpush1.msra.mxu0 0.0
    %179 = vmatprep.subr.mxu0 0.0
    %180 = vmatpush1.msra.mxu0 0.0
    %181 = vmatprep.subr.mxu0 0.0
    %182 = vmatpush1.msra.mxu0 0.0
    %183 = vmatprep.subr.mxu0 0.0
    %184 = vmatpush1.msra.mxu0 0.0
    %185 = vmatprep.subr.mxu0 0.0
    %186 = vmatpush1.msra.mxu0 0.0
    %187 = vmatprep.subr.mxu0 0.0
    %188 = vmatpush1.msra.mxu0 0.0
    %189 = vmatprep.subr.mxu0 0.0
    %190 = vmatpush1.msra.mxu0 %v154
    %191 = vmatprep.subr.mxu0 0.0
    %192 = vmatpush2.msra.mxu0 0.0
    %193 = vmatprep.subr.mxu0 0.0
    %194 = vmatpush2.msra.mxu0 0.0
    %195 = vmatprep.subr.mxu0 0.0
    %196 = vmatpush2.msra.mxu0 0.0
    %197 = vmatprep.subr.mxu0 0.0
    %198 = vmatpush2.msra.mxu0 0.0
    %199 = vmatprep.subr.mxu0 0.0
    %200 = vmatpush2.msra.mxu0 0.0
    %201 = vmatprep.subr.mxu0 0.0
    %202 = vmatpush2.msra.mxu0 0.0
    %203 = vmatprep.subr.mxu0 0.0
    %204 = vmatpush2.msra.mxu0 0.0
    %205 = vmatprep.subr.mxu0 0.0
    %206 = vmatpush2.msra.mxu0 0.0
    %207 = vmatprep.subr.mxu0 0.0
    %208 = vmatpush2.msra.mxu0 0.0
    %209 = vmatprep.subr.mxu0 0.0
    %210 = vmatpush2.msra.mxu0 0.0
    %211 = vmatprep.subr.mxu0 0.0
    %212 = vmatpush2.msra.mxu0 0.0
    %213 = vmatprep.subr.mxu0 0.0
    %214 = vmatpush2.msra.mxu0 0.0
    %215 = vmatprep.subr.mxu0 0.0
    %216 = vmatpush2.msra.mxu0 0.0
    %217 = vmatprep.subr.mxu0 0.0
    %218 = vmatpush2.msra.mxu0 0.0
    %219 = vmatprep.subr.mxu0 0.0
    %220 = vmatpush2.msra.mxu0 0.0
    %221 = vmatprep.subr.mxu0 0.0
    %222 = vmatpush2.msra.mxu0 0.0
    %223 = vmatprep.mubr.f32.mxu0 0.0
    %224 = vmatmul.mubr.f32.gmra.mxu0 %v157
    %v225 = vpop.f32.mrf.mxu0
    %v226 = vadd.f32 0.0, %v225
    %v227 = vpop.f32.mrf.mxu0
    %228 = vdwg.mxu0
    %v229 = vld [vmem:[%s3] sm:$0xf]
    %vm230 = vcmask 31744
    %v232 = vsel %vm230, %v153, 0
    %vm234 = vcmask 1043456
    %v236 = vsel %vm234, %v229, 0
    %238 = vmatprep.subr.mxu0 0.0
    %239 = vmatpush1.msra.mxu0 0.0
    %240 = vmatprep.subr.mxu0 0.0
    %241 = vmatpush1.msra.mxu0 0.0
    %242 = vmatprep.subr.mxu0 0.0
    %243 = vmatpush1.msra.mxu0 0.0
    %244 = vmatprep.subr.mxu0 0.0
    %245 = vmatpush1.msra.mxu0 0.0
    %246 = vmatprep.subr.mxu0 0.0
    %247 = vmatpush1.msra.mxu0 0.0
    %248 = vmatprep.subr.mxu0 0.0
    %249 = vmatpush1.msra.mxu0 0.0
    %250 = vmatprep.subr.mxu0 0.0
    %251 = vmatpush1.msra.mxu0 0.0
    %252 = vmatprep.subr.mxu0 0.0
    %253 = vmatpush1.msra.mxu0 0.0
    %254 = vmatprep.subr.mxu0 0.0
    %255 = vmatpush1.msra.mxu0 0.0
    %256 = vmatprep.subr.mxu0 0.0
    %257 = vmatpush1.msra.mxu0 0.0
    %258 = vmatprep.subr.mxu0 0.0
    %259 = vmatpush1.msra.mxu0 0.0
    %260 = vmatprep.subr.mxu0 0.0
    %261 = vmatpush1.msra.mxu0 0.0
    %262 = vmatprep.subr.mxu0 0.0
    %263 = vmatpush1.msra.mxu0 0.0
    %264 = vmatprep.subr.mxu0 0.0
    %265 = vmatpush1.msra.mxu0 0.0
    %266 = vmatprep.subr.mxu0 0.0
    %267 = vmatpush1.msra.mxu0 0.0
    %268 = vmatprep.subr.mxu0 0.0
    %269 = vmatpush1.msra.mxu0 %v236
    %270 = vmatprep.subr.mxu0 0.0
    %271 = vmatpush2.msra.mxu0 0.0
    %272 = vmatprep.subr.mxu0 0.0
    %273 = vmatpush2.msra.mxu0 0.0
    %274 = vmatprep.subr.mxu0 0.0
    %275 = vmatpush2.msra.mxu0 0.0
    %276 = vmatprep.subr.mxu0 0.0
    %277 = vmatpush2.msra.mxu0 0.0
    %278 = vmatprep.subr.mxu0 0.0
    %279 = vmatpush2.msra.mxu0 0.0
    %280 = vmatprep.subr.mxu0 0.0
    %281 = vmatpush2.msra.mxu0 0.0
    %282 = vmatprep.subr.mxu0 0.0
    %283 = vmatpush2.msra.mxu0 0.0
    %284 = vmatprep.subr.mxu0 0.0
    %285 = vmatpush2.msra.mxu0 0.0
    %286 = vmatprep.subr.mxu0 0.0
    %287 = vmatpush2.msra.mxu0 0.0
    %288 = vmatprep.subr.mxu0 0.0
    %289 = vmatpush2.msra.mxu0 0.0
    %290 = vmatprep.subr.mxu0 0.0
    %291 = vmatpush2.msra.mxu0 0.0
    %292 = vmatprep.subr.mxu0 0.0
    %293 = vmatpush2.msra.mxu0 0.0
    %294 = vmatprep.subr.mxu0 0.0
    %295 = vmatpush2.msra.mxu0 0.0
    %296 = vmatprep.subr.mxu0 0.0
    %297 = vmatpush2.msra.mxu0 0.0
    %298 = vmatprep.subr.mxu0 0.0
    %299 = vmatpush2.msra.mxu0 0.0
    %300 = vmatprep.subr.mxu0 0.0
    %301 = vmatpush2.msra.mxu0 0.0
    %302 = vmatprep.mubr.f32.mxu0 0.0
    %303 = vmatmul.mubr.f32.gmra.mxu0 %v232
    %v304 = vpop.f32.mrf.mxu0
    %v305 = vadd.f32 0.0, %v304
    %v306 = vpop.f32.mrf.mxu0
    %307 = vdwg.mxu0
    %v308 = vpack.c.bf16 %v226, %v226
    %v309 = vld [vmem:[%s4] sm:$0x3]
    %v310 = vunpack.c.l.s8.bf16 %v309
    %v311 = vpack.c.bf16 %v305, %v305
    %v312 = vld [vmem:[%s5] sm:$0xff]
    %v313 = vunpack.c.l.s8.bf16 %v312
    %v314 = vunpack.c.h.s8.bf16 %v312
    %vm315 = vcmask 261120
    %v317 = vsel %vm315, %v311, 0
    %319 = vmatprep.subr.bf16.mxu0 0
    %320 = vmatpush1.bf16.msra.mxu0 0
    %321 = vmatprep.subr.bf16.mxu0 0
    %322 = vmatpush1.bf16.msra.mxu0 0
    %323 = vmatprep.subr.bf16.mxu0 0
    %324 = vmatpush1.bf16.msra.mxu0 0
    %325 = vmatprep.subr.bf16.mxu0 0
    %326 = vmatpush1.bf16.msra.mxu0 0
    %327 = vmatprep.subr.bf16.mxu0 0
    %328 = vmatpush1.bf16.msra.mxu0 0
    %329 = vmatprep.subr.bf16.mxu0 0
    %330 = vmatpush1.bf16.msra.mxu0 0
    %331 = vmatprep.subr.bf16.mxu0 0
    %332 = vmatpush1.bf16.msra.mxu0 %v314
    %333 = vmatprep.subr.bf16.mxu0 0
    %334 = vmatpush1.bf16.msra.mxu0 %v313
    %335 = vmatprep.subr.bf16.mxu0 0
    %336 = vmatpush2.bf16.msra.mxu0 0
    %337 = vmatprep.subr.bf16.mxu0 0
    %338 = vmatpush2.bf16.msra.mxu0 0
    %339 = vmatprep.subr.bf16.mxu0 0
    %340 = vmatpush2.bf16.msra.mxu0 0
    %341 = vmatprep.subr.bf16.mxu0 0
    %342 = vmatpush2.bf16.msra.mxu0 0
    %343 = vmatprep.subr.bf16.mxu0 0
    %344 = vmatpush2.bf16.msra.mxu0 0
    %345 = vmatprep.subr.bf16.mxu0 0
    %346 = vmatpush2.bf16.msra.mxu0 0
    %347 = vmatprep.subr.bf16.mxu0 0
    %348 = vmatpush2.bf16.msra.mxu0 0
    %349 = vmatprep.subr.bf16.mxu0 0
    %350 = vmatpush2.bf16.msra.mxu0 0
    %351 = vmatprep.mubr.bf16.mxu0 0
    %352 = vmatmul.mubr.bf16.gmra.mxu0 %v317
    %v353 = vpop.f32.mrf.mxu0
    %v354 = vadd.f32 0.0, %v353
    %v355 = vpop.f32.mrf.mxu0
    %v356 = vpop.f32.mrf.mxu0
    %v357 = vpop.f32.mrf.mxu0
    %358 = vdwg.mxu0
    %v360 = vsel %vm155, %v308, 0
    %v363 = vsel %vm234, %v310, 0
    %365 = vmatprep.subr.bf16.mxu0 0
    %366 = vmatpush1.bf16.msra.mxu0 0
    %367 = vmatprep.subr.bf16.mxu0 0
    %368 = vmatpush1.bf16.msra.mxu0 0
    %369 = vmatprep.subr.bf16.mxu0 0
    %370 = vmatpush1.bf16.msra.mxu0 0
    %371 = vmatprep.subr.bf16.mxu0 0
    %372 = vmatpush1.bf16.msra.mxu0 0
    %373 = vmatprep.subr.bf16.mxu0 0
    %374 = vmatpush1.bf16.msra.mxu0 0
    %375 = vmatprep.subr.bf16.mxu0 0
    %376 = vmatpush1.bf16.msra.mxu0 0
    %377 = vmatprep.subr.bf16.mxu0 0
    %378 = vmatpush1.bf16.msra.mxu0 0
    %379 = vmatprep.subr.bf16.mxu0 0
    %380 = vmatpush1.bf16.msra.mxu0 %v363
    %381 = vmatprep.subr.bf16.mxu0 0
    %382 = vmatpush2.bf16.msra.mxu0 0
    %383 = vmatprep.subr.bf16.mxu0 0
    %384 = vmatpush2.bf16.msra.mxu0 0
    %385 = vmatprep.subr.bf16.mxu0 0
    %386 = vmatpush2.bf16.msra.mxu0 0
    %387 = vmatprep.subr.bf16.mxu0 0
    %388 = vmatpush2.bf16.msra.mxu0 0
    %389 = vmatprep.subr.bf16.mxu0 0
    %390 = vmatpush2.bf16.msra.mxu0 0
    %391 = vmatprep.subr.bf16.mxu0 0
    %392 = vmatpush2.bf16.msra.mxu0 0
    %393 = vmatprep.subr.bf16.mxu0 0
    %394 = vmatpush2.bf16.msra.mxu0 0
    %395 = vmatprep.subr.bf16.mxu0 0
    %396 = vmatpush2.bf16.msra.mxu0 0
    %397 = vmatprep.mubr.bf16.mxu0 0
    %398 = vmatmul.mubr.bf16.gmra.mxu0 %v360
    %v399 = vpop.f32.mrf.mxu0
    %v400 = vadd.f32 %v354, %v399
    %v401 = vpop.f32.mrf.mxu0
    %v402 = vpop.f32.mrf.mxu0
    %v403 = vpop.f32.mrf.mxu0
    %404 = vdwg.mxu0
    %v405 = vld [vmem:[#allocation12 + $0x1] sm:$0x1]
    %v407 = vlaneseq
    %v408 = vshrl.u32 %v407, 7
    %v409 = vsub.s32 0, %v408
    %v410 = vrot.slane %v405, %v409
    %v412 = vmul.f32 %v400, %v410
    %v413 = vld [vmem:[#allocation12] sm:$0x1]
    %v415 = vlaneseq
    %v416 = vshrl.u32 %v415, 7
    %v417 = vsub.s32 0, %v416
    %v418 = vrot.slane %v413, %v417
    %v420 = vadd.f32 %v412, %v418
    %vm421 = vcmp.gt.f32.partialorder %v420, 0.0
    %v422 = vmul.f32 %v420, 0.2
    %v423 = vsel %vm421, %v420, %v422
    %v424 = vpack.c.bf16 %v423, %v423
    %v425 = vld [vmem:[#allocation2] sm:$0xff]
    %v426 = vld [vmem:[#allocation2 + $0x8] sm:$0xff]
    %v427 = vld [vmem:[#allocation2 + $0x10] sm:$0xff]
    %v428 = vld [vmem:[#allocation2 + $0x18] sm:$0xff]
    %v429 = vld [vmem:[#allocation2 + $0x20] sm:$0xff]
    %v430 = vld [vmem:[#allocation2 + $0x28] sm:$0xff]
    %v431 = vld [vmem:[#allocation2 + $0x30] sm:$0xff]
    %v432 = vld [vmem:[#allocation2 + $0x38] sm:$0xff]
    %v433 = vunpack.c.l.s8.bf16 %v425
    %v434 = vunpack.c.l.s8.bf16 %v426
    %v435 = vunpack.c.h.s8.bf16 %v425
    %v436 = vunpack.c.h.s8.bf16 %v426
    %v437 = vunpack.c.l.s8.bf16 %v427
    %v438 = vunpack.c.l.s8.bf16 %v428
    %v439 = vunpack.c.h.s8.bf16 %v427
    %v440 = vunpack.c.h.s8.bf16 %v428
    %v441 = vunpack.c.l.s8.bf16 %v429
    %v442 = vunpack.c.l.s8.bf16 %v430
    %v443 = vunpack.c.h.s8.bf16 %v429
    %v444 = vunpack.c.h.s8.bf16 %v430
    %v445 = vunpack.c.l.s8.bf16 %v431
    %v446 = vunpack.c.l.s8.bf16 %v432
    %v447 = vunpack.c.h.s8.bf16 %v431
    %v448 = vunpack.c.h.s8.bf16 %v432
    %449 = vmatprep.subr.bf16.mxu0 %v448
    %450 = vmatpush1.bf16.msra.mxu0 %v447
    %451 = vmatprep.subr.bf16.mxu0 %v446
    %452 = vmatpush1.bf16.msra.mxu0 %v445
    %453 = vmatprep.subr.bf16.mxu0 %v444
    %454 = vmatpush1.bf16.msra.mxu0 %v443
    %455 = vmatprep.subr.bf16.mxu0 %v442
    %456 = vmatpush1.bf16.msra.mxu0 %v441
    %457 = vmatprep.subr.bf16.mxu0 %v440
    %458 = vmatpush1.bf16.msra.mxu0 %v439
    %459 = vmatprep.subr.bf16.mxu0 %v438
    %460 = vmatpush1.bf16.msra.mxu0 %v437
    %461 = vmatprep.subr.bf16.mxu0 %v436
    %462 = vmatpush1.bf16.msra.mxu0 %v435
    %463 = vmatprep.subr.bf16.mxu0 %v434
    %464 = vmatpush1.bf16.msra.mxu0 %v433
    %465 = vmatprep.subr.bf16.mxu0 0
    %466 = vmatpush2.bf16.msra.mxu0 0
    %467 = vmatprep.subr.bf16.mxu0 0
    %468 = vmatpush2.bf16.msra.mxu0 0
    %469 = vmatprep.subr.bf16.mxu0 0
    %470 = vmatpush2.bf16.msra.mxu0 0
    %471 = vmatprep.subr.bf16.mxu0 0
    %472 = vmatpush2.bf16.msra.mxu0 0
    %473 = vmatprep.subr.bf16.mxu0 0
    %474 = vmatpush2.bf16.msra.mxu0 0
    %475 = vmatprep.subr.bf16.mxu0 0
    %476 = vmatpush2.bf16.msra.mxu0 0
    %477 = vmatprep.subr.bf16.mxu0 0
    %478 = vmatpush2.bf16.msra.mxu0 0
    %479 = vmatprep.subr.bf16.mxu0 0
    %480 = vmatpush2.bf16.msra.mxu0 0
    %481 = vmatprep.mubr.bf16.mxu0 0
    %482 = vmatmul.mubr.bf16.gmra.mxu0 %v424
    %v483 = vpop.f32.mrf.mxu0
    %v484 = vadd.f32 0.0, %v483
    %v485 = vpop.f32.mrf.mxu0
    %v486 = vadd.f32 0.0, %v485
    %v487 = vpop.f32.mrf.mxu0
    %v488 = vpop.f32.mrf.mxu0
    %489 = vdwg.mxu0
    %v490 = vld [vmem:[#allocation12 + $0x6] sm:$0x3]
    %v492 = vlaneseq
    %v493 = vshrl.u32 %v492, 7
    %v494 = vsub.s32 0, %v493
    %v495 = vrot.slane %v490, %v494
    %v496 = vlaneseq
    %v497 = vshrl.u32 %v496, 7
    %v498 = vsub.s32 1, %v497
    %v499 = vrot.slane %v490, %v498
    %v502 = vmul.f32 %v484, %v495
    %v503 = vmul.f32 %v486, %v499
    %v504 = vld [vmem:[#allocation12 + $0x2] sm:$0x3]
    %v505 = vld [vmem:[#allocation12 + $0x4] sm:$0x3]
    %v506 = vrot.slane %v502, 4
    %v507 = vadd.f32 %v502, %v506
    %v508 = vrot.slane %v507, 2
    %v509 = vadd.f32 %v507, %v508
    %v510 = vrot.slane %v509, 1
    %v511 = vadd.f32 %v509, %v510
    %v512 = vrot.slane %v503, 4
    %v513 = vadd.f32 %v503, %v512
    %v514 = vrot.slane %v513, 2
    %v515 = vadd.f32 %v513, %v514
    %v516 = vrot.slane %v515, 1
    %v517 = vadd.f32 %v515, %v516
    %v518 = vmul.f32 %v502, %v502
    %v519 = vmul.f32 %v503, %v503
    %v520 = vrot.slane %v518, 4
    %v521 = vadd.f32 %v518, %v520
    %v522 = vrot.slane %v521, 2
    %v523 = vadd.f32 %v521, %v522
    %v524 = vrot.slane %v523, 1
    %v525 = vadd.f32 %v523, %v524
    %v526 = vrot.slane %v519, 4
    %v527 = vadd.f32 %v519, %v526
    %v528 = vrot.slane %v527, 2
    %v529 = vadd.f32 %v527, %v528
    %v530 = vrot.slane %v529, 1
    %v531 = vadd.f32 %v529, %v530
    %v532 = vmul.f32 %v511, 0.125
    %v533 = vmul.f32 %v517, 0.125
    %v534 = vmul.f32 %v525, 0.125
    %v535 = vmul.f32 %v531, 0.125
    %v536 = vmul.f32 %v532, %v532
    %v537 = vmul.f32 %v533, %v533
    %v538 = vsub.f32 %v534, %v536
    %v539 = vsub.f32 %v535, %v537
    %v540 = vmax.f32 %v538, 0.0
    %v541 = vmax.f32 %v539, 0.0
    %v542 = vadd.f32 %v540, 0.8
    %v543 = vadd.f32 %v541, 0.8
    %v544 = vrsqrt.pop %v542
    %v545 = vrsqrt.pop %v543
    %v548 = vcombine.low %v544, %v545
    %v550 = vunpack.c.l.s4 1966171168
    %v551 = vunpack.c.0.s8 %v550
    %v552 = vlaneseq
    %v553 = vshrl.u32 %v552, 7
    %v554 = vsub.s32 %v551, %v553
    %v555 = vrot.slane %v548, %v554
    %v557 = vunpack.c.l.s4 1966171168
    %v558 = vunpack.c.0.s8 %v557
    %v559 = vlaneseq
    %v560 = vshrl.u32 %v559, 7
    %v561 = vsub.s32 %v558, %v560
    %v562 = vrot.slane %v555, %v561
    %v564 = vmul.f32 %v504, %v562
    %v566 = vlaneseq
    %v567 = vshrl.u32 %v566, 7
    %v568 = vsub.s32 0, %v567
    %v569 = vrot.slane %v564, %v568
    %v570 = vlaneseq
    %v571 = vshrl.u32 %v570, 7
    %v572 = vsub.s32 1, %v571
    %v573 = vrot.slane %v564, %v572
    %v576 = vmul.f32 %v532, %v569
    %v577 = vmul.f32 %v533, %v573
    %v580 = vcombine.low %v576, %v577
    %v582 = vunpack.c.l.s4 1966171168
    %v583 = vunpack.c.0.s8 %v582
    %v584 = vlaneseq
    %v585 = vshrl.u32 %v584, 7
    %v586 = vsub.s32 %v583, %v585
    %v587 = vrot.slane %v580, %v586
    %v589 = vunpack.c.l.s4 1966171168
    %v590 = vunpack.c.0.s8 %v589
    %v591 = vlaneseq
    %v592 = vshrl.u32 %v591, 7
    %v593 = vsub.s32 %v590, %v592
    %v594 = vrot.slane %v587, %v593
    %v596 = vsub.f32 %v505, %v594
    %v597 = vmul.f32 %v502, %v569
    %v598 = vmul.f32 %v503, %v573
    %v600 = vlaneseq
    %v601 = vshrl.u32 %v600, 7
    %v602 = vsub.s32 0, %v601
    %v603 = vrot.slane %v596, %v602
    %v604 = vlaneseq
    %v605 = vshrl.u32 %v604, 7
    %v606 = vsub.s32 1, %v605
    %v607 = vrot.slane %v596, %v606
    %v610 = vadd.f32 %v597, %v603
    %v611 = vadd.f32 %v598, %v607
    %vm612 = vcmp.gt.f32.partialorder %v610, 0.0
    %vm613 = vcmp.gt.f32.partialorder %v611, 0.0
    %v614 = vmul.f32 %v610, 0.2
    %v615 = vmul.f32 %v611, 0.2
    %v616 = vsel %vm612, %v610, %v614
    %v617 = vsel %vm613, %v611, %v615
    %v618 = vpack.c.bf16 %v616, %v616
    %v619 = vpack.c.bf16 %v617, %v617
    %v620 = vld [vmem:[#allocation4] sm:$0xff]
    %v621 = vld [vmem:[#allocation4 + $0x8] sm:$0xff]
    %v622 = vld [vmem:[#allocation4 + $0x10] sm:$0xff]
    %v623 = vld [vmem:[#allocation4 + $0x18] sm:$0xff]
    %v624 = vld [vmem:[#allocation4 + $0x20] sm:$0xff]
    %v625 = vld [vmem:[#allocation4 + $0x28] sm:$0xff]
    %v626 = vld [vmem:[#allocation4 + $0x30] sm:$0xff]
    %v627 = vld [vmem:[#allocation4 + $0x38] sm:$0xff]
    %v628 = vld [vmem:[#allocation4 + $0x40] sm:$0xff]
    %v629 = vld [vmem:[#allocation4 + $0x48] sm:$0xff]
    %v630 = vld [vmem:[#allocation4 + $0x50] sm:$0xff]
    %v631 = vld [vmem:[#allocation4 + $0x58] sm:$0xff]
    %v632 = vld [vmem:[#allocation4 + $0x60] sm:$0xff]
    %v633 = vld [vmem:[#allocation4 + $0x68] sm:$0xff]
    %v634 = vld [vmem:[#allocation4 + $0x70] sm:$0xff]
    %v635 = vld [vmem:[#allocation4 + $0x78] sm:$0xff]
    %v636 = vunpack.c.l.s8.bf16 %v620
    %v637 = vunpack.c.l.s8.bf16 %v621
    %v638 = vunpack.c.h.s8.bf16 %v620
    %v639 = vunpack.c.h.s8.bf16 %v621
    %v640 = vunpack.c.l.s8.bf16 %v622
    %v641 = vunpack.c.l.s8.bf16 %v623
    %v642 = vunpack.c.h.s8.bf16 %v622
    %v643 = vunpack.c.h.s8.bf16 %v623
    %v644 = vunpack.c.l.s8.bf16 %v624
    %v645 = vunpack.c.l.s8.bf16 %v625
    %v646 = vunpack.c.h.s8.bf16 %v624
    %v647 = vunpack.c.h.s8.bf16 %v625
    %v648 = vunpack.c.l.s8.bf16 %v626
    %v649 = vunpack.c.l.s8.bf16 %v627
    %v650 = vunpack.c.h.s8.bf16 %v626
    %v651 = vunpack.c.h.s8.bf16 %v627
    %v652 = vunpack.c.l.s8.bf16 %v628
    %v653 = vunpack.c.l.s8.bf16 %v629
    %v654 = vunpack.c.h.s8.bf16 %v628
    %v655 = vunpack.c.h.s8.bf16 %v629
    %v656 = vunpack.c.l.s8.bf16 %v630
    %v657 = vunpack.c.l.s8.bf16 %v631
    %v658 = vunpack.c.h.s8.bf16 %v630
    %v659 = vunpack.c.h.s8.bf16 %v631
    %v660 = vunpack.c.l.s8.bf16 %v632
    %v661 = vunpack.c.l.s8.bf16 %v633
    %v662 = vunpack.c.h.s8.bf16 %v632
    %v663 = vunpack.c.h.s8.bf16 %v633
    %v664 = vunpack.c.l.s8.bf16 %v634
    %v665 = vunpack.c.l.s8.bf16 %v635
    %v666 = vunpack.c.h.s8.bf16 %v634
    %v667 = vunpack.c.h.s8.bf16 %v635
    %668 = vmatprep.subr.bf16.mxu0 %v651
    %669 = vmatpush1.bf16.msra.mxu0 %v650
    %670 = vmatprep.subr.bf16.mxu0 %v649
    %671 = vmatpush1.bf16.msra.mxu0 %v648
    %672 = vmatprep.subr.bf16.mxu0 %v647
    %673 = vmatpush1.bf16.msra.mxu0 %v646
    %674 = vmatprep.subr.bf16.mxu0 %v645
    %675 = vmatpush1.bf16.msra.mxu0 %v644
    %676 = vmatprep.subr.bf16.mxu0 %v643
    %677 = vmatpush1.bf16.msra.mxu0 %v642
    %678 = vmatprep.subr.bf16.mxu0 %v641
    %679 = vmatpush1.bf16.msra.mxu0 %v640
    %680 = vmatprep.subr.bf16.mxu0 %v639
    %681 = vmatpush1.bf16.msra.mxu0 %v638
    %682 = vmatprep.subr.bf16.mxu0 %v637
    %683 = vmatpush1.bf16.msra.mxu0 %v636
    %684 = vmatprep.subr.bf16.mxu0 %v667
    %685 = vmatpush2.bf16.msra.mxu0 %v666
    %686 = vmatprep.subr.bf16.mxu0 %v665
    %687 = vmatpush2.bf16.msra.mxu0 %v664
    %688 = vmatprep.subr.bf16.mxu0 %v663
    %689 = vmatpush2.bf16.msra.mxu0 %v662
    %690 = vmatprep.subr.bf16.mxu0 %v661
    %691 = vmatpush2.bf16.msra.mxu0 %v660
    %692 = vmatprep.subr.bf16.mxu0 %v659
    %693 = vmatpush2.bf16.msra.mxu0 %v658
    %694 = vmatprep.subr.bf16.mxu0 %v657
    %695 = vmatpush2.bf16.msra.mxu0 %v656
    %696 = vmatprep.subr.bf16.mxu0 %v655
    %697 = vmatpush2.bf16.msra.mxu0 %v654
    %698 = vmatprep.subr.bf16.mxu0 %v653
    %699 = vmatpush2.bf16.msra.mxu0 %v652
    %700 = vmatprep.mubr.bf16.mxu0 %v619
    %701 = vmatmul.mubr.bf16.gmra.mxu0 %v618
    %v702 = vpop.f32.mrf.mxu0
    %v703 = vadd.f32 0.0, %v702
    %v704 = vpop.f32.mrf.mxu0
    %v705 = vadd.f32 0.0, %v704
    %v706 = vpop.f32.mrf.mxu0
    %v707 = vpop.f32.mrf.mxu0
    %708 = vdwg.mxu0
    %v709 = vld [vmem:[#allocation12 + $0xc] sm:$0x3]
    %v711 = vlaneseq
    %v712 = vshrl.u32 %v711, 7
    %v713 = vsub.s32 0, %v712
    %v714 = vrot.slane %v709, %v713
    %v715 = vlaneseq
    %v716 = vshrl.u32 %v715, 7
    %v717 = vsub.s32 1, %v716
    %v718 = vrot.slane %v709, %v717
    %v721 = vmul.f32 %v703, %v714
    %v722 = vmul.f32 %v705, %v718
    %v723 = vld [vmem:[#allocation12 + $0x8] sm:$0x3]
    %v724 = vld [vmem:[#allocation12 + $0xa] sm:$0x3]
    %v725 = vrot.slane %v721, 4
    %v726 = vadd.f32 %v721, %v725
    %v727 = vrot.slane %v726, 2
    %v728 = vadd.f32 %v726, %v727
    %v729 = vrot.slane %v728, 1
    %v730 = vadd.f32 %v728, %v729
    %v731 = vrot.slane %v722, 4
    %v732 = vadd.f32 %v722, %v731
    %v733 = vrot.slane %v732, 2
    %v734 = vadd.f32 %v732, %v733
    %v735 = vrot.slane %v734, 1
    %v736 = vadd.f32 %v734, %v735
    %v737 = vmul.f32 %v721, %v721
    %v738 = vmul.f32 %v722, %v722
    %v739 = vrot.slane %v737, 4
    %v740 = vadd.f32 %v737, %v739
    %v741 = vrot.slane %v740, 2
    %v742 = vadd.f32 %v740, %v741
    %v743 = vrot.slane %v742, 1
    %v744 = vadd.f32 %v742, %v743
    %v745 = vrot.slane %v738, 4
    %v746 = vadd.f32 %v738, %v745
    %v747 = vrot.slane %v746, 2
    %v748 = vadd.f32 %v746, %v747
    %v749 = vrot.slane %v748, 1
    %v750 = vadd.f32 %v748, %v749
    %v751 = vmul.f32 %v730, 0.125
    %v752 = vmul.f32 %v736, 0.125
    %v753 = vmul.f32 %v744, 0.125
    %v754 = vmul.f32 %v750, 0.125
    %v755 = vmul.f32 %v751, %v751
    %v756 = vmul.f32 %v752, %v752
    %v757 = vsub.f32 %v753, %v755
    %v758 = vsub.f32 %v754, %v756
    %v759 = vmax.f32 %v757, 0.0
    %v760 = vmax.f32 %v758, 0.0
    %v761 = vadd.f32 %v759, 0.8
    %v762 = vadd.f32 %v760, 0.8
    %v763 = vrsqrt.pop %v761
    %v764 = vrsqrt.pop %v762
    %v767 = vcombine.low %v763, %v764
    %v769 = vunpack.c.l.s4 1966171168
    %v770 = vunpack.c.0.s8 %v769
    %v771 = vlaneseq
    %v772 = vshrl.u32 %v771, 7
    %v773 = vsub.s32 %v770, %v772
    %v774 = vrot.slane %v767, %v773
    %v776 = vunpack.c.l.s4 1966171168
    %v777 = vunpack.c.0.s8 %v776
    %v778 = vlaneseq
    %v779 = vshrl.u32 %v778, 7
    %v780 = vsub.s32 %v777, %v779
    %v781 = vrot.slane %v774, %v780
    %v783 = vmul.f32 %v723, %v781
    %v785 = vlaneseq
    %v786 = vshrl.u32 %v785, 7
    %v787 = vsub.s32 0, %v786
    %v788 = vrot.slane %v783, %v787
    %v789 = vlaneseq
    %v790 = vshrl.u32 %v789, 7
    %v791 = vsub.s32 1, %v790
    %v792 = vrot.slane %v783, %v791
    %v795 = vmul.f32 %v751, %v788
    %v796 = vmul.f32 %v752, %v792
    %v799 = vcombine.low %v795, %v796
    %v801 = vunpack.c.l.s4 1966171168
    %v802 = vunpack.c.0.s8 %v801
    %v803 = vlaneseq
    %v804 = vshrl.u32 %v803, 7
    %v805 = vsub.s32 %v802, %v804
    %v806 = vrot.slane %v799, %v805
    %v808 = vunpack.c.l.s4 1966171168
    %v809 = vunpack.c.0.s8 %v808
    %v810 = vlaneseq
    %v811 = vshrl.u32 %v810, 7
    %v812 = vsub.s32 %v809, %v811
    %v813 = vrot.slane %v806, %v812
    %v815 = vsub.f32 %v724, %v813
    %v816 = vmul.f32 %v721, %v788
    %v817 = vmul.f32 %v722, %v792
    %v819 = vlaneseq
    %v820 = vshrl.u32 %v819, 7
    %v821 = vsub.s32 0, %v820
    %v822 = vrot.slane %v815, %v821
    %v823 = vlaneseq
    %v824 = vshrl.u32 %v823, 7
    %v825 = vsub.s32 1, %v824
    %v826 = vrot.slane %v815, %v825
    %v829 = vadd.f32 %v816, %v822
    %v830 = vadd.f32 %v817, %v826
    %vm831 = vcmp.gt.f32.partialorder %v829, 0.0
    %vm832 = vcmp.gt.f32.partialorder %v830, 0.0
    %v833 = vmul.f32 %v829, 0.2
    %v834 = vmul.f32 %v830, 0.2
    %v835 = vsel %vm831, %v829, %v833
    %v836 = vsel %vm832, %v830, %v834
    %v837 = vpack.c.bf16 %v835, %v835
    %v838 = vpack.c.bf16 %v836, %v836
    %v839 = vld [vmem:[#allocation6] sm:$0xff]
    %v840 = vld [vmem:[#allocation6 + $0x8] sm:$0xff]
    %v841 = vld [vmem:[#allocation6 + $0x10] sm:$0xff]
    %v842 = vld [vmem:[#allocation6 + $0x18] sm:$0xff]
    %v843 = vld [vmem:[#allocation6 + $0x20] sm:$0xff]
    %v844 = vld [vmem:[#allocation6 + $0x28] sm:$0xff]
    %v845 = vld [vmem:[#allocation6 + $0x30] sm:$0xff]
    %v846 = vld [vmem:[#allocation6 + $0x38] sm:$0xff]
    %v847 = vld [vmem:[#allocation6 + $0x40] sm:$0xff]
    %v848 = vld [vmem:[#allocation6 + $0x48] sm:$0xff]
    %v849 = vld [vmem:[#allocation6 + $0x50] sm:$0xff]
    %v850 = vld [vmem:[#allocation6 + $0x58] sm:$0xff]
    %v851 = vld [vmem:[#allocation6 + $0x60] sm:$0xff]
    %v852 = vld [vmem:[#allocation6 + $0x68] sm:$0xff]
    %v853 = vld [vmem:[#allocation6 + $0x70] sm:$0xff]
    %v854 = vld [vmem:[#allocation6 + $0x78] sm:$0xff]
    %v855 = vld [vmem:[#allocation6 + $0x80] sm:$0xff]
    %v856 = vld [vmem:[#allocation6 + $0x88] sm:$0xff]
    %v857 = vld [vmem:[#allocation6 + $0x90] sm:$0xff]
    %v858 = vld [vmem:[#allocation6 + $0x98] sm:$0xff]
    %v859 = vld [vmem:[#allocation6 + $0xa0] sm:$0xff]
    %v860 = vld [vmem:[#allocation6 + $0xa8] sm:$0xff]
    %v861 = vld [vmem:[#allocation6 + $0xb0] sm:$0xff]
    %v862 = vld [vmem:[#allocation6 + $0xb8] sm:$0xff]
    %v863 = vld [vmem:[#allocation6 + $0xc0] sm:$0xff]
    %v864 = vld [vmem:[#allocation6 + $0xc8] sm:$0xff]
    %v865 = vld [vmem:[#allocation6 + $0xd0] sm:$0xff]
    %v866 = vld [vmem:[#allocation6 + $0xd8] sm:$0xff]
    %v867 = vld [vmem:[#allocation6 + $0xe0] sm:$0xff]
    %v868 = vld [vmem:[#allocation6 + $0xe8] sm:$0xff]
    %v869 = vld [vmem:[#allocation6 + $0xf0] sm:$0xff]
    %v870 = vld [vmem:[#allocation6 + $0xf8] sm:$0xff]
    %v871 = vunpack.c.l.s8.bf16 %v839
    %v872 = vunpack.c.l.s8.bf16 %v840
    %v873 = vunpack.c.l.s8.bf16 %v841
    %v874 = vunpack.c.l.s8.bf16 %v842
    %v875 = vunpack.c.h.s8.bf16 %v839
    %v876 = vunpack.c.h.s8.bf16 %v840
    %v877 = vunpack.c.h.s8.bf16 %v841
    %v878 = vunpack.c.h.s8.bf16 %v842
    %v879 = vunpack.c.l.s8.bf16 %v843
    %v880 = vunpack.c.l.s8.bf16 %v844
    %v881 = vunpack.c.l.s8.bf16 %v845
    %v882 = vunpack.c.l.s8.bf16 %v846
    %v883 = vunpack.c.h.s8.bf16 %v843
    %v884 = vunpack.c.h.s8.bf16 %v844
    %v885 = vunpack.c.h.s8.bf16 %v845
    %v886 = vunpack.c.h.s8.bf16 %v846
    %v887 = vunpack.c.l.s8.bf16 %v847
    %v888 = vunpack.c.l.s8.bf16 %v848
    %v889 = vunpack.c.l.s8.bf16 %v849
    %v890 = vunpack.c.l.s8.bf16 %v850
    %v891 = vunpack.c.h.s8.bf16 %v847
    %v892 = vunpack.c.h.s8.bf16 %v848
    %v893 = vunpack.c.h.s8.bf16 %v849
    %v894 = vunpack.c.h.s8.bf16 %v850
    %v895 = vunpack.c.l.s8.bf16 %v851
    %v896 = vunpack.c.l.s8.bf16 %v852
    %v897 = vunpack.c.l.s8.bf16 %v853
    %v898 = vunpack.c.l.s8.bf16 %v854
    %v899 = vunpack.c.h.s8.bf16 %v851
    %v900 = vunpack.c.h.s8.bf16 %v852
    %v901 = vunpack.c.h.s8.bf16 %v853
    %v902 = vunpack.c.h.s8.bf16 %v854
    %v903 = vunpack.c.l.s8.bf16 %v855
    %v904 = vunpack.c.l.s8.bf16 %v856
    %v905 = vunpack.c.l.s8.bf16 %v857
    %v906 = vunpack.c.l.s8.bf16 %v858
    %v907 = vunpack.c.h.s8.bf16 %v855
    %v908 = vunpack.c.h.s8.bf16 %v856
    %v909 = vunpack.c.h.s8.bf16 %v857
    %v910 = vunpack.c.h.s8.bf16 %v858
    %v911 = vunpack.c.l.s8.bf16 %v859
    %v912 = vunpack.c.l.s8.bf16 %v860
    %v913 = vunpack.c.l.s8.bf16 %v861
    %v914 = vunpack.c.l.s8.bf16 %v862
    %v915 = vunpack.c.h.s8.bf16 %v859
    %v916 = vunpack.c.h.s8.bf16 %v860
    %v917 = vunpack.c.h.s8.bf16 %v861
    %v918 = vunpack.c.h.s8.bf16 %v862
    %v919 = vunpack.c.l.s8.bf16 %v863
    %v920 = vunpack.c.l.s8.bf16 %v864
    %v921 = vunpack.c.l.s8.bf16 %v865
    %v922 = vunpack.c.l.s8.bf16 %v866
    %v923 = vunpack.c.h.s8.bf16 %v863
    %v924 = vunpack.c.h.s8.bf16 %v864
    %v925 = vunpack.c.h.s8.bf16 %v865
    %v926 = vunpack.c.h.s8.bf16 %v866
    %v927 = vunpack.c.l.s8.bf16 %v867
    %v928 = vunpack.c.l.s8.bf16 %v868
    %v929 = vunpack.c.l.s8.bf16 %v869
    %v930 = vunpack.c.l.s8.bf16 %v870
    %v931 = vunpack.c.h.s8.bf16 %v867
    %v932 = vunpack.c.h.s8.bf16 %v868
    %v933 = vunpack.c.h.s8.bf16 %v869
    %v934 = vunpack.c.h.s8.bf16 %v870
    %935 = vmatprep.subr.bf16.mxu0 %v900
    %936 = vmatpush1.bf16.msra.mxu0 %v899
    %937 = vmatprep.subr.bf16.mxu0 %v896
    %938 = vmatpush1.bf16.msra.mxu0 %v895
    %939 = vmatprep.subr.bf16.mxu0 %v892
    %940 = vmatpush1.bf16.msra.mxu0 %v891
    %941 = vmatprep.subr.bf16.mxu0 %v888
    %942 = vmatpush1.bf16.msra.mxu0 %v887
    %943 = vmatprep.subr.bf16.mxu0 %v884
    %944 = vmatpush1.bf16.msra.mxu0 %v883
    %945 = vmatprep.subr.bf16.mxu0 %v880
    %946 = vmatpush1.bf16.msra.mxu0 %v879
    %947 = vmatprep.subr.bf16.mxu0 %v876
    %948 = vmatpush1.bf16.msra.mxu0 %v875
    %949 = vmatprep.subr.bf16.mxu0 %v872
    %950 = vmatpush1.bf16.msra.mxu0 %v871
    %951 = vmatprep.subr.bf16.mxu0 %v932
    %952 = vmatpush2.bf16.msra.mxu0 %v931
    %953 = vmatprep.subr.bf16.mxu0 %v928
    %954 = vmatpush2.bf16.msra.mxu0 %v927
    %955 = vmatprep.subr.bf16.mxu0 %v924
    %956 = vmatpush2.bf16.msra.mxu0 %v923
    %957 = vmatprep.subr.bf16.mxu0 %v920
    %958 = vmatpush2.bf16.msra.mxu0 %v919
    %959 = vmatprep.subr.bf16.mxu0 %v916
    %960 = vmatpush2.bf16.msra.mxu0 %v915
    %961 = vmatprep.subr.bf16.mxu0 %v912
    %962 = vmatpush2.bf16.msra.mxu0 %v911
    %963 = vmatprep.subr.bf16.mxu0 %v908
    %964 = vmatpush2.bf16.msra.mxu0 %v907
    %965 = vmatprep.subr.bf16.mxu0 %v904
    %966 = vmatpush2.bf16.msra.mxu0 %v903
    %967 = vmatprep.mubr.bf16.mxu0 %v838
    %968 = vmatmul.mubr.bf16.gmra.mxu0 %v837
    %v969 = vpop.f32.mrf.mxu0
    %v970 = vadd.f32 0.0, %v969
    %v971 = vpop.f32.mrf.mxu0
    %v972 = vadd.f32 0.0, %v971
    %v973 = vpop.f32.mrf.mxu0
    %v974 = vpop.f32.mrf.mxu0
    %975 = vdwg.mxu0
    %976 = vmatprep.subr.bf16.mxu0 %v902
    %977 = vmatpush1.bf16.msra.mxu0 %v901
    %978 = vmatprep.subr.bf16.mxu0 %v898
    %979 = vmatpush1.bf16.msra.mxu0 %v897
    %980 = vmatprep.subr.bf16.mxu0 %v894
    %981 = vmatpush1.bf16.msra.mxu0 %v893
    %982 = vmatprep.subr.bf16.mxu0 %v890
    %983 = vmatpush1.bf16.msra.mxu0 %v889
    %984 = vmatprep.subr.bf16.mxu0 %v886
    %985 = vmatpush1.bf16.msra.mxu0 %v885
    %986 = vmatprep.subr.bf16.mxu0 %v882
    %987 = vmatpush1.bf16.msra.mxu0 %v881
    %988 = vmatprep.subr.bf16.mxu0 %v878
    %989 = vmatpush1.bf16.msra.mxu0 %v877
    %990 = vmatprep.subr.bf16.mxu0 %v874
    %991 = vmatpush1.bf16.msra.mxu0 %v873
    %992 = vmatprep.subr.bf16.mxu0 %v934
    %993 = vmatpush2.bf16.msra.mxu0 %v933
    %994 = vmatprep.subr.bf16.mxu0 %v930
    %995 = vmatpush2.bf16.msra.mxu0 %v929
    %996 = vmatprep.subr.bf16.mxu0 %v926
    %997 = vmatpush2.bf16.msra.mxu0 %v925
    %998 = vmatprep.subr.bf16.mxu0 %v922
    %999 = vmatpush2.bf16.msra.mxu0 %v921
    %1000 = vmatprep.subr.bf16.mxu0 %v918
    %1001 = vmatpush2.bf16.msra.mxu0 %v917
    %1002 = vmatprep.subr.bf16.mxu0 %v914
    %1003 = vmatpush2.bf16.msra.mxu0 %v913
    %1004 = vmatprep.subr.bf16.mxu0 %v910
    %1005 = vmatpush2.bf16.msra.mxu0 %v909
    %1006 = vmatprep.subr.bf16.mxu0 %v906
    %1007 = vmatpush2.bf16.msra.mxu0 %v905
    %1008 = vmatprep.mubr.bf16.mxu0 %v838
    %1009 = vmatmul.mubr.bf16.gmra.mxu0 %v837
    %v1010 = vpop.f32.mrf.mxu0
    %v1011 = vadd.f32 0.0, %v1010
    %v1012 = vpop.f32.mrf.mxu0
    %v1013 = vadd.f32 0.0, %v1012
    %v1014 = vpop.f32.mrf.mxu0
    %v1015 = vpop.f32.mrf.mxu0
    %1016 = vdwg.mxu0
    %v1017 = vld [vmem:[#allocation12 + $0x16] sm:$0xf]
    %v1019 = vlaneseq
    %v1020 = vshrl.u32 %v1019, 7
    %v1021 = vsub.s32 0, %v1020
    %v1022 = vrot.slane %v1017, %v1021
    %v1023 = vlaneseq
    %v1024 = vshrl.u32 %v1023, 7
    %v1025 = vsub.s32 1, %v1024
    %v1026 = vrot.slane %v1017, %v1025
    %v1027 = vlaneseq
    %v1028 = vshrl.u32 %v1027, 7
    %v1029 = vsub.s32 2, %v1028
    %v1030 = vrot.slane %v1017, %v1029
    %v1031 = vlaneseq
    %v1032 = vshrl.u32 %v1031, 7
    %v1033 = vsub.s32 3, %v1032
    %v1034 = vrot.slane %v1017, %v1033
    %v1039 = vmul.f32 %v970, %v1022
    %v1040 = vmul.f32 %v972, %v1026
    %v1041 = vmul.f32 %v1011, %v1030
    %v1042 = vmul.f32 %v1013, %v1034
    %v1043 = vld [vmem:[#allocation12 + $0xe] sm:$0xf]
    %v1044 = vld [vmem:[#allocation12 + $0x12] sm:$0xf]
    %v1045 = vrot.slane %v1039, 4
    %v1046 = vadd.f32 %v1039, %v1045
    %v1047 = vrot.slane %v1046, 2
    %v1048 = vadd.f32 %v1046, %v1047
    %v1049 = vrot.slane %v1048, 1
    %v1050 = vadd.f32 %v1048, %v1049
    %v1051 = vrot.slane %v1040, 4
    %v1052 = vadd.f32 %v1040, %v1051
    %v1053 = vrot.slane %v1052, 2
    %v1054 = vadd.f32 %v1052, %v1053
    %v1055 = vrot.slane %v1054, 1
    %v1056 = vadd.f32 %v1054, %v1055
    %v1057 = vrot.slane %v1041, 4
    %v1058 = vadd.f32 %v1041, %v1057
    %v1059 = vrot.slane %v1058, 2
    %v1060 = vadd.f32 %v1058, %v1059
    %v1061 = vrot.slane %v1060, 1
    %v1062 = vadd.f32 %v1060, %v1061
    %v1063 = vrot.slane %v1042, 4
    %v1064 = vadd.f32 %v1042, %v1063
    %v1065 = vrot.slane %v1064, 2
    %v1066 = vadd.f32 %v1064, %v1065
    %v1067 = vrot.slane %v1066, 1
    %v1068 = vadd.f32 %v1066, %v1067
    %v1069 = vmul.f32 %v1039, %v1039
    %v1070 = vmul.f32 %v1040, %v1040
    %v1071 = vmul.f32 %v1041, %v1041
    %v1072 = vmul.f32 %v1042, %v1042
    %v1073 = vrot.slane %v1069, 4
    %v1074 = vadd.f32 %v1069, %v1073
    %v1075 = vrot.slane %v1074, 2
    %v1076 = vadd.f32 %v1074, %v1075
    %v1077 = vrot.slane %v1076, 1
    %v1078 = vadd.f32 %v1076, %v1077
    %v1079 = vrot.slane %v1070, 4
    %v1080 = vadd.f32 %v1070, %v1079
    %v1081 = vrot.slane %v1080, 2
    %v1082 = vadd.f32 %v1080, %v1081
    %v1083 = vrot.slane %v1082, 1
    %v1084 = vadd.f32 %v1082, %v1083
    %v1085 = vrot.slane %v1071, 4
    %v1086 = vadd.f32 %v1071, %v1085
    %v1087 = vrot.slane %v1086, 2
    %v1088 = vadd.f32 %v1086, %v1087
    %v1089 = vrot.slane %v1088, 1
    %v1090 = vadd.f32 %v1088, %v1089
    %v1091 = vrot.slane %v1072, 4
    %v1092 = vadd.f32 %v1072, %v1091
    %v1093 = vrot.slane %v1092, 2
    %v1094 = vadd.f32 %v1092, %v1093
    %v1095 = vrot.slane %v1094, 1
    %v1096 = vadd.f32 %v1094, %v1095
    %v1097 = vmul.f32 %v1050, 0.125
    %v1098 = vmul.f32 %v1056, 0.125
    %v1099 = vmul.f32 %v1062, 0.125
    %v1100 = vmul.f32 %v1068, 0.125
    %v1101 = vmul.f32 %v1078, 0.125
    %v1102 = vmul.f32 %v1084, 0.125
    %v1103 = vmul.f32 %v1090, 0.125
    %v1104 = vmul.f32 %v1096, 0.125
    %v1105 = vmul.f32 %v1097, %v1097
    %v1106 = vmul.f32 %v1098, %v1098
    %v1107 = vmul.f32 %v1099, %v1099
    %v1108 = vmul.f32 %v1100, %v1100
    %v1109 = vsub.f32 %v1101, %v1105
    %v1110 = vsub.f32 %v1102, %v1106
    %v1111 = vsub.f32 %v1103, %v1107
    %v1112 = vsub.f32 %v1104, %v1108
    %v1113 = vmax.f32 %v1109, 0.0
    %v1114 = vmax.f32 %v1110, 0.0
    %v1115 = vmax.f32 %v1111, 0.0
    %v1116 = vmax.f32 %v1112, 0.0
    %v1117 = vadd.f32 %v1113, 0.8
    %v1118 = vadd.f32 %v1114, 0.8
    %v1119 = vadd.f32 %v1115, 0.8
    %v1120 = vadd.f32 %v1116, 0.8
    %v1121 = vrsqrt.pop %v1117
    %v1122 = vrsqrt.pop %v1118
    %v1123 = vrsqrt.pop %v1119
    %v1124 = vrsqrt.pop %v1120
    %v1129 = vcombine.low %v1121, %v1122
    %v1130 = vcombine.low %v1123, %v1124
    %v1132 = vunpack.c.l.s4 1966171168
    %v1133 = vunpack.c.0.s8 %v1132
    %v1134 = vlaneseq
    %v1135 = vshrl.u32 %v1134, 7
    %v1136 = vsub.s32 %v1133, %v1135
    %v1137 = vrot.slane %v1129, %v1136
    %v1139 = vunpack.c.l.s4 1966171168
    %v1140 = vunpack.c.0.s8 %v1139
    %v1141 = vlaneseq
    %v1142 = vshrl.u32 %v1141, 7
    %v1143 = vsub.s32 %v1140, %v1142
    %v1144 = vrot.slane %v1130, %v1143
    %v1145 = vcombine.low %v1137, %v1144
    %v1147 = vunpack.c.l.s4 1966171168
    %v1148 = vunpack.c.0.s8 %v1147
    %v1149 = vlaneseq
    %v1150 = vshrl.u32 %v1149, 7
    %v1151 = vsub.s32 %v1148, %v1150
    %v1152 = vrot.slane %v1145, %v1151
    %v1154 = vmul.f32 %v1043, %v1152
    %v1156 = vlaneseq
    %v1157 = vshrl.u32 %v1156, 7
    %v1158 = vsub.s32 0, %v1157
    %v1159 = vrot.slane %v1154, %v1158
    %v1160 = vlaneseq
    %v1161 = vshrl.u32 %v1160, 7
    %v1162 = vsub.s32 1, %v1161
    %v1163 = vrot.slane %v1154, %v1162
    %v1164 = vlaneseq
    %v1165 = vshrl.u32 %v1164, 7
    %v1166 = vsub.s32 2, %v1165
    %v1167 = vrot.slane %v1154, %v1166
    %v1168 = vlaneseq
    %v1169 = vshrl.u32 %v1168, 7
    %v1170 = vsub.s32 3, %v1169
    %v1171 = vrot.slane %v1154, %v1170
    %v1176 = vmul.f32 %v1097, %v1159
    %v1177 = vmul.f32 %v1098, %v1163
    %v1178 = vmul.f32 %v1099, %v1167
    %v1179 = vmul.f32 %v1100, %v1171
    %v1184 = vcombine.low %v1176, %v1177
    %v1185 = vcombine.low %v1178, %v1179
    %v1187 = vunpack.c.l.s4 1966171168
    %v1188 = vunpack.c.0.s8 %v1187
    %v1189 = vlaneseq
    %v1190 = vshrl.u32 %v1189, 7
    %v1191 = vsub.s32 %v1188, %v1190
    %v1192 = vrot.slane %v1184, %v1191
    %v1194 = vunpack.c.l.s4 1966171168
    %v1195 = vunpack.c.0.s8 %v1194
    %v1196 = vlaneseq
    %v1197 = vshrl.u32 %v1196, 7
    %v1198 = vsub.s32 %v1195, %v1197
    %v1199 = vrot.slane %v1185, %v1198
    %v1200 = vcombine.low %v1192, %v1199
    %v1202 = vunpack.c.l.s4 1966171168
    %v1203 = vunpack.c.0.s8 %v1202
    %v1204 = vlaneseq
    %v1205 = vshrl.u32 %v1204, 7
    %v1206 = vsub.s32 %v1203, %v1205
    %v1207 = vrot.slane %v1200, %v1206
    %v1209 = vsub.f32 %v1044, %v1207
    %v1210 = vmul.f32 %v1039, %v1159
    %v1211 = vmul.f32 %v1040, %v1163
    %v1212 = vmul.f32 %v1041, %v1167
    %v1213 = vmul.f32 %v1042, %v1171
    %v1215 = vlaneseq
    %v1216 = vshrl.u32 %v1215, 7
    %v1217 = vsub.s32 0, %v1216
    %v1218 = vrot.slane %v1209, %v1217
    %v1219 = vlaneseq
    %v1220 = vshrl.u32 %v1219, 7
    %v1221 = vsub.s32 1, %v1220
    %v1222 = vrot.slane %v1209, %v1221
    %v1223 = vlaneseq
    %v1224 = vshrl.u32 %v1223, 7
    %v1225 = vsub.s32 2, %v1224
    %v1226 = vrot.slane %v1209, %v1225
    %v1227 = vlaneseq
    %v1228 = vshrl.u32 %v1227, 7
    %v1229 = vsub.s32 3, %v1228
    %v1230 = vrot.slane %v1209, %v1229
    %v1235 = vadd.f32 %v1210, %v1218
    %v1236 = vadd.f32 %v1211, %v1222
    %v1237 = vadd.f32 %v1212, %v1226
    %v1238 = vadd.f32 %v1213, %v1230
    %vm1239 = vcmp.gt.f32.partialorder %v1235, 0.0
    %vm1240 = vcmp.gt.f32.partialorder %v1236, 0.0
    %vm1241 = vcmp.gt.f32.partialorder %v1237, 0.0
    %vm1242 = vcmp.gt.f32.partialorder %v1238, 0.0
    %v1243 = vmul.f32 %v1235, 0.2
    %v1244 = vmul.f32 %v1236, 0.2
    %v1245 = vmul.f32 %v1237, 0.2
    %v1246 = vmul.f32 %v1238, 0.2
    %v1247 = vsel %vm1239, %v1235, %v1243
    %v1248 = vsel %vm1240, %v1236, %v1244
    %v1249 = vsel %vm1241, %v1237, %v1245
    %v1250 = vsel %vm1242, %v1238, %v1246
    %v1251 = vpack.c.bf16 %v1247, %v1247
    %v1252 = vpack.c.bf16 %v1248, %v1248
    %v1253 = vpack.c.bf16 %v1249, %v1249
    %v1254 = vpack.c.bf16 %v1250, %v1250
    %v1255 = vld [vmem:[#allocation7] sm:$0xff]
    %v1256 = vld [vmem:[#allocation7 + $0x8] sm:$0xff]
    %v1257 = vld [vmem:[#allocation7 + $0x10] sm:$0xff]
    %v1258 = vld [vmem:[#allocation7 + $0x18] sm:$0xff]
    %v1259 = vld [vmem:[#allocation7 + $0x20] sm:$0xff]
    %v1260 = vld [vmem:[#allocation7 + $0x28] sm:$0xff]
    %v1261 = vld [vmem:[#allocation7 + $0x30] sm:$0xff]
    %v1262 = vld [vmem:[#allocation7 + $0x38] sm:$0xff]
    %v1263 = vld [vmem:[#allocation7 + $0x40] sm:$0xff]
    %v1264 = vld [vmem:[#allocation7 + $0x48] sm:$0xff]
    %v1265 = vld [vmem:[#allocation7 + $0x50] sm:$0xff]
    %v1266 = vld [vmem:[#allocation7 + $0x58] sm:$0xff]
    %v1267 = vld [vmem:[#allocation7 + $0x60] sm:$0xff]
    %v1268 = vld [vmem:[#allocation7 + $0x68] sm:$0xff]
    %v1269 = vld [vmem:[#allocation7 + $0x70] sm:$0xff]
    %v1270 = vld [vmem:[#allocation7 + $0x78] sm:$0xff]
    %v1271 = vld [vmem:[#allocation7 + $0x80] sm:$0xff]
    %v1272 = vld [vmem:[#allocation7 + $0x88] sm:$0xff]
    %v1273 = vld [vmem:[#allocation7 + $0x90] sm:$0xff]
    %v1274 = vld [vmem:[#allocation7 + $0x98] sm:$0xff]
    %v1275 = vld [vmem:[#allocation7 + $0xa0] sm:$0xff]
    %v1276 = vld [vmem:[#allocation7 + $0xa8] sm:$0xff]
    %v1277 = vld [vmem:[#allocation7 + $0xb0] sm:$0xff]
    %v1278 = vld [vmem:[#allocation7 + $0xb8] sm:$0xff]
    %v1279 = vld [vmem:[#allocation7 + $0xc0] sm:$0xff]
    %v1280 = vld [vmem:[#allocation7 + $0xc8] sm:$0xff]
    %v1281 = vld [vmem:[#allocation7 + $0xd0] sm:$0xff]
    %v1282 = vld [vmem:[#allocation7 + $0xd8] sm:$0xff]
    %v1283 = vld [vmem:[#allocation7 + $0xe0] sm:$0xff]
    %v1284 = vld [vmem:[#allocation7 + $0xe8] sm:$0xff]
    %v1285 = vld [vmem:[#allocation7 + $0xf0] sm:$0xff]
    %v1286 = vld [vmem:[#allocation7 + $0xf8] sm:$0xff]
    %v1287 = vld [vmem:[#allocation7 + $0x100] sm:$0xff]
    %v1288 = vld [vmem:[#allocation7 + $0x108] sm:$0xff]
    %v1289 = vld [vmem:[#allocation7 + $0x110] sm:$0xff]
    %v1290 = vld [vmem:[#allocation7 + $0x118] sm:$0xff]
    %v1291 = vld [vmem:[#allocation7 + $0x120] sm:$0xff]
    %v1292 = vld [vmem:[#allocation7 + $0x128] sm:$0xff]
    %v1293 = vld [vmem:[#allocation7 + $0x130] sm:$0xff]
    %v1294 = vld [vmem:[#allocation7 + $0x138] sm:$0xff]
    %v1295 = vld [vmem:[#allocation7 + $0x140] sm:$0xff]
    %v1296 = vld [vmem:[#allocation7 + $0x148] sm:$0xff]
    %v1297 = vld [vmem:[#allocation7 + $0x150] sm:$0xff]
    %v1298 = vld [vmem:[#allocation7 + $0x158] sm:$0xff]
    %v1299 = vld [vmem:[#allocation7 + $0x160] sm:$0xff]
    %v1300 = vld [vmem:[#allocation7 + $0x168] sm:$0xff]
    %v1301 = vld [vmem:[#allocation7 + $0x170] sm:$0xff]
    %v1302 = vld [vmem:[#allocation7 + $0x178] sm:$0xff]
    %v1303 = vld [vmem:[#allocation7 + $0x180] sm:$0xff]
    %v1304 = vld [vmem:[#allocation7 + $0x188] sm:$0xff]
    %v1305 = vld [vmem:[#allocation7 + $0x190] sm:$0xff]
    %v1306 = vld [vmem:[#allocation7 + $0x198] sm:$0xff]
    %v1307 = vld [vmem:[#allocation7 + $0x1a0] sm:$0xff]
    %v1308 = vld [vmem:[#allocation7 + $0x1a8] sm:$0xff]
    %v1309 = vld [vmem:[#allocation7 + $0x1b0] sm:$0xff]
    %v1310 = vld [vmem:[#allocation7 + $0x1b8] sm:$0xff]
    %v1311 = vld [vmem:[#allocation7 + $0x1c0] sm:$0xff]
    %v1312 = vld [vmem:[#allocation7 + $0x1c8] sm:$0xff]
    %v1313 = vld [vmem:[#allocation7 + $0x1d0] sm:$0xff]
    %v1314 = vld [vmem:[#allocation7 + $0x1d8] sm:$0xff]
    %v1315 = vld [vmem:[#allocation7 + $0x1e0] sm:$0xff]
    %v1316 = vld [vmem:[#allocation7 + $0x1e8] sm:$0xff]
    %v1317 = vld [vmem:[#allocation7 + $0x1f0] sm:$0xff]
    %v1318 = vld [vmem:[#allocation7 + $0x1f8] sm:$0xff]
    %v1319 = vunpack.c.l.s8.bf16 %v1255
    %v1320 = vunpack.c.l.s8.bf16 %v1256
    %v1321 = vunpack.c.l.s8.bf16 %v1257
    %v1322 = vunpack.c.l.s8.bf16 %v1258
    %v1323 = vunpack.c.h.s8.bf16 %v1255
    %v1324 = vunpack.c.h.s8.bf16 %v1256
    %v1325 = vunpack.c.h.s8.bf16 %v1257
    %v1326 = vunpack.c.h.s8.bf16 %v1258
    %v1327 = vunpack.c.l.s8.bf16 %v1259
    %v1328 = vunpack.c.l.s8.bf16 %v1260
    %v1329 = vunpack.c.l.s8.bf16 %v1261
    %v1330 = vunpack.c.l.s8.bf16 %v1262
    %v1331 = vunpack.c.h.s8.bf16 %v1259
    %v1332 = vunpack.c.h.s8.bf16 %v1260
    %v1333 = vunpack.c.h.s8.bf16 %v1261
    %v1334 = vunpack.c.h.s8.bf16 %v1262
    %v1335 = vunpack.c.l.s8.bf16 %v1263
    %v1336 = vunpack.c.l.s8.bf16 %v1264
    %v1337 = vunpack.c.l.s8.bf16 %v1265
    %v1338 = vunpack.c.l.s8.bf16 %v1266
    %v1339 = vunpack.c.h.s8.bf16 %v1263
    %v1340 = vunpack.c.h.s8.bf16 %v1264
    %v1341 = vunpack.c.h.s8.bf16 %v1265
    %v1342 = vunpack.c.h.s8.bf16 %v1266
    %v1343 = vunpack.c.l.s8.bf16 %v1267
    %v1344 = vunpack.c.l.s8.bf16 %v1268
    %v1345 = vunpack.c.l.s8.bf16 %v1269
    %v1346 = vunpack.c.l.s8.bf16 %v1270
    %v1347 = vunpack.c.h.s8.bf16 %v1267
    %v1348 = vunpack.c.h.s8.bf16 %v1268
    %v1349 = vunpack.c.h.s8.bf16 %v1269
    %v1350 = vunpack.c.h.s8.bf16 %v1270
    %v1351 = vunpack.c.l.s8.bf16 %v1271
    %v1352 = vunpack.c.l.s8.bf16 %v1272
    %v1353 = vunpack.c.l.s8.bf16 %v1273
    %v1354 = vunpack.c.l.s8.bf16 %v1274
    %v1355 = vunpack.c.h.s8.bf16 %v1271
    %v1356 = vunpack.c.h.s8.bf16 %v1272
    %v1357 = vunpack.c.h.s8.bf16 %v1273
    %v1358 = vunpack.c.h.s8.bf16 %v1274
    %v1359 = vunpack.c.l.s8.bf16 %v1275
    %v1360 = vunpack.c.l.s8.bf16 %v1276
    %v1361 = vunpack.c.l.s8.bf16 %v1277
    %v1362 = vunpack.c.l.s8.bf16 %v1278
    %v1363 = vunpack.c.h.s8.bf16 %v1275
    %v1364 = vunpack.c.h.s8.bf16 %v1276
    %v1365 = vunpack.c.h.s8.bf16 %v1277
    %v1366 = vunpack.c.h.s8.bf16 %v1278
    %v1367 = vunpack.c.l.s8.bf16 %v1279
    %v1368 = vunpack.c.l.s8.bf16 %v1280
    %v1369 = vunpack.c.l.s8.bf16 %v1281
    %v1370 = vunpack.c.l.s8.bf16 %v1282
    %v1371 = vunpack.c.h.s8.bf16 %v1279
    %v1372 = vunpack.c.h.s8.bf16 %v1280
    %v1373 = vunpack.c.h.s8.bf16 %v1281
    %v1374 = vunpack.c.h.s8.bf16 %v1282
    %v1375 = vunpack.c.l.s8.bf16 %v1283
    %v1376 = vunpack.c.l.s8.bf16 %v1284
    %v1377 = vunpack.c.l.s8.bf16 %v1285
    %v1378 = vunpack.c.l.s8.bf16 %v1286
    %v1379 = vunpack.c.h.s8.bf16 %v1283
    %v1380 = vunpack.c.h.s8.bf16 %v1284
    %v1381 = vunpack.c.h.s8.bf16 %v1285
    %v1382 = vunpack.c.h.s8.bf16 %v1286
    %v1383 = vunpack.c.l.s8.bf16 %v1287
    %v1384 = vunpack.c.l.s8.bf16 %v1288
    %v1385 = vunpack.c.l.s8.bf16 %v1289
    %v1386 = vunpack.c.l.s8.bf16 %v1290
    %v1387 = vunpack.c.h.s8.bf16 %v1287
    %v1388 = vunpack.c.h.s8.bf16 %v1288
    %v1389 = vunpack.c.h.s8.bf16 %v1289
    %v1390 = vunpack.c.h.s8.bf16 %v1290
    %v1391 = vunpack.c.l.s8.bf16 %v1291
    %v1392 = vunpack.c.l.s8.bf16 %v1292
    %v1393 = vunpack.c.l.s8.bf16 %v1293
    %v1394 = vunpack.c.l.s8.bf16 %v1294
    %v1395 = vunpack.c.h.s8.bf16 %v1291
    %v1396 = vunpack.c.h.s8.bf16 %v1292
    %v1397 = vunpack.c.h.s8.bf16 %v1293
    %v1398 = vunpack.c.h.s8.bf16 %v1294
    %v1399 = vunpack.c.l.s8.bf16 %v1295
    %v1400 = vunpack.c.l.s8.bf16 %v1296
    %v1401 = vunpack.c.l.s8.bf16 %v1297
    %v1402 = vunpack.c.l.s8.bf16 %v1298
    %v1403 = vunpack.c.h.s8.bf16 %v1295
    %v1404 = vunpack.c.h.s8.bf16 %v1296
    %v1405 = vunpack.c.h.s8.bf16 %v1297
    %v1406 = vunpack.c.h.s8.bf16 %v1298
    %v1407 = vunpack.c.l.s8.bf16 %v1299
    %v1408 = vunpack.c.l.s8.bf16 %v1300
    %v1409 = vunpack.c.l.s8.bf16 %v1301
    %v1410 = vunpack.c.l.s8.bf16 %v1302
    %v1411 = vunpack.c.h.s8.bf16 %v1299
    %v1412 = vunpack.c.h.s8.bf16 %v1300
    %v1413 = vunpack.c.h.s8.bf16 %v1301
    %v1414 = vunpack.c.h.s8.bf16 %v1302
    %v1415 = vunpack.c.l.s8.bf16 %v1303
    %v1416 = vunpack.c.l.s8.bf16 %v1304
    %v1417 = vunpack.c.l.s8.bf16 %v1305
    %v1418 = vunpack.c.l.s8.bf16 %v1306
    %v1419 = vunpack.c.h.s8.bf16 %v1303
    %v1420 = vunpack.c.h.s8.bf16 %v1304
    %v1421 = vunpack.c.h.s8.bf16 %v1305
    %v1422 = vunpack.c.h.s8.bf16 %v1306
    %v1423 = vunpack.c.l.s8.bf16 %v1307
    %v1424 = vunpack.c.l.s8.bf16 %v1308
    %v1425 = vunpack.c.l.s8.bf16 %v1309
    %v1426 = vunpack.c.l.s8.bf16 %v1310
    %v1427 = vunpack.c.h.s8.bf16 %v1307
    %v1428 = vunpack.c.h.s8.bf16 %v1308
    %v1429 = vunpack.c.h.s8.bf16 %v1309
    %v1430 = vunpack.c.h.s8.bf16 %v1310
    %v1431 = vunpack.c.l.s8.bf16 %v1311
    %v1432 = vunpack.c.l.s8.bf16 %v1312
    %v1433 = vunpack.c.l.s8.bf16 %v1313
    %v1434 = vunpack.c.l.s8.bf16 %v1314
    %v1435 = vunpack.c.h.s8.bf16 %v1311
    %v1436 = vunpack.c.h.s8.bf16 %v1312
    %v1437 = vunpack.c.h.s8.bf16 %v1313
    %v1438 = vunpack.c.h.s8.bf16 %v1314
    %v1439 = vunpack.c.l.s8.bf16 %v1315
    %v1440 = vunpack.c.l.s8.bf16 %v1316
    %v1441 = vunpack.c.l.s8.bf16 %v1317
    %v1442 = vunpack.c.l.s8.bf16 %v1318
    %v1443 = vunpack.c.h.s8.bf16 %v1315
    %v1444 = vunpack.c.h.s8.bf16 %v1316
    %v1445 = vunpack.c.h.s8.bf16 %v1317
    %v1446 = vunpack.c.h.s8.bf16 %v1318
    %1447 = vmatprep.subr.bf16.mxu0 %v1348
    %1448 = vmatpush1.bf16.msra.mxu0 %v1347
    %1449 = vmatprep.subr.bf16.mxu0 %v1344
    %1450 = vmatpush1.bf16.msra.mxu0 %v1343
    %1451 = vmatprep.subr.bf16.mxu0 %v1340
    %1452 = vmatpush1.bf16.msra.mxu0 %v1339
    %1453 = vmatprep.subr.bf16.mxu0 %v1336
    %1454 = vmatpush1.bf16.msra.mxu0 %v1335
    %1455 = vmatprep.subr.bf16.mxu0 %v1332
    %1456 = vmatpush1.bf16.msra.mxu0 %v1331
    %1457 = vmatprep.subr.bf16.mxu0 %v1328
    %1458 = vmatpush1.bf16.msra.mxu0 %v1327
    %1459 = vmatprep.subr.bf16.mxu0 %v1324
    %1460 = vmatpush1.bf16.msra.mxu0 %v1323
    %1461 = vmatprep.subr.bf16.mxu0 %v1320
    %1462 = vmatpush1.bf16.msra.mxu0 %v1319
    %1463 = vmatprep.subr.bf16.mxu0 %v1380
    %1464 = vmatpush2.bf16.msra.mxu0 %v1379
    %1465 = vmatprep.subr.bf16.mxu0 %v1376
    %1466 = vmatpush2.bf16.msra.mxu0 %v1375
    %1467 = vmatprep.subr.bf16.mxu0 %v1372
    %1468 = vmatpush2.bf16.msra.mxu0 %v1371
    %1469 = vmatprep.subr.bf16.mxu0 %v1368
    %1470 = vmatpush2.bf16.msra.mxu0 %v1367
    %1471 = vmatprep.subr.bf16.mxu0 %v1364
    %1472 = vmatpush2.bf16.msra.mxu0 %v1363
    %1473 = vmatprep.subr.bf16.mxu0 %v1360
    %1474 = vmatpush2.bf16.msra.mxu0 %v1359
    %1475 = vmatprep.subr.bf16.mxu0 %v1356
    %1476 = vmatpush2.bf16.msra.mxu0 %v1355
    %1477 = vmatprep.subr.bf16.mxu0 %v1352
    %1478 = vmatpush2.bf16.msra.mxu0 %v1351
    %1479 = vmatprep.mubr.bf16.mxu0 %v1252
    %1480 = vmatmul.mubr.bf16.gmra.mxu0 %v1251
    %v1481 = vpop.f32.mrf.mxu0
    %v1482 = vadd.f32 0.0, %v1481
    %v1483 = vpop.f32.mrf.mxu0
    %v1484 = vadd.f32 0.0, %v1483
    %v1485 = vpop.f32.mrf.mxu0
    %v1486 = vpop.f32.mrf.mxu0
    %1487 = vdwg.mxu0
    %1488 = vmatprep.subr.bf16.mxu0 %v1412
    %1489 = vmatpush1.bf16.msra.mxu0 %v1411
    %1490 = vmatprep.subr.bf16.mxu0 %v1408
    %1491 = vmatpush1.bf16.msra.mxu0 %v1407
    %1492 = vmatprep.subr.bf16.mxu0 %v1404
    %1493 = vmatpush1.bf16.msra.mxu0 %v1403
    %1494 = vmatprep.subr.bf16.mxu0 %v1400
    %1495 = vmatpush1.bf16.msra.mxu0 %v1399
    %1496 = vmatprep.subr.bf16.mxu0 %v1396
    %1497 = vmatpush1.bf16.msra.mxu0 %v1395
    %1498 = vmatprep.subr.bf16.mxu0 %v1392
    %1499 = vmatpush1.bf16.msra.mxu0 %v1391
    %1500 = vmatprep.subr.bf16.mxu0 %v1388
    %1501 = vmatpush1.bf16.msra.mxu0 %v1387
    %1502 = vmatprep.subr.bf16.mxu0 %v1384
    %1503 = vmatpush1.bf16.msra.mxu0 %v1383
    %1504 = vmatprep.subr.bf16.mxu0 %v1444
    %1505 = vmatpush2.bf16.msra.mxu0 %v1443
    %1506 = vmatprep.subr.bf16.mxu0 %v1440
    %1507 = vmatpush2.bf16.msra.mxu0 %v1439
    %1508 = vmatprep.subr.bf16.mxu0 %v1436
    %1509 = vmatpush2.bf16.msra.mxu0 %v1435
    %1510 = vmatprep.subr.bf16.mxu0 %v1432
    %1511 = vmatpush2.bf16.msra.mxu0 %v1431
    %1512 = vmatprep.subr.bf16.mxu0 %v1428
    %1513 = vmatpush2.bf16.msra.mxu0 %v1427
    %1514 = vmatprep.subr.bf16.mxu0 %v1424
    %1515 = vmatpush2.bf16.msra.mxu0 %v1423
    %1516 = vmatprep.subr.bf16.mxu0 %v1420
    %1517 = vmatpush2.bf16.msra.mxu0 %v1419
    %1518 = vmatprep.subr.bf16.mxu0 %v1416
    %1519 = vmatpush2.bf16.msra.mxu0 %v1415
    %1520 = vmatprep.mubr.bf16.mxu0 %v1254
    %1521 = vmatmul.mubr.bf16.gmra.mxu0 %v1253
    %v1522 = vpop.f32.mrf.mxu0
    %v1523 = vadd.f32 %v1482, %v1522
    %v1524 = vpop.f32.mrf.mxu0
    %v1525 = vadd.f32 %v1484, %v1524
    %v1526 = vpop.f32.mrf.mxu0
    %v1527 = vpop.f32.mrf.mxu0
    %1528 = vdwg.mxu0
    %1529 = vmatprep.subr.bf16.mxu0 %v1350
    %1530 = vmatpush1.bf16.msra.mxu0 %v1349
    %1531 = vmatprep.subr.bf16.mxu0 %v1346
    %1532 = vmatpush1.bf16.msra.mxu0 %v1345
    %1533 = vmatprep.subr.bf16.mxu0 %v1342
    %1534 = vmatpush1.bf16.msra.mxu0 %v1341
    %1535 = vmatprep.subr.bf16.mxu0 %v1338
    %1536 = vmatpush1.bf16.msra.mxu0 %v1337
    %1537 = vmatprep.subr.bf16.mxu0 %v1334
    %1538 = vmatpush1.bf16.msra.mxu0 %v1333
    %1539 = vmatprep.subr.bf16.mxu0 %v1330
    %1540 = vmatpush1.bf16.msra.mxu0 %v1329
    %1541 = vmatprep.subr.bf16.mxu0 %v1326
    %1542 = vmatpush1.bf16.msra.mxu0 %v1325
    %1543 = vmatprep.subr.bf16.mxu0 %v1322
    %1544 = vmatpush1.bf16.msra.mxu0 %v1321
    %1545 = vmatprep.subr.bf16.mxu0 %v1382
    %1546 = vmatpush2.bf16.msra.mxu0 %v1381
    %1547 = vmatprep.subr.bf16.mxu0 %v1378
    %1548 = vmatpush2.bf16.msra.mxu0 %v1377
    %1549 = vmatprep.subr.bf16.mxu0 %v1374
    %1550 = vmatpush2.bf16.msra.mxu0 %v1373
    %1551 = vmatprep.subr.bf16.mxu0 %v1370
    %1552 = vmatpush2.bf16.msra.mxu0 %v1369
    %1553 = vmatprep.subr.bf16.mxu0 %v1366
    %1554 = vmatpush2.bf16.msra.mxu0 %v1365
    %1555 = vmatprep.subr.bf16.mxu0 %v1362
    %1556 = vmatpush2.bf16.msra.mxu0 %v1361
    %1557 = vmatprep.subr.bf16.mxu0 %v1358
    %1558 = vmatpush2.bf16.msra.mxu0 %v1357
    %1559 = vmatprep.subr.bf16.mxu0 %v1354
    %1560 = vmatpush2.bf16.msra.mxu0 %v1353
    %1561 = vmatprep.mubr.bf16.mxu0 %v1252
    %1562 = vmatmul.mubr.bf16.gmra.mxu0 %v1251
    %v1563 = vpop.f32.mrf.mxu0
    %v1564 = vadd.f32 0.0, %v1563
    %v1565 = vpop.f32.mrf.mxu0
    %v1566 = vadd.f32 0.0, %v1565
    %v1567 = vpop.f32.mrf.mxu0
    %v1568 = vpop.f32.mrf.mxu0
    %1569 = vdwg.mxu0
    %1570 = vmatprep.subr.bf16.mxu0 %v1414
    %1571 = vmatpush1.bf16.msra.mxu0 %v1413
    %1572 = vmatprep.subr.bf16.mxu0 %v1410
    %1573 = vmatpush1.bf16.msra.mxu0 %v1409
    %1574 = vmatprep.subr.bf16.mxu0 %v1406
    %1575 = vmatpush1.bf16.msra.mxu0 %v1405
    %1576 = vmatprep.subr.bf16.mxu0 %v1402
    %1577 = vmatpush1.bf16.msra.mxu0 %v1401
    %1578 = vmatprep.subr.bf16.mxu0 %v1398
    %1579 = vmatpush1.bf16.msra.mxu0 %v1397
    %1580 = vmatprep.subr.bf16.mxu0 %v1394
    %1581 = vmatpush1.bf16.msra.mxu0 %v1393
    %1582 = vmatprep.subr.bf16.mxu0 %v1390
    %1583 = vmatpush1.bf16.msra.mxu0 %v1389
    %1584 = vmatprep.subr.bf16.mxu0 %v1386
    %1585 = vmatpush1.bf16.msra.mxu0 %v1385
    %1586 = vmatprep.subr.bf16.mxu0 %v1446
    %1587 = vmatpush2.bf16.msra.mxu0 %v1445
    %1588 = vmatprep.subr.bf16.mxu0 %v1442
    %1589 = vmatpush2.bf16.msra.mxu0 %v1441
    %1590 = vmatprep.subr.bf16.mxu0 %v1438
    %1591 = vmatpush2.bf16.msra.mxu0 %v1437
    %1592 = vmatprep.subr.bf16.mxu0 %v1434
    %1593 = vmatpush2.bf16.msra.mxu0 %v1433
    %1594 = vmatprep.subr.bf16.mxu0 %v1430
    %1595 = vmatpush2.bf16.msra.mxu0 %v1429
    %1596 = vmatprep.subr.bf16.mxu0 %v1426
    %1597 = vmatpush2.bf16.msra.mxu0 %v1425
    %1598 = vmatprep.subr.bf16.mxu0 %v1422
    %1599 = vmatpush2.bf16.msra.mxu0 %v1421
    %1600 = vmatprep.subr.bf16.mxu0 %v1418
    %1601 = vmatpush2.bf16.msra.mxu0 %v1417
    %1602 = vmatprep.mubr.bf16.mxu0 %v1254
    %1603 = vmatmul.mubr.bf16.gmra.mxu0 %v1253
    %v1604 = vpop.f32.mrf.mxu0
    %v1605 = vadd.f32 %v1564, %v1604
    %v1606 = vpop.f32.mrf.mxu0
    %v1607 = vadd.f32 %v1566, %v1606
    %v1608 = vpop.f32.mrf.mxu0
    %v1609 = vpop.f32.mrf.mxu0
    %1610 = vdwg.mxu0
    %v1611 = vld [vmem:[#allocation12 + $0x22] sm:$0xf]
    %v1613 = vlaneseq
    %v1614 = vshrl.u32 %v1613, 7
    %v1615 = vsub.s32 0, %v1614
    %v1616 = vrot.slane %v1611, %v1615
    %v1617 = vlaneseq
    %v1618 = vshrl.u32 %v1617, 7
    %v1619 = vsub.s32 1, %v1618
    %v1620 = vrot.slane %v1611, %v1619
    %v1621 = vlaneseq
    %v1622 = vshrl.u32 %v1621, 7
    %v1623 = vsub.s32 2, %v1622
    %v1624 = vrot.slane %v1611, %v1623
    %v1625 = vlaneseq
    %v1626 = vshrl.u32 %v1625, 7
    %v1627 = vsub.s32 3, %v1626
    %v1628 = vrot.slane %v1611, %v1627
    %v1633 = vmul.f32 %v1523, %v1616
    %v1634 = vmul.f32 %v1525, %v1620
    %v1635 = vmul.f32 %v1605, %v1624
    %v1636 = vmul.f32 %v1607, %v1628
    %v1637 = vld [vmem:[#allocation12 + $0x1a] sm:$0xf]
    %v1638 = vld [vmem:[#allocation12 + $0x1e] sm:$0xf]
    %v1639 = vrot.slane %v1633, 4
    %v1640 = vadd.f32 %v1633, %v1639
    %v1641 = vrot.slane %v1640, 2
    %v1642 = vadd.f32 %v1640, %v1641
    %v1643 = vrot.slane %v1642, 1
    %v1644 = vadd.f32 %v1642, %v1643
    %v1645 = vrot.slane %v1634, 4
    %v1646 = vadd.f32 %v1634, %v1645
    %v1647 = vrot.slane %v1646, 2
    %v1648 = vadd.f32 %v1646, %v1647
    %v1649 = vrot.slane %v1648, 1
    %v1650 = vadd.f32 %v1648, %v1649
    %v1651 = vrot.slane %v1635, 4
    %v1652 = vadd.f32 %v1635, %v1651
    %v1653 = vrot.slane %v1652, 2
    %v1654 = vadd.f32 %v1652, %v1653
    %v1655 = vrot.slane %v1654, 1
    %v1656 = vadd.f32 %v1654, %v1655
    %v1657 = vrot.slane %v1636, 4
    %v1658 = vadd.f32 %v1636, %v1657
    %v1659 = vrot.slane %v1658, 2
    %v1660 = vadd.f32 %v1658, %v1659
    %v1661 = vrot.slane %v1660, 1
    %v1662 = vadd.f32 %v1660, %v1661
    %v1663 = vmul.f32 %v1633, %v1633
    %v1664 = vmul.f32 %v1634, %v1634
    %v1665 = vmul.f32 %v1635, %v1635
    %v1666 = vmul.f32 %v1636, %v1636
    %v1667 = vrot.slane %v1663, 4
    %v1668 = vadd.f32 %v1663, %v1667
    %v1669 = vrot.slane %v1668, 2
    %v1670 = vadd.f32 %v1668, %v1669
    %v1671 = vrot.slane %v1670, 1
    %v1672 = vadd.f32 %v1670, %v1671
    %v1673 = vrot.slane %v1664, 4
    %v1674 = vadd.f32 %v1664, %v1673
    %v1675 = vrot.slane %v1674, 2
    %v1676 = vadd.f32 %v1674, %v1675
    %v1677 = vrot.slane %v1676, 1
    %v1678 = vadd.f32 %v1676, %v1677
    %v1679 = vrot.slane %v1665, 4
    %v1680 = vadd.f32 %v1665, %v1679
    %v1681 = vrot.slane %v1680, 2
    %v1682 = vadd.f32 %v1680, %v1681
    %v1683 = vrot.slane %v1682, 1
    %v1684 = vadd.f32 %v1682, %v1683
    %v1685 = vrot.slane %v1666, 4
    %v1686 = vadd.f32 %v1666, %v1685
    %v1687 = vrot.slane %v1686, 2
    %v1688 = vadd.f32 %v1686, %v1687
    %v1689 = vrot.slane %v1688, 1
    %v1690 = vadd.f32 %v1688, %v1689
    %v1691 = vmul.f32 %v1644, 0.125
    %v1692 = vmul.f32 %v1650, 0.125
    %v1693 = vmul.f32 %v1656, 0.125
    %v1694 = vmul.f32 %v1662, 0.125
    %v1695 = vmul.f32 %v1672, 0.125
    %v1696 = vmul.f32 %v1678, 0.125
    %v1697 = vmul.f32 %v1684, 0.125
    %v1698 = vmul.f32 %v1690, 0.125
    %v1699 = vmul.f32 %v1691, %v1691
    %v1700 = vmul.f32 %v1692, %v1692
    %v1701 = vmul.f32 %v1693, %v1693
    %v1702 = vmul.f32 %v1694, %v1694
    %v1703 = vsub.f32 %v1695, %v1699
    %v1704 = vsub.f32 %v1696, %v1700
    %v1705 = vsub.f32 %v1697, %v1701
    %v1706 = vsub.f32 %v1698, %v1702
    %v1707 = vmax.f32 %v1703, 0.0
    %v1708 = vmax.f32 %v1704, 0.0
    %v1709 = vmax.f32 %v1705, 0.0
    %v1710 = vmax.f32 %v1706, 0.0
    %v1711 = vadd.f32 %v1707, 0.8
    %v1712 = vadd.f32 %v1708, 0.8
    %v1713 = vadd.f32 %v1709, 0.8
    %v1714 = vadd.f32 %v1710, 0.8
    %v1715 = vrsqrt.pop %v1711
    %v1716 = vrsqrt.pop %v1712
    %v1717 = vrsqrt.pop %v1713
    %v1718 = vrsqrt.pop %v1714
    %v1723 = vcombine.low %v1715, %v1716
    %v1724 = vcombine.low %v1717, %v1718
    %v1726 = vunpack.c.l.s4 1966171168
    %v1727 = vunpack.c.0.s8 %v1726
    %v1728 = vlaneseq
    %v1729 = vshrl.u32 %v1728, 7
    %v1730 = vsub.s32 %v1727, %v1729
    %v1731 = vrot.slane %v1723, %v1730
    %v1733 = vunpack.c.l.s4 1966171168
    %v1734 = vunpack.c.0.s8 %v1733
    %v1735 = vlaneseq
    %v1736 = vshrl.u32 %v1735, 7
    %v1737 = vsub.s32 %v1734, %v1736
    %v1738 = vrot.slane %v1724, %v1737
    %v1739 = vcombine.low %v1731, %v1738
    %v1741 = vunpack.c.l.s4 1966171168
    %v1742 = vunpack.c.0.s8 %v1741
    %v1743 = vlaneseq
    %v1744 = vshrl.u32 %v1743, 7
    %v1745 = vsub.s32 %v1742, %v1744
    %v1746 = vrot.slane %v1739, %v1745
    %v1748 = vmul.f32 %v1637, %v1746
    %v1750 = vlaneseq
    %v1751 = vshrl.u32 %v1750, 7
    %v1752 = vsub.s32 0, %v1751
    %v1753 = vrot.slane %v1748, %v1752
    %v1754 = vlaneseq
    %v1755 = vshrl.u32 %v1754, 7
    %v1756 = vsub.s32 1, %v1755
    %v1757 = vrot.slane %v1748, %v1756
    %v1758 = vlaneseq
    %v1759 = vshrl.u32 %v1758, 7
    %v1760 = vsub.s32 2, %v1759
    %v1761 = vrot.slane %v1748, %v1760
    %v1762 = vlaneseq
    %v1763 = vshrl.u32 %v1762, 7
    %v1764 = vsub.s32 3, %v1763
    %v1765 = vrot.slane %v1748, %v1764
    %v1770 = vmul.f32 %v1691, %v1753
    %v1771 = vmul.f32 %v1692, %v1757
    %v1772 = vmul.f32 %v1693, %v1761
    %v1773 = vmul.f32 %v1694, %v1765
    %v1778 = vcombine.low %v1770, %v1771
    %v1779 = vcombine.low %v1772, %v1773
    %v1781 = vunpack.c.l.s4 1966171168
    %v1782 = vunpack.c.0.s8 %v1781
    %v1783 = vlaneseq
    %v1784 = vshrl.u32 %v1783, 7
    %v1785 = vsub.s32 %v1782, %v1784
    %v1786 = vrot.slane %v1778, %v1785
    %v1788 = vunpack.c.l.s4 1966171168
    %v1789 = vunpack.c.0.s8 %v1788
    %v1790 = vlaneseq
    %v1791 = vshrl.u32 %v1790, 7
    %v1792 = vsub.s32 %v1789, %v1791
    %v1793 = vrot.slane %v1779, %v1792
    %v1794 = vcombine.low %v1786, %v1793
    %v1796 = vunpack.c.l.s4 1966171168
    %v1797 = vunpack.c.0.s8 %v1796
    %v1798 = vlaneseq
    %v1799 = vshrl.u32 %v1798, 7
    %v1800 = vsub.s32 %v1797, %v1799
    %v1801 = vrot.slane %v1794, %v1800
    %v1803 = vsub.f32 %v1638, %v1801
    %v1804 = vmul.f32 %v1633, %v1753
    %v1805 = vmul.f32 %v1634, %v1757
    %v1806 = vmul.f32 %v1635, %v1761
    %v1807 = vmul.f32 %v1636, %v1765
    %v1809 = vlaneseq
    %v1810 = vshrl.u32 %v1809, 7
    %v1811 = vsub.s32 0, %v1810
    %v1812 = vrot.slane %v1803, %v1811
    %v1813 = vlaneseq
    %v1814 = vshrl.u32 %v1813, 7
    %v1815 = vsub.s32 1, %v1814
    %v1816 = vrot.slane %v1803, %v1815
    %v1817 = vlaneseq
    %v1818 = vshrl.u32 %v1817, 7
    %v1819 = vsub.s32 2, %v1818
    %v1820 = vrot.slane %v1803, %v1819
    %v1821 = vlaneseq
    %v1822 = vshrl.u32 %v1821, 7
    %v1823 = vsub.s32 3, %v1822
    %v1824 = vrot.slane %v1803, %v1823
    %v1829 = vadd.f32 %v1804, %v1812
    %v1830 = vadd.f32 %v1805, %v1816
    %v1831 = vadd.f32 %v1806, %v1820
    %v1832 = vadd.f32 %v1807, %v1824
    %vm1833 = vcmp.gt.f32.partialorder %v1829, 0.0
    %vm1834 = vcmp.gt.f32.partialorder %v1830, 0.0
    %vm1835 = vcmp.gt.f32.partialorder %v1831, 0.0
    %vm1836 = vcmp.gt.f32.partialorder %v1832, 0.0
    %v1837 = vmul.f32 %v1829, 0.2
    %v1838 = vmul.f32 %v1830, 0.2
    %v1839 = vmul.f32 %v1831, 0.2
    %v1840 = vmul.f32 %v1832, 0.2
    %v1841 = vsel %vm1833, %v1829, %v1837
    %v1842 = vsel %vm1834, %v1830, %v1838
    %v1843 = vsel %vm1835, %v1831, %v1839
    %v1844 = vsel %vm1836, %v1832, %v1840
    %v1845 = vpack.c.bf16 %v1841, %v1841
    %v1846 = vpack.c.bf16 %v1842, %v1842
    %v1847 = vpack.c.bf16 %v1843, %v1843
    %v1848 = vpack.c.bf16 %v1844, %v1844
    %v1849 = vld [vmem:[#allocation9] sm:$0xff]
    %v1850 = vld [vmem:[#allocation9 + $0x8] sm:$0xff]
    %v1851 = vld [vmem:[#allocation9 + $0x10] sm:$0xff]
    %v1852 = vld [vmem:[#allocation9 + $0x18] sm:$0xff]
    %v1853 = vld [vmem:[#allocation9 + $0x20] sm:$0xff]
    %v1854 = vld [vmem:[#allocation9 + $0x28] sm:$0xff]
    %v1855 = vld [vmem:[#allocation9 + $0x30] sm:$0xff]
    %v1856 = vld [vmem:[#allocation9 + $0x38] sm:$0xff]
    %v1857 = vld [vmem:[#allocation9 + $0x40] sm:$0xff]
    %v1858 = vld [vmem:[#allocation9 + $0x48] sm:$0xff]
    %v1859 = vld [vmem:[#allocation9 + $0x50] sm:$0xff]
    %v1860 = vld [vmem:[#allocation9 + $0x58] sm:$0xff]
    %v1861 = vld [vmem:[#allocation9 + $0x60] sm:$0xff]
    %v1862 = vld [vmem:[#allocation9 + $0x68] sm:$0xff]
    %v1863 = vld [vmem:[#allocation9 + $0x70] sm:$0xff]
    %v1864 = vld [vmem:[#allocation9 + $0x78] sm:$0xff]
    %v1865 = vld [vmem:[#allocation9 + $0x80] sm:$0xff]
    %v1866 = vld [vmem:[#allocation9 + $0x88] sm:$0xff]
    %v1867 = vld [vmem:[#allocation9 + $0x90] sm:$0xff]
    %v1868 = vld [vmem:[#allocation9 + $0x98] sm:$0xff]
    %v1869 = vld [vmem:[#allocation9 + $0xa0] sm:$0xff]
    %v1870 = vld [vmem:[#allocation9 + $0xa8] sm:$0xff]
    %v1871 = vld [vmem:[#allocation9 + $0xb0] sm:$0xff]
    %v1872 = vld [vmem:[#allocation9 + $0xb8] sm:$0xff]
    %v1873 = vld [vmem:[#allocation9 + $0xc0] sm:$0xff]
    %v1874 = vld [vmem:[#allocation9 + $0xc8] sm:$0xff]
    %v1875 = vld [vmem:[#allocation9 + $0xd0] sm:$0xff]
    %v1876 = vld [vmem:[#allocation9 + $0xd8] sm:$0xff]
    %v1877 = vld [vmem:[#allocation9 + $0xe0] sm:$0xff]
    %v1878 = vld [vmem:[#allocation9 + $0xe8] sm:$0xff]
    %v1879 = vld [vmem:[#allocation9 + $0xf0] sm:$0xff]
    %v1880 = vld [vmem:[#allocation9 + $0xf8] sm:$0xff]
    %v1881 = vld [vmem:[#allocation9 + $0x100] sm:$0xff]
    %v1882 = vld [vmem:[#allocation9 + $0x108] sm:$0xff]
    %v1883 = vld [vmem:[#allocation9 + $0x110] sm:$0xff]
    %v1884 = vld [vmem:[#allocation9 + $0x118] sm:$0xff]
    %v1885 = vld [vmem:[#allocation9 + $0x120] sm:$0xff]
    %v1886 = vld [vmem:[#allocation9 + $0x128] sm:$0xff]
    %v1887 = vld [vmem:[#allocation9 + $0x130] sm:$0xff]
    %v1888 = vld [vmem:[#allocation9 + $0x138] sm:$0xff]
    %v1889 = vld [vmem:[#allocation9 + $0x140] sm:$0xff]
    %v1890 = vld [vmem:[#allocation9 + $0x148] sm:$0xff]
    %v1891 = vld [vmem:[#allocation9 + $0x150] sm:$0xff]
    %v1892 = vld [vmem:[#allocation9 + $0x158] sm:$0xff]
    %v1893 = vld [vmem:[#allocation9 + $0x160] sm:$0xff]
    %v1894 = vld [vmem:[#allocation9 + $0x168] sm:$0xff]
    %v1895 = vld [vmem:[#allocation9 + $0x170] sm:$0xff]
    %v1896 = vld [vmem:[#allocation9 + $0x178] sm:$0xff]
    %v1897 = vld [vmem:[#allocation9 + $0x180] sm:$0xff]
    %v1898 = vld [vmem:[#allocation9 + $0x188] sm:$0xff]
    %v1899 = vld [vmem:[#allocation9 + $0x190] sm:$0xff]
    %v1900 = vld [vmem:[#allocation9 + $0x198] sm:$0xff]
    %v1901 = vld [vmem:[#allocation9 + $0x1a0] sm:$0xff]
    %v1902 = vld [vmem:[#allocation9 + $0x1a8] sm:$0xff]
    %v1903 = vld [vmem:[#allocation9 + $0x1b0] sm:$0xff]
    %v1904 = vld [vmem:[#allocation9 + $0x1b8] sm:$0xff]
    %v1905 = vld [vmem:[#allocation9 + $0x1c0] sm:$0xff]
    %v1906 = vld [vmem:[#allocation9 + $0x1c8] sm:$0xff]
    %v1907 = vld [vmem:[#allocation9 + $0x1d0] sm:$0xff]
    %v1908 = vld [vmem:[#allocation9 + $0x1d8] sm:$0xff]
    %v1909 = vld [vmem:[#allocation9 + $0x1e0] sm:$0xff]
    %v1910 = vld [vmem:[#allocation9 + $0x1e8] sm:$0xff]
    %v1911 = vld [vmem:[#allocation9 + $0x1f0] sm:$0xff]
    %v1912 = vld [vmem:[#allocation9 + $0x1f8] sm:$0xff]
    %v1913 = vld [vmem:[#allocation9 + $0x200] sm:$0xff]
    %v1914 = vld [vmem:[#allocation9 + $0x208] sm:$0xff]
    %v1915 = vld [vmem:[#allocation9 + $0x210] sm:$0xff]
    %v1916 = vld [vmem:[#allocation9 + $0x218] sm:$0xff]
    %v1917 = vld [vmem:[#allocation9 + $0x220] sm:$0xff]
    %v1918 = vld [vmem:[#allocation9 + $0x228] sm:$0xff]
    %v1919 = vld [vmem:[#allocation9 + $0x230] sm:$0xff]
    %v1920 = vld [vmem:[#allocation9 + $0x238] sm:$0xff]
    %v1921 = vld [vmem:[#allocation9 + $0x240] sm:$0xff]
    %v1922 = vld [vmem:[#allocation9 + $0x248] sm:$0xff]
    %v1923 = vld [vmem:[#allocation9 + $0x250] sm:$0xff]
    %v1924 = vld [vmem:[#allocation9 + $0x258] sm:$0xff]
    %v1925 = vld [vmem:[#allocation9 + $0x260] sm:$0xff]
    %v1926 = vld [vmem:[#allocation9 + $0x268] sm:$0xff]
    %v1927 = vld [vmem:[#allocation9 + $0x270] sm:$0xff]
    %v1928 = vld [vmem:[#allocation9 + $0x278] sm:$0xff]
    %v1929 = vld [vmem:[#allocation9 + $0x280] sm:$0xff]
    %v1930 = vld [vmem:[#allocation9 + $0x288] sm:$0xff]
    %v1931 = vld [vmem:[#allocation9 + $0x290] sm:$0xff]
    %v1932 = vld [vmem:[#allocation9 + $0x298] sm:$0xff]
    %v1933 = vld [vmem:[#allocation9 + $0x2a0] sm:$0xff]
    %v1934 = vld [vmem:[#allocation9 + $0x2a8] sm:$0xff]
    %v1935 = vld [vmem:[#allocation9 + $0x2b0] sm:$0xff]
    %v1936 = vld [vmem:[#allocation9 + $0x2b8] sm:$0xff]
    %v1937 = vld [vmem:[#allocation9 + $0x2c0] sm:$0xff]
    %v1938 = vld [vmem:[#allocation9 + $0x2c8] sm:$0xff]
    %v1939 = vld [vmem:[#allocation9 + $0x2d0] sm:$0xff]
    %v1940 = vld [vmem:[#allocation9 + $0x2d8] sm:$0xff]
    %v1941 = vld [vmem:[#allocation9 + $0x2e0] sm:$0xff]
    %v1942 = vld [vmem:[#allocation9 + $0x2e8] sm:$0xff]
    %v1943 = vld [vmem:[#allocation9 + $0x2f0] sm:$0xff]
    %v1944 = vld [vmem:[#allocation9 + $0x2f8] sm:$0xff]
    %v1945 = vld [vmem:[#allocation9 + $0x300] sm:$0xff]
    %v1946 = vld [vmem:[#allocation9 + $0x308] sm:$0xff]
    %v1947 = vld [vmem:[#allocation9 + $0x310] sm:$0xff]
    %v1948 = vld [vmem:[#allocation9 + $0x318] sm:$0xff]
    %v1949 = vld [vmem:[#allocation9 + $0x320] sm:$0xff]
    %v1950 = vld [vmem:[#allocation9 + $0x328] sm:$0xff]
    %v1951 = vld [vmem:[#allocation9 + $0x330] sm:$0xff]
    %v1952 = vld [vmem:[#allocation9 + $0x338] sm:$0xff]
    %v1953 = vld [vmem:[#allocation9 + $0x340] sm:$0xff]
    %v1954 = vld [vmem:[#allocation9 + $0x348] sm:$0xff]
    %v1955 = vld [vmem:[#allocation9 + $0x350] sm:$0xff]
    %v1956 = vld [vmem:[#allocation9 + $0x358] sm:$0xff]
    %v1957 = vld [vmem:[#allocation9 + $0x360] sm:$0xff]
    %v1958 = vld [vmem:[#allocation9 + $0x368] sm:$0xff]
    %v1959 = vld [vmem:[#allocation9 + $0x370] sm:$0xff]
    %v1960 = vld [vmem:[#allocation9 + $0x378] sm:$0xff]
    %v1961 = vld [vmem:[#allocation9 + $0x380] sm:$0xff]
    %v1962 = vld [vmem:[#allocation9 + $0x388] sm:$0xff]
    %v1963 = vld [vmem:[#allocation9 + $0x390] sm:$0xff]
    %v1964 = vld [vmem:[#allocation9 + $0x398] sm:$0xff]
    %v1965 = vld [vmem:[#allocation9 + $0x3a0] sm:$0xff]
    %v1966 = vld [vmem:[#allocation9 + $0x3a8] sm:$0xff]
    %v1967 = vld [vmem:[#allocation9 + $0x3b0] sm:$0xff]
    %v1968 = vld [vmem:[#allocation9 + $0x3b8] sm:$0xff]
    %v1969 = vld [vmem:[#allocation9 + $0x3c0] sm:$0xff]
    %v1970 = vld [vmem:[#allocation9 + $0x3c8] sm:$0xff]
    %v1971 = vld [vmem:[#allocation9 + $0x3d0] sm:$0xff]
    %v1972 = vld [vmem:[#allocation9 + $0x3d8] sm:$0xff]
    %v1973 = vld [vmem:[#allocation9 + $0x3e0] sm:$0xff]
    %v1974 = vld [vmem:[#allocation9 + $0x3e8] sm:$0xff]
    %v1975 = vld [vmem:[#allocation9 + $0x3f0] sm:$0xff]
    %v1976 = vld [vmem:[#allocation9 + $0x3f8] sm:$0xff]
    %v1977 = vunpack.c.l.s8.bf16 %v1849
    %v1978 = vunpack.c.l.s8.bf16 %v1850
    %v1979 = vunpack.c.l.s8.bf16 %v1851
    %v1980 = vunpack.c.l.s8.bf16 %v1852
    %v1981 = vunpack.c.l.s8.bf16 %v1853
    %v1982 = vunpack.c.l.s8.bf16 %v1854
    %v1983 = vunpack.c.l.s8.bf16 %v1855
    %v1984 = vunpack.c.l.s8.bf16 %v1856
    %v1985 = vunpack.c.h.s8.bf16 %v1849
    %v1986 = vunpack.c.h.s8.bf16 %v1850
    %v1987 = vunpack.c.h.s8.bf16 %v1851
    %v1988 = vunpack.c.h.s8.bf16 %v1852
    %v1989 = vunpack.c.h.s8.bf16 %v1853
    %v1990 = vunpack.c.h.s8.bf16 %v1854
    %v1991 = vunpack.c.h.s8.bf16 %v1855
    %v1992 = vunpack.c.h.s8.bf16 %v1856
    %v1993 = vunpack.c.l.s8.bf16 %v1857
    %v1994 = vunpack.c.l.s8.bf16 %v1858
    %v1995 = vunpack.c.l.s8.bf16 %v1859
    %v1996 = vunpack.c.l.s8.bf16 %v1860
    %v1997 = vunpack.c.l.s8.bf16 %v1861
    %v1998 = vunpack.c.l.s8.bf16 %v1862
    %v1999 = vunpack.c.l.s8.bf16 %v1863
    %v2000 = vunpack.c.l.s8.bf16 %v1864
    %v2001 = vunpack.c.h.s8.bf16 %v1857
    %v2002 = vunpack.c.h.s8.bf16 %v1858
    %v2003 = vunpack.c.h.s8.bf16 %v1859
    %v2004 = vunpack.c.h.s8.bf16 %v1860
    %v2005 = vunpack.c.h.s8.bf16 %v1861
    %v2006 = vunpack.c.h.s8.bf16 %v1862
    %v2007 = vunpack.c.h.s8.bf16 %v1863
    %v2008 = vunpack.c.h.s8.bf16 %v1864
    %v2009 = vunpack.c.l.s8.bf16 %v1865
    %v2010 = vunpack.c.l.s8.bf16 %v1866
    %v2011 = vunpack.c.l.s8.bf16 %v1867
    %v2012 = vunpack.c.l.s8.bf16 %v1868
    %v2013 = vunpack.c.l.s8.bf16 %v1869
    %v2014 = vunpack.c.l.s8.bf16 %v1870
    %v2015 = vunpack.c.l.s8.bf16 %v1871
    %v2016 = vunpack.c.l.s8.bf16 %v1872
    %v2017 = vunpack.c.h.s8.bf16 %v1865
    %v2018 = vunpack.c.h.s8.bf16 %v1866
    %v2019 = vunpack.c.h.s8.bf16 %v1867
    %v2020 = vunpack.c.h.s8.bf16 %v1868
    %v2021 = vunpack.c.h.s8.bf16 %v1869
    %v2022 = vunpack.c.h.s8.bf16 %v1870
    %v2023 = vunpack.c.h.s8.bf16 %v1871
    %v2024 = vunpack.c.h.s8.bf16 %v1872
    %v2025 = vunpack.c.l.s8.bf16 %v1873
    %v2026 = vunpack.c.l.s8.bf16 %v1874
    %v2027 = vunpack.c.l.s8.bf16 %v1875
    %v2028 = vunpack.c.l.s8.bf16 %v1876
    %v2029 = vunpack.c.l.s8.bf16 %v1877
    %v2030 = vunpack.c.l.s8.bf16 %v1878
    %v2031 = vunpack.c.l.s8.bf16 %v1879
    %v2032 = vunpack.c.l.s8.bf16 %v1880
    %v2033 = vunpack.c.h.s8.bf16 %v1873
    %v2034 = vunpack.c.h.s8.bf16 %v1874
    %v2035 = vunpack.c.h.s8.bf16 %v1875
    %v2036 = vunpack.c.h.s8.bf16 %v1876
    %v2037 = vunpack.c.h.s8.bf16 %v1877
    %v2038 = vunpack.c.h.s8.bf16 %v1878
    %v2039 = vunpack.c.h.s8.bf16 %v1879
    %v2040 = vunpack.c.h.s8.bf16 %v1880
    %v2041 = vunpack.c.l.s8.bf16 %v1881
    %v2042 = vunpack.c.l.s8.bf16 %v1882
    %v2043 = vunpack.c.l.s8.bf16 %v1883
    %v2044 = vunpack.c.l.s8.bf16 %v1884
    %v2045 = vunpack.c.l.s8.bf16 %v1885
    %v2046 = vunpack.c.l.s8.bf16 %v1886
    %v2047 = vunpack.c.l.s8.bf16 %v1887
    %v2048 = vunpack.c.l.s8.bf16 %v1888
    %v2049 = vunpack.c.h.s8.bf16 %v1881
    %v2050 = vunpack.c.h.s8.bf16 %v1882
    %v2051 = vunpack.c.h.s8.bf16 %v1883
    %v2052 = vunpack.c.h.s8.bf16 %v1884
    %v2053 = vunpack.c.h.s8.bf16 %v1885
    %v2054 = vunpack.c.h.s8.bf16 %v1886
    %v2055 = vunpack.c.h.s8.bf16 %v1887
    %v2056 = vunpack.c.h.s8.bf16 %v1888
    %v2057 = vunpack.c.l.s8.bf16 %v1889
    %v2058 = vunpack.c.l.s8.bf16 %v1890
    %v2059 = vunpack.c.l.s8.bf16 %v1891
    %v2060 = vunpack.c.l.s8.bf16 %v1892
    %v2061 = vunpack.c.l.s8.bf16 %v1893
    %v2062 = vunpack.c.l.s8.bf16 %v1894
    %v2063 = vunpack.c.l.s8.bf16 %v1895
    %v2064 = vunpack.c.l.s8.bf16 %v1896
    %v2065 = vunpack.c.h.s8.bf16 %v1889
    %v2066 = vunpack.c.h.s8.bf16 %v1890
    %v2067 = vunpack.c.h.s8.bf16 %v1891
    %v2068 = vunpack.c.h.s8.bf16 %v1892
    %v2069 = vunpack.c.h.s8.bf16 %v1893
    %v2070 = vunpack.c.h.s8.bf16 %v1894
    %v2071 = vunpack.c.h.s8.bf16 %v1895
    %v2072 = vunpack.c.h.s8.bf16 %v1896
    %v2073 = vunpack.c.l.s8.bf16 %v1897
    %v2074 = vunpack.c.l.s8.bf16 %v1898
    %v2075 = vunpack.c.l.s8.bf16 %v1899
    %v2076 = vunpack.c.l.s8.bf16 %v1900
    %v2077 = vunpack.c.l.s8.bf16 %v1901
    %v2078 = vunpack.c.l.s8.bf16 %v1902
    %v2079 = vunpack.c.l.s8.bf16 %v1903
    %v2080 = vunpack.c.l.s8.bf16 %v1904
    %v2081 = vunpack.c.h.s8.bf16 %v1897
    %v2082 = vunpack.c.h.s8.bf16 %v1898
    %v2083 = vunpack.c.h.s8.bf16 %v1899
    %v2084 = vunpack.c.h.s8.bf16 %v1900
    %v2085 = vunpack.c.h.s8.bf16 %v1901
    %v2086 = vunpack.c.h.s8.bf16 %v1902
    %v2087 = vunpack.c.h.s8.bf16 %v1903
    %v2088 = vunpack.c.h.s8.bf16 %v1904
    %v2089 = vunpack.c.l.s8.bf16 %v1905
    %v2090 = vunpack.c.l.s8.bf16 %v1906
    %v2091 = vunpack.c.l.s8.bf16 %v1907
    %v2092 = vunpack.c.l.s8.bf16 %v1908
    %v2093 = vunpack.c.l.s8.bf16 %v1909
    %v2094 = vunpack.c.l.s8.bf16 %v1910
    %v2095 = vunpack.c.l.s8.bf16 %v1911
    %v2096 = vunpack.c.l.s8.bf16 %v1912
    %v2097 = vunpack.c.h.s8.bf16 %v1905
    %v2098 = vunpack.c.h.s8.bf16 %v1906
    %v2099 = vunpack.c.h.s8.bf16 %v1907
    %v2100 = vunpack.c.h.s8.bf16 %v1908
    %v2101 = vunpack.c.h.s8.bf16 %v1909
    %v2102 = vunpack.c.h.s8.bf16 %v1910
    %v2103 = vunpack.c.h.s8.bf16 %v1911
    %v2104 = vunpack.c.h.s8.bf16 %v1912
    %v2105 = vunpack.c.l.s8.bf16 %v1913
    %v2106 = vunpack.c.l.s8.bf16 %v1914
    %v2107 = vunpack.c.l.s8.bf16 %v1915
    %v2108 = vunpack.c.l.s8.bf16 %v1916
    %v2109 = vunpack.c.l.s8.bf16 %v1917
    %v2110 = vunpack.c.l.s8.bf16 %v1918
    %v2111 = vunpack.c.l.s8.bf16 %v1919
    %v2112 = vunpack.c.l.s8.bf16 %v1920
    %v2113 = vunpack.c.h.s8.bf16 %v1913
    %v2114 = vunpack.c.h.s8.bf16 %v1914
    %v2115 = vunpack.c.h.s8.bf16 %v1915
    %v2116 = vunpack.c.h.s8.bf16 %v1916
    %v2117 = vunpack.c.h.s8.bf16 %v1917
    %v2118 = vunpack.c.h.s8.bf16 %v1918
    %v2119 = vunpack.c.h.s8.bf16 %v1919
    %v2120 = vunpack.c.h.s8.bf16 %v1920
    %v2121 = vunpack.c.l.s8.bf16 %v1921
    %v2122 = vunpack.c.l.s8.bf16 %v1922
    %v2123 = vunpack.c.l.s8.bf16 %v1923
    %v2124 = vunpack.c.l.s8.bf16 %v1924
    %v2125 = vunpack.c.l.s8.bf16 %v1925
    %v2126 = vunpack.c.l.s8.bf16 %v1926
    %v2127 = vunpack.c.l.s8.bf16 %v1927
    %v2128 = vunpack.c.l.s8.bf16 %v1928
    %v2129 = vunpack.c.h.s8.bf16 %v1921
    %v2130 = vunpack.c.h.s8.bf16 %v1922
    %v2131 = vunpack.c.h.s8.bf16 %v1923
    %v2132 = vunpack.c.h.s8.bf16 %v1924
    %v2133 = vunpack.c.h.s8.bf16 %v1925
    %v2134 = vunpack.c.h.s8.bf16 %v1926
    %v2135 = vunpack.c.h.s8.bf16 %v1927
    %v2136 = vunpack.c.h.s8.bf16 %v1928
    %v2137 = vunpack.c.l.s8.bf16 %v1929
    %v2138 = vunpack.c.l.s8.bf16 %v1930
    %v2139 = vunpack.c.l.s8.bf16 %v1931
    %v2140 = vunpack.c.l.s8.bf16 %v1932
    %v2141 = vunpack.c.l.s8.bf16 %v1933
    %v2142 = vunpack.c.l.s8.bf16 %v1934
    %v2143 = vunpack.c.l.s8.bf16 %v1935
    %v2144 = vunpack.c.l.s8.bf16 %v1936
    %v2145 = vunpack.c.h.s8.bf16 %v1929
    %v2146 = vunpack.c.h.s8.bf16 %v1930
    %v2147 = vunpack.c.h.s8.bf16 %v1931
    %v2148 = vunpack.c.h.s8.bf16 %v1932
    %v2149 = vunpack.c.h.s8.bf16 %v1933
    %v2150 = vunpack.c.h.s8.bf16 %v1934
    %v2151 = vunpack.c.h.s8.bf16 %v1935
    %v2152 = vunpack.c.h.s8.bf16 %v1936
    %v2153 = vunpack.c.l.s8.bf16 %v1937
    %v2154 = vunpack.c.l.s8.bf16 %v1938
    %v2155 = vunpack.c.l.s8.bf16 %v1939
    %v2156 = vunpack.c.l.s8.bf16 %v1940
    %v2157 = vunpack.c.l.s8.bf16 %v1941
    %v2158 = vunpack.c.l.s8.bf16 %v1942
    %v2159 = vunpack.c.l.s8.bf16 %v1943
    %v2160 = vunpack.c.l.s8.bf16 %v1944
    %v2161 = vunpack.c.h.s8.bf16 %v1937
    %v2162 = vunpack.c.h.s8.bf16 %v1938
    %v2163 = vunpack.c.h.s8.bf16 %v1939
    %v2164 = vunpack.c.h.s8.bf16 %v1940
    %v2165 = vunpack.c.h.s8.bf16 %v1941
    %v2166 = vunpack.c.h.s8.bf16 %v1942
    %v2167 = vunpack.c.h.s8.bf16 %v1943
    %v2168 = vunpack.c.h.s8.bf16 %v1944
    %v2169 = vunpack.c.l.s8.bf16 %v1945
    %v2170 = vunpack.c.l.s8.bf16 %v1946
    %v2171 = vunpack.c.l.s8.bf16 %v1947
    %v2172 = vunpack.c.l.s8.bf16 %v1948
    %v2173 = vunpack.c.l.s8.bf16 %v1949
    %v2174 = vunpack.c.l.s8.bf16 %v1950
    %v2175 = vunpack.c.l.s8.bf16 %v1951
    %v2176 = vunpack.c.l.s8.bf16 %v1952
    %v2177 = vunpack.c.h.s8.bf16 %v1945
    %v2178 = vunpack.c.h.s8.bf16 %v1946
    %v2179 = vunpack.c.h.s8.bf16 %v1947
    %v2180 = vunpack.c.h.s8.bf16 %v1948
    %v2181 = vunpack.c.h.s8.bf16 %v1949
    %v2182 = vunpack.c.h.s8.bf16 %v1950
    %v2183 = vunpack.c.h.s8.bf16 %v1951
    %v2184 = vunpack.c.h.s8.bf16 %v1952
    %v2185 = vunpack.c.l.s8.bf16 %v1953
    %v2186 = vunpack.c.l.s8.bf16 %v1954
    %v2187 = vunpack.c.l.s8.bf16 %v1955
    %v2188 = vunpack.c.l.s8.bf16 %v1956
    %v2189 = vunpack.c.l.s8.bf16 %v1957
    %v2190 = vunpack.c.l.s8.bf16 %v1958
    %v2191 = vunpack.c.l.s8.bf16 %v1959
    %v2192 = vunpack.c.l.s8.bf16 %v1960
    %v2193 = vunpack.c.h.s8.bf16 %v1953
    %v2194 = vunpack.c.h.s8.bf16 %v1954
    %v2195 = vunpack.c.h.s8.bf16 %v1955
    %v2196 = vunpack.c.h.s8.bf16 %v1956
    %v2197 = vunpack.c.h.s8.bf16 %v1957
    %v2198 = vunpack.c.h.s8.bf16 %v1958
    %v2199 = vunpack.c.h.s8.bf16 %v1959
    %v2200 = vunpack.c.h.s8.bf16 %v1960
    %v2201 = vunpack.c.l.s8.bf16 %v1961
    %v2202 = vunpack.c.l.s8.bf16 %v1962
    %v2203 = vunpack.c.l.s8.bf16 %v1963
    %v2204 = vunpack.c.l.s8.bf16 %v1964
    %v2205 = vunpack.c.l.s8.bf16 %v1965
    %v2206 = vunpack.c.l.s8.bf16 %v1966
    %v2207 = vunpack.c.l.s8.bf16 %v1967
    %v2208 = vunpack.c.l.s8.bf16 %v1968
    %v2209 = vunpack.c.h.s8.bf16 %v1961
    %v2210 = vunpack.c.h.s8.bf16 %v1962
    %v2211 = vunpack.c.h.s8.bf16 %v1963
    %v2212 = vunpack.c.h.s8.bf16 %v1964
    %v2213 = vunpack.c.h.s8.bf16 %v1965
    %v2214 = vunpack.c.h.s8.bf16 %v1966
    %v2215 = vunpack.c.h.s8.bf16 %v1967
    %v2216 = vunpack.c.h.s8.bf16 %v1968
    %v2217 = vunpack.c.l.s8.bf16 %v1969
    %v2218 = vunpack.c.l.s8.bf16 %v1970
    %v2219 = vunpack.c.l.s8.bf16 %v1971
    %v2220 = vunpack.c.l.s8.bf16 %v1972
    %v2221 = vunpack.c.l.s8.bf16 %v1973
    %v2222 = vunpack.c.l.s8.bf16 %v1974
    %v2223 = vunpack.c.l.s8.bf16 %v1975
    %v2224 = vunpack.c.l.s8.bf16 %v1976
    %v2225 = vunpack.c.h.s8.bf16 %v1969
    %v2226 = vunpack.c.h.s8.bf16 %v1970
    %v2227 = vunpack.c.h.s8.bf16 %v1971
    %v2228 = vunpack.c.h.s8.bf16 %v1972
    %v2229 = vunpack.c.h.s8.bf16 %v1973
    %v2230 = vunpack.c.h.s8.bf16 %v1974
    %v2231 = vunpack.c.h.s8.bf16 %v1975
    %v2232 = vunpack.c.h.s8.bf16 %v1976
    %2233 = vmatprep.subr.bf16.mxu0 %v2034
    %2234 = vmatpush1.bf16.msra.mxu0 %v2033
    %2235 = vmatprep.subr.bf16.mxu0 %v2026
    %2236 = vmatpush1.bf16.msra.mxu0 %v2025
    %2237 = vmatprep.subr.bf16.mxu0 %v2018
    %2238 = vmatpush1.bf16.msra.mxu0 %v2017
    %2239 = vmatprep.subr.bf16.mxu0 %v2010
    %2240 = vmatpush1.bf16.msra.mxu0 %v2009
    %2241 = vmatprep.subr.bf16.mxu0 %v2002
    %2242 = vmatpush1.bf16.msra.mxu0 %v2001
    %2243 = vmatprep.subr.bf16.mxu0 %v1994
    %2244 = vmatpush1.bf16.msra.mxu0 %v1993
    %2245 = vmatprep.subr.bf16.mxu0 %v1986
    %2246 = vmatpush1.bf16.msra.mxu0 %v1985
    %2247 = vmatprep.subr.bf16.mxu0 %v1978
    %2248 = vmatpush1.bf16.msra.mxu0 %v1977
    %2249 = vmatprep.subr.bf16.mxu0 %v2098
    %2250 = vmatpush2.bf16.msra.mxu0 %v2097
    %2251 = vmatprep.subr.bf16.mxu0 %v2090
    %2252 = vmatpush2.bf16.msra.mxu0 %v2089
    %2253 = vmatprep.subr.bf16.mxu0 %v2082
    %2254 = vmatpush2.bf16.msra.mxu0 %v2081
    %2255 = vmatprep.subr.bf16.mxu0 %v2074
    %2256 = vmatpush2.bf16.msra.mxu0 %v2073
    %2257 = vmatprep.subr.bf16.mxu0 %v2066
    %2258 = vmatpush2.bf16.msra.mxu0 %v2065
    %2259 = vmatprep.subr.bf16.mxu0 %v2058
    %2260 = vmatpush2.bf16.msra.mxu0 %v2057
    %2261 = vmatprep.subr.bf16.mxu0 %v2050
    %2262 = vmatpush2.bf16.msra.mxu0 %v2049
    %2263 = vmatprep.subr.bf16.mxu0 %v2042
    %2264 = vmatpush2.bf16.msra.mxu0 %v2041
    %2265 = vmatprep.mubr.bf16.mxu0 %v1846
    %2266 = vmatmul.mubr.bf16.gmra.mxu0 %v1845
    %v2267 = vpop.f32.mrf.mxu0
    %v2268 = vadd.f32 0.0, %v2267
    %v2269 = vpop.f32.mrf.mxu0
    %v2270 = vadd.f32 0.0, %v2269
    %v2271 = vpop.f32.mrf.mxu0
    %v2272 = vpop.f32.mrf.mxu0
    %2273 = vdwg.mxu0
    %2274 = vmatprep.subr.bf16.mxu0 %v2162
    %2275 = vmatpush1.bf16.msra.mxu0 %v2161
    %2276 = vmatprep.subr.bf16.mxu0 %v2154
    %2277 = vmatpush1.bf16.msra.mxu0 %v2153
    %2278 = vmatprep.subr.bf16.mxu0 %v2146
    %2279 = vmatpush1.bf16.msra.mxu0 %v2145
    %2280 = vmatprep.subr.bf16.mxu0 %v2138
    %2281 = vmatpush1.bf16.msra.mxu0 %v2137
    %2282 = vmatprep.subr.bf16.mxu0 %v2130
    %2283 = vmatpush1.bf16.msra.mxu0 %v2129
    %2284 = vmatprep.subr.bf16.mxu0 %v2122
    %2285 = vmatpush1.bf16.msra.mxu0 %v2121
    %2286 = vmatprep.subr.bf16.mxu0 %v2114
    %2287 = vmatpush1.bf16.msra.mxu0 %v2113
    %2288 = vmatprep.subr.bf16.mxu0 %v2106
    %2289 = vmatpush1.bf16.msra.mxu0 %v2105
    %2290 = vmatprep.subr.bf16.mxu0 %v2226
    %2291 = vmatpush2.bf16.msra.mxu0 %v2225
    %2292 = vmatprep.subr.bf16.mxu0 %v2218
    %2293 = vmatpush2.bf16.msra.mxu0 %v2217
    %2294 = vmatprep.subr.bf16.mxu0 %v2210
    %2295 = vmatpush2.bf16.msra.mxu0 %v2209
    %2296 = vmatprep.subr.bf16.mxu0 %v2202
    %2297 = vmatpush2.bf16.msra.mxu0 %v2201
    %2298 = vmatprep.subr.bf16.mxu0 %v2194
    %2299 = vmatpush2.bf16.msra.mxu0 %v2193
    %2300 = vmatprep.subr.bf16.mxu0 %v2186
    %2301 = vmatpush2.bf16.msra.mxu0 %v2185
    %2302 = vmatprep.subr.bf16.mxu0 %v2178
    %2303 = vmatpush2.bf16.msra.mxu0 %v2177
    %2304 = vmatprep.subr.bf16.mxu0 %v2170
    %2305 = vmatpush2.bf16.msra.mxu0 %v2169
    %2306 = vmatprep.mubr.bf16.mxu0 %v1848
    %2307 = vmatmul.mubr.bf16.gmra.mxu0 %v1847
    %v2308 = vpop.f32.mrf.mxu0
    %v2309 = vadd.f32 %v2268, %v2308
    %v2310 = vpop.f32.mrf.mxu0
    %v2311 = vadd.f32 %v2270, %v2310
    %v2312 = vpop.f32.mrf.mxu0
    %v2313 = vpop.f32.mrf.mxu0
    %2314 = vdwg.mxu0
    %2315 = vmatprep.subr.bf16.mxu0 %v2036
    %2316 = vmatpush1.bf16.msra.mxu0 %v2035
    %2317 = vmatprep.subr.bf16.mxu0 %v2028
    %2318 = vmatpush1.bf16.msra.mxu0 %v2027
    %2319 = vmatprep.subr.bf16.mxu0 %v2020
    %2320 = vmatpush1.bf16.msra.mxu0 %v2019
    %2321 = vmatprep.subr.bf16.mxu0 %v2012
    %2322 = vmatpush1.bf16.msra.mxu0 %v2011
    %2323 = vmatprep.subr.bf16.mxu0 %v2004
    %2324 = vmatpush1.bf16.msra.mxu0 %v2003
    %2325 = vmatprep.subr.bf16.mxu0 %v1996
    %2326 = vmatpush1.bf16.msra.mxu0 %v1995
    %2327 = vmatprep.subr.bf16.mxu0 %v1988
    %2328 = vmatpush1.bf16.msra.mxu0 %v1987
    %2329 = vmatprep.subr.bf16.mxu0 %v1980
    %2330 = vmatpush1.bf16.msra.mxu0 %v1979
    %2331 = vmatprep.subr.bf16.mxu0 %v2100
    %2332 = vmatpush2.bf16.msra.mxu0 %v2099
    %2333 = vmatprep.subr.bf16.mxu0 %v2092
    %2334 = vmatpush2.bf16.msra.mxu0 %v2091
    %2335 = vmatprep.subr.bf16.mxu0 %v2084
    %2336 = vmatpush2.bf16.msra.mxu0 %v2083
    %2337 = vmatprep.subr.bf16.mxu0 %v2076
    %2338 = vmatpush2.bf16.msra.mxu0 %v2075
    %2339 = vmatprep.subr.bf16.mxu0 %v2068
    %2340 = vmatpush2.bf16.msra.mxu0 %v2067
    %2341 = vmatprep.subr.bf16.mxu0 %v2060
    %2342 = vmatpush2.bf16.msra.mxu0 %v2059
    %2343 = vmatprep.subr.bf16.mxu0 %v2052
    %2344 = vmatpush2.bf16.msra.mxu0 %v2051
    %2345 = vmatprep.subr.bf16.mxu0 %v2044
    %2346 = vmatpush2.bf16.msra.mxu0 %v2043
    %2347 = vmatprep.mubr.bf16.mxu0 %v1846
    %2348 = vmatmul.mubr.bf16.gmra.mxu0 %v1845
    %v2349 = vpop.f32.mrf.mxu0
    %v2350 = vadd.f32 0.0, %v2349
    %v2351 = vpop.f32.mrf.mxu0
    %v2352 = vadd.f32 0.0, %v2351
    %v2353 = vpop.f32.mrf.mxu0
    %v2354 = vpop.f32.mrf.mxu0
    %2355 = vdwg.mxu0
    %2356 = vmatprep.subr.bf16.mxu0 %v2164
    %2357 = vmatpush1.bf16.msra.mxu0 %v2163
    %2358 = vmatprep.subr.bf16.mxu0 %v2156
    %2359 = vmatpush1.bf16.msra.mxu0 %v2155
    %2360 = vmatprep.subr.bf16.mxu0 %v2148
    %2361 = vmatpush1.bf16.msra.mxu0 %v2147
    %2362 = vmatprep.subr.bf16.mxu0 %v2140
    %2363 = vmatpush1.bf16.msra.mxu0 %v2139
    %2364 = vmatprep.subr.bf16.mxu0 %v2132
    %2365 = vmatpush1.bf16.msra.mxu0 %v2131
    %2366 = vmatprep.subr.bf16.mxu0 %v2124
    %2367 = vmatpush1.bf16.msra.mxu0 %v2123
    %2368 = vmatprep.subr.bf16.mxu0 %v2116
    %2369 = vmatpush1.bf16.msra.mxu0 %v2115
    %2370 = vmatprep.subr.bf16.mxu0 %v2108
    %2371 = vmatpush1.bf16.msra.mxu0 %v2107
    %2372 = vmatprep.subr.bf16.mxu0 %v2228
    %2373 = vmatpush2.bf16.msra.mxu0 %v2227
    %2374 = vmatprep.subr.bf16.mxu0 %v2220
    %2375 = vmatpush2.bf16.msra.mxu0 %v2219
    %2376 = vmatprep.subr.bf16.mxu0 %v2212
    %2377 = vmatpush2.bf16.msra.mxu0 %v2211
    %2378 = vmatprep.subr.bf16.mxu0 %v2204
    %2379 = vmatpush2.bf16.msra.mxu0 %v2203
    %2380 = vmatprep.subr.bf16.mxu0 %v2196
    %2381 = vmatpush2.bf16.msra.mxu0 %v2195
    %2382 = vmatprep.subr.bf16.mxu0 %v2188
    %2383 = vmatpush2.bf16.msra.mxu0 %v2187
    %2384 = vmatprep.subr.bf16.mxu0 %v2180
    %2385 = vmatpush2.bf16.msra.mxu0 %v2179
    %2386 = vmatprep.subr.bf16.mxu0 %v2172
    %2387 = vmatpush2.bf16.msra.mxu0 %v2171
    %2388 = vmatprep.mubr.bf16.mxu0 %v1848
    %2389 = vmatmul.mubr.bf16.gmra.mxu0 %v1847
    %v2390 = vpop.f32.mrf.mxu0
    %v2391 = vadd.f32 %v2350, %v2390
    %v2392 = vpop.f32.mrf.mxu0
    %v2393 = vadd.f32 %v2352, %v2392
    %v2394 = vpop.f32.mrf.mxu0
    %v2395 = vpop.f32.mrf.mxu0
    %2396 = vdwg.mxu0
    %2397 = vmatprep.subr.bf16.mxu0 %v2038
    %2398 = vmatpush1.bf16.msra.mxu0 %v2037
    %2399 = vmatprep.subr.bf16.mxu0 %v2030
    %2400 = vmatpush1.bf16.msra.mxu0 %v2029
    %2401 = vmatprep.subr.bf16.mxu0 %v2022
    %2402 = vmatpush1.bf16.msra.mxu0 %v2021
    %2403 = vmatprep.subr.bf16.mxu0 %v2014
    %2404 = vmatpush1.bf16.msra.mxu0 %v2013
    %2405 = vmatprep.subr.bf16.mxu0 %v2006
    %2406 = vmatpush1.bf16.msra.mxu0 %v2005
    %2407 = vmatprep.subr.bf16.mxu0 %v1998
    %2408 = vmatpush1.bf16.msra.mxu0 %v1997
    %2409 = vmatprep.subr.bf16.mxu0 %v1990
    %2410 = vmatpush1.bf16.msra.mxu0 %v1989
    %2411 = vmatprep.subr.bf16.mxu0 %v1982
    %2412 = vmatpush1.bf16.msra.mxu0 %v1981
    %2413 = vmatprep.subr.bf16.mxu0 %v2102
    %2414 = vmatpush2.bf16.msra.mxu0 %v2101
    %2415 = vmatprep.subr.bf16.mxu0 %v2094
    %2416 = vmatpush2.bf16.msra.mxu0 %v2093
    %2417 = vmatprep.subr.bf16.mxu0 %v2086
    %2418 = vmatpush2.bf16.msra.mxu0 %v2085
    %2419 = vmatprep.subr.bf16.mxu0 %v2078
    %2420 = vmatpush2.bf16.msra.mxu0 %v2077
    %2421 = vmatprep.subr.bf16.mxu0 %v2070
    %2422 = vmatpush2.bf16.msra.mxu0 %v2069
    %2423 = vmatprep.subr.bf16.mxu0 %v2062
    %2424 = vmatpush2.bf16.msra.mxu0 %v2061
    %2425 = vmatprep.subr.bf16.mxu0 %v2054
    %2426 = vmatpush2.bf16.msra.mxu0 %v2053
    %2427 = vmatprep.subr.bf16.mxu0 %v2046
    %2428 = vmatpush2.bf16.msra.mxu0 %v2045
    %2429 = vmatprep.mubr.bf16.mxu0 %v1846
    %2430 = vmatmul.mubr.bf16.gmra.mxu0 %v1845
    %v2431 = vpop.f32.mrf.mxu0
    %v2432 = vadd.f32 0.0, %v2431
    %v2433 = vpop.f32.mrf.mxu0
    %v2434 = vadd.f32 0.0, %v2433
    %v2435 = vpop.f32.mrf.mxu0
    %v2436 = vpop.f32.mrf.mxu0
    %2437 = vdwg.mxu0
    %2438 = vmatprep.subr.bf16.mxu0 %v2166
    %2439 = vmatpush1.bf16.msra.mxu0 %v2165
    %2440 = vmatprep.subr.bf16.mxu0 %v2158
    %2441 = vmatpush1.bf16.msra.mxu0 %v2157
    %2442 = vmatprep.subr.bf16.mxu0 %v2150
    %2443 = vmatpush1.bf16.msra.mxu0 %v2149
    %2444 = vmatprep.subr.bf16.mxu0 %v2142
    %2445 = vmatpush1.bf16.msra.mxu0 %v2141
    %2446 = vmatprep.subr.bf16.mxu0 %v2134
    %2447 = vmatpush1.bf16.msra.mxu0 %v2133
    %2448 = vmatprep.subr.bf16.mxu0 %v2126
    %2449 = vmatpush1.bf16.msra.mxu0 %v2125
    %2450 = vmatprep.subr.bf16.mxu0 %v2118
    %2451 = vmatpush1.bf16.msra.mxu0 %v2117
    %2452 = vmatprep.subr.bf16.mxu0 %v2110
    %2453 = vmatpush1.bf16.msra.mxu0 %v2109
    %2454 = vmatprep.subr.bf16.mxu0 %v2230
    %2455 = vmatpush2.bf16.msra.mxu0 %v2229
    %2456 = vmatprep.subr.bf16.mxu0 %v2222
    %2457 = vmatpush2.bf16.msra.mxu0 %v2221
    %2458 = vmatprep.subr.bf16.mxu0 %v2214
    %2459 = vmatpush2.bf16.msra.mxu0 %v2213
    %2460 = vmatprep.subr.bf16.mxu0 %v2206
    %2461 = vmatpush2.bf16.msra.mxu0 %v2205
    %2462 = vmatprep.subr.bf16.mxu0 %v2198
    %2463 = vmatpush2.bf16.msra.mxu0 %v2197
    %2464 = vmatprep.subr.bf16.mxu0 %v2190
    %2465 = vmatpush2.bf16.msra.mxu0 %v2189
    %2466 = vmatprep.subr.bf16.mxu0 %v2182
    %2467 = vmatpush2.bf16.msra.mxu0 %v2181
    %2468 = vmatprep.subr.bf16.mxu0 %v2174
    %2469 = vmatpush2.bf16.msra.mxu0 %v2173
    %2470 = vmatprep.mubr.bf16.mxu0 %v1848
    %2471 = vmatmul.mubr.bf16.gmra.mxu0 %v1847
    %v2472 = vpop.f32.mrf.mxu0
    %v2473 = vadd.f32 %v2432, %v2472
    %v2474 = vpop.f32.mrf.mxu0
    %v2475 = vadd.f32 %v2434, %v2474
    %v2476 = vpop.f32.mrf.mxu0
    %v2477 = vpop.f32.mrf.mxu0
    %2478 = vdwg.mxu0
    %2479 = vmatprep.subr.bf16.mxu0 %v2040
    %2480 = vmatpush1.bf16.msra.mxu0 %v2039
    %2481 = vmatprep.subr.bf16.mxu0 %v2032
    %2482 = vmatpush1.bf16.msra.mxu0 %v2031
    %2483 = vmatprep.subr.bf16.mxu0 %v2024
    %2484 = vmatpush1.bf16.msra.mxu0 %v2023
    %2485 = vmatprep.subr.bf16.mxu0 %v2016
    %2486 = vmatpush1.bf16.msra.mxu0 %v2015
    %2487 = vmatprep.subr.bf16.mxu0 %v2008
    %2488 = vmatpush1.bf16.msra.mxu0 %v2007
    %2489 = vmatprep.subr.bf16.mxu0 %v2000
    %2490 = vmatpush1.bf16.msra.mxu0 %v1999
    %2491 = vmatprep.subr.bf16.mxu0 %v1992
    %2492 = vmatpush1.bf16.msra.mxu0 %v1991
    %2493 = vmatprep.subr.bf16.mxu0 %v1984
    %2494 = vmatpush1.bf16.msra.mxu0 %v1983
    %2495 = vmatprep.subr.bf16.mxu0 %v2104
    %2496 = vmatpush2.bf16.msra.mxu0 %v2103
    %2497 = vmatprep.subr.bf16.mxu0 %v2096
    %2498 = vmatpush2.bf16.msra.mxu0 %v2095
    %2499 = vmatprep.subr.bf16.mxu0 %v2088
    %2500 = vmatpush2.bf16.msra.mxu0 %v2087
    %2501 = vmatprep.subr.bf16.mxu0 %v2080
    %2502 = vmatpush2.bf16.msra.mxu0 %v2079
    %2503 = vmatprep.subr.bf16.mxu0 %v2072
    %2504 = vmatpush2.bf16.msra.mxu0 %v2071
    %2505 = vmatprep.subr.bf16.mxu0 %v2064
    %2506 = vmatpush2.bf16.msra.mxu0 %v2063
    %2507 = vmatprep.subr.bf16.mxu0 %v2056
    %2508 = vmatpush2.bf16.msra.mxu0 %v2055
    %2509 = vmatprep.subr.bf16.mxu0 %v2048
    %2510 = vmatpush2.bf16.msra.mxu0 %v2047
    %2511 = vmatprep.mubr.bf16.mxu0 %v1846
    %2512 = vmatmul.mubr.bf16.gmra.mxu0 %v1845
    %v2513 = vpop.f32.mrf.mxu0
    %v2514 = vadd.f32 0.0, %v2513
    %v2515 = vpop.f32.mrf.mxu0
    %v2516 = vadd.f32 0.0, %v2515
    %v2517 = vpop.f32.mrf.mxu0
    %v2518 = vpop.f32.mrf.mxu0
    %2519 = vdwg.mxu0
    %2520 = vmatprep.subr.bf16.mxu0 %v2168
    %2521 = vmatpush1.bf16.msra.mxu0 %v2167
    %2522 = vmatprep.subr.bf16.mxu0 %v2160
    %2523 = vmatpush1.bf16.msra.mxu0 %v2159
    %2524 = vmatprep.subr.bf16.mxu0 %v2152
    %2525 = vmatpush1.bf16.msra.mxu0 %v2151
    %2526 = vmatprep.subr.bf16.mxu0 %v2144
    %2527 = vmatpush1.bf16.msra.mxu0 %v2143
    %2528 = vmatprep.subr.bf16.mxu0 %v2136
    %2529 = vmatpush1.bf16.msra.mxu0 %v2135
    %2530 = vmatprep.subr.bf16.mxu0 %v2128
    %2531 = vmatpush1.bf16.msra.mxu0 %v2127
    %2532 = vmatprep.subr.bf16.mxu0 %v2120
    %2533 = vmatpush1.bf16.msra.mxu0 %v2119
    %2534 = vmatprep.subr.bf16.mxu0 %v2112
    %2535 = vmatpush1.bf16.msra.mxu0 %v2111
    %2536 = vmatprep.subr.bf16.mxu0 %v2232
    %2537 = vmatpush2.bf16.msra.mxu0 %v2231
    %2538 = vmatprep.subr.bf16.mxu0 %v2224
    %2539 = vmatpush2.bf16.msra.mxu0 %v2223
    %2540 = vmatprep.subr.bf16.mxu0 %v2216
    %2541 = vmatpush2.bf16.msra.mxu0 %v2215
    %2542 = vmatprep.subr.bf16.mxu0 %v2208
    %2543 = vmatpush2.bf16.msra.mxu0 %v2207
    %2544 = vmatprep.subr.bf16.mxu0 %v2200
    %2545 = vmatpush2.bf16.msra.mxu0 %v2199
    %2546 = vmatprep.subr.bf16.mxu0 %v2192
    %2547 = vmatpush2.bf16.msra.mxu0 %v2191
    %2548 = vmatprep.subr.bf16.mxu0 %v2184
    %2549 = vmatpush2.bf16.msra.mxu0 %v2183
    %2550 = vmatprep.subr.bf16.mxu0 %v2176
    %2551 = vmatpush2.bf16.msra.mxu0 %v2175
    %2552 = vmatprep.mubr.bf16.mxu0 %v1848
    %2553 = vmatmul.mubr.bf16.gmra.mxu0 %v1847
    %v2554 = vpop.f32.mrf.mxu0
    %v2555 = vadd.f32 %v2514, %v2554
    %v2556 = vpop.f32.mrf.mxu0
    %v2557 = vadd.f32 %v2516, %v2556
    %v2558 = vpop.f32.mrf.mxu0
    %v2559 = vpop.f32.mrf.mxu0
    %2560 = vdwg.mxu0
    %v2561 = vld [vmem:[#allocation12 + $0x36] sm:$0xff]
    %v2563 = vlaneseq
    %v2564 = vshrl.u32 %v2563, 7
    %v2565 = vsub.s32 0, %v2564
    %v2566 = vrot.slane %v2561, %v2565
    %v2567 = vlaneseq
    %v2568 = vshrl.u32 %v2567, 7
    %v2569 = vsub.s32 1, %v2568
    %v2570 = vrot.slane %v2561, %v2569
    %v2571 = vlaneseq
    %v2572 = vshrl.u32 %v2571, 7
    %v2573 = vsub.s32 2, %v2572
    %v2574 = vrot.slane %v2561, %v2573
    %v2575 = vlaneseq
    %v2576 = vshrl.u32 %v2575, 7
    %v2577 = vsub.s32 3, %v2576
    %v2578 = vrot.slane %v2561, %v2577
    %v2579 = vlaneseq
    %v2580 = vshrl.u32 %v2579, 7
    %v2581 = vsub.s32 4, %v2580
    %v2582 = vrot.slane %v2561, %v2581
    %v2583 = vlaneseq
    %v2584 = vshrl.u32 %v2583, 7
    %v2585 = vsub.s32 5, %v2584
    %v2586 = vrot.slane %v2561, %v2585
    %v2587 = vlaneseq
    %v2588 = vshrl.u32 %v2587, 7
    %v2589 = vsub.s32 6, %v2588
    %v2590 = vrot.slane %v2561, %v2589
    %v2591 = vlaneseq
    %v2592 = vshrl.u32 %v2591, 7
    %v2593 = vsub.s32 7, %v2592
    %v2594 = vrot.slane %v2561, %v2593
    %v2603 = vmul.f32 %v2309, %v2566
    %v2604 = vmul.f32 %v2311, %v2570
    %v2605 = vmul.f32 %v2391, %v2574
    %v2606 = vmul.f32 %v2393, %v2578
    %v2607 = vmul.f32 %v2473, %v2582
    %v2608 = vmul.f32 %v2475, %v2586
    %v2609 = vmul.f32 %v2555, %v2590
    %v2610 = vmul.f32 %v2557, %v2594
    %v2611 = vld [vmem:[#allocation12 + $0x26] sm:$0xff]
    %v2612 = vld [vmem:[#allocation12 + $0x2e] sm:$0xff]
    %v2613 = vrot.slane %v2603, 4
    %v2614 = vadd.f32 %v2603, %v2613
    %v2615 = vrot.slane %v2614, 2
    %v2616 = vadd.f32 %v2614, %v2615
    %v2617 = vrot.slane %v2616, 1
    %v2618 = vadd.f32 %v2616, %v2617
    %v2619 = vrot.slane %v2604, 4
    %v2620 = vadd.f32 %v2604, %v2619
    %v2621 = vrot.slane %v2620, 2
    %v2622 = vadd.f32 %v2620, %v2621
    %v2623 = vrot.slane %v2622, 1
    %v2624 = vadd.f32 %v2622, %v2623
    %v2625 = vrot.slane %v2605, 4
    %v2626 = vadd.f32 %v2605, %v2625
    %v2627 = vrot.slane %v2626, 2
    %v2628 = vadd.f32 %v2626, %v2627
    %v2629 = vrot.slane %v2628, 1
    %v2630 = vadd.f32 %v2628, %v2629
    %v2631 = vrot.slane %v2606, 4
    %v2632 = vadd.f32 %v2606, %v2631
    %v2633 = vrot.slane %v2632, 2
    %v2634 = vadd.f32 %v2632, %v2633
    %v2635 = vrot.slane %v2634, 1
    %v2636 = vadd.f32 %v2634, %v2635
    %v2637 = vrot.slane %v2607, 4
    %v2638 = vadd.f32 %v2607, %v2637
    %v2639 = vrot.slane %v2638, 2
    %v2640 = vadd.f32 %v2638, %v2639
    %v2641 = vrot.slane %v2640, 1
    %v2642 = vadd.f32 %v2640, %v2641
    %v2643 = vrot.slane %v2608, 4
    %v2644 = vadd.f32 %v2608, %v2643
    %v2645 = vrot.slane %v2644, 2
    %v2646 = vadd.f32 %v2644, %v2645
    %v2647 = vrot.slane %v2646, 1
    %v2648 = vadd.f32 %v2646, %v2647
    %v2649 = vrot.slane %v2609, 4
    %v2650 = vadd.f32 %v2609, %v2649
    %v2651 = vrot.slane %v2650, 2
    %v2652 = vadd.f32 %v2650, %v2651
    %v2653 = vrot.slane %v2652, 1
    %v2654 = vadd.f32 %v2652, %v2653
    %v2655 = vrot.slane %v2610, 4
    %v2656 = vadd.f32 %v2610, %v2655
    %v2657 = vrot.slane %v2656, 2
    %v2658 = vadd.f32 %v2656, %v2657
    %v2659 = vrot.slane %v2658, 1
    %v2660 = vadd.f32 %v2658, %v2659
    %v2661 = vmul.f32 %v2603, %v2603
    %v2662 = vmul.f32 %v2604, %v2604
    %v2663 = vmul.f32 %v2605, %v2605
    %v2664 = vmul.f32 %v2606, %v2606
    %v2665 = vmul.f32 %v2607, %v2607
    %v2666 = vmul.f32 %v2608, %v2608
    %v2667 = vmul.f32 %v2609, %v2609
    %v2668 = vmul.f32 %v2610, %v2610
    %v2669 = vrot.slane %v2661, 4
    %v2670 = vadd.f32 %v2661, %v2669
    %v2671 = vrot.slane %v2670, 2
    %v2672 = vadd.f32 %v2670, %v2671
    %v2673 = vrot.slane %v2672, 1
    %v2674 = vadd.f32 %v2672, %v2673
    %v2675 = vrot.slane %v2662, 4
    %v2676 = vadd.f32 %v2662, %v2675
    %v2677 = vrot.slane %v2676, 2
    %v2678 = vadd.f32 %v2676, %v2677
    %v2679 = vrot.slane %v2678, 1
    %v2680 = vadd.f32 %v2678, %v2679
    %v2681 = vrot.slane %v2663, 4
    %v2682 = vadd.f32 %v2663, %v2681
    %v2683 = vrot.slane %v2682, 2
    %v2684 = vadd.f32 %v2682, %v2683
    %v2685 = vrot.slane %v2684, 1
    %v2686 = vadd.f32 %v2684, %v2685
    %v2687 = vrot.slane %v2664, 4
    %v2688 = vadd.f32 %v2664, %v2687
    %v2689 = vrot.slane %v2688, 2
    %v2690 = vadd.f32 %v2688, %v2689
    %v2691 = vrot.slane %v2690, 1
    %v2692 = vadd.f32 %v2690, %v2691
    %v2693 = vrot.slane %v2665, 4
    %v2694 = vadd.f32 %v2665, %v2693
    %v2695 = vrot.slane %v2694, 2
    %v2696 = vadd.f32 %v2694, %v2695
    %v2697 = vrot.slane %v2696, 1
    %v2698 = vadd.f32 %v2696, %v2697
    %v2699 = vrot.slane %v2666, 4
    %v2700 = vadd.f32 %v2666, %v2699
    %v2701 = vrot.slane %v2700, 2
    %v2702 = vadd.f32 %v2700, %v2701
    %v2703 = vrot.slane %v2702, 1
    %v2704 = vadd.f32 %v2702, %v2703
    %v2705 = vrot.slane %v2667, 4
    %v2706 = vadd.f32 %v2667, %v2705
    %v2707 = vrot.slane %v2706, 2
    %v2708 = vadd.f32 %v2706, %v2707
    %v2709 = vrot.slane %v2708, 1
    %v2710 = vadd.f32 %v2708, %v2709
    %v2711 = vrot.slane %v2668, 4
    %v2712 = vadd.f32 %v2668, %v2711
    %v2713 = vrot.slane %v2712, 2
    %v2714 = vadd.f32 %v2712, %v2713
    %v2715 = vrot.slane %v2714, 1
    %v2716 = vadd.f32 %v2714, %v2715
    %v2717 = vmul.f32 %v2618, 0.125
    %v2718 = vmul.f32 %v2624, 0.125
    %v2719 = vmul.f32 %v2630, 0.125
    %v2720 = vmul.f32 %v2636, 0.125
    %v2721 = vmul.f32 %v2642, 0.125
    %v2722 = vmul.f32 %v2648, 0.125
    %v2723 = vmul.f32 %v2654, 0.125
    %v2724 = vmul.f32 %v2660, 0.125
    %v2725 = vmul.f32 %v2674, 0.125
    %v2726 = vmul.f32 %v2680, 0.125
    %v2727 = vmul.f32 %v2686, 0.125
    %v2728 = vmul.f32 %v2692, 0.125
    %v2729 = vmul.f32 %v2698, 0.125
    %v2730 = vmul.f32 %v2704, 0.125
    %v2731 = vmul.f32 %v2710, 0.125
    %v2732 = vmul.f32 %v2716, 0.125
    %v2733 = vmul.f32 %v2717, %v2717
    %v2734 = vmul.f32 %v2718, %v2718
    %v2735 = vmul.f32 %v2719, %v2719
    %v2736 = vmul.f32 %v2720, %v2720
    %v2737 = vmul.f32 %v2721, %v2721
    %v2738 = vmul.f32 %v2722, %v2722
    %v2739 = vmul.f32 %v2723, %v2723
    %v2740 = vmul.f32 %v2724, %v2724
    %v2741 = vsub.f32 %v2725, %v2733
    %v2742 = vsub.f32 %v2726, %v2734
    %v2743 = vsub.f32 %v2727, %v2735
    %v2744 = vsub.f32 %v2728, %v2736
    %v2745 = vsub.f32 %v2729, %v2737
    %v2746 = vsub.f32 %v2730, %v2738
    %v2747 = vsub.f32 %v2731, %v2739
    %v2748 = vsub.f32 %v2732, %v2740
    %v2749 = vmax.f32 %v2741, 0.0
    %v2750 = vmax.f32 %v2742, 0.0
    %v2751 = vmax.f32 %v2743, 0.0
    %v2752 = vmax.f32 %v2744, 0.0
    %v2753 = vmax.f32 %v2745, 0.0
    %v2754 = vmax.f32 %v2746, 0.0
    %v2755 = vmax.f32 %v2747, 0.0
    %v2756 = vmax.f32 %v2748, 0.0
    %v2757 = vadd.f32 %v2749, 0.8
    %v2758 = vadd.f32 %v2750, 0.8
    %v2759 = vadd.f32 %v2751, 0.8
    %v2760 = vadd.f32 %v2752, 0.8
    %v2761 = vadd.f32 %v2753, 0.8
    %v2762 = vadd.f32 %v2754, 0.8
    %v2763 = vadd.f32 %v2755, 0.8
    %v2764 = vadd.f32 %v2756, 0.8
    %v2765 = vrsqrt.pop %v2757
    %v2766 = vrsqrt.pop %v2758
    %v2767 = vrsqrt.pop %v2759
    %v2768 = vrsqrt.pop %v2760
    %v2769 = vrsqrt.pop %v2761
    %v2770 = vrsqrt.pop %v2762
    %v2771 = vrsqrt.pop %v2763
    %v2772 = vrsqrt.pop %v2764
    %v2781 = vcombine.low %v2765, %v2766
    %v2782 = vcombine.low %v2767, %v2768
    %v2783 = vcombine.low %v2769, %v2770
    %v2784 = vcombine.low %v2771, %v2772
    %v2786 = vunpack.c.l.s4 1966171168
    %v2787 = vunpack.c.0.s8 %v2786
    %v2788 = vlaneseq
    %v2789 = vshrl.u32 %v2788, 7
    %v2790 = vsub.s32 %v2787, %v2789
    %v2791 = vrot.slane %v2781, %v2790
    %v2793 = vunpack.c.l.s4 1966171168
    %v2794 = vunpack.c.0.s8 %v2793
    %v2795 = vlaneseq
    %v2796 = vshrl.u32 %v2795, 7
    %v2797 = vsub.s32 %v2794, %v2796
    %v2798 = vrot.slane %v2782, %v2797
    %v2800 = vunpack.c.l.s4 1966171168
    %v2801 = vunpack.c.0.s8 %v2800
    %v2802 = vlaneseq
    %v2803 = vshrl.u32 %v2802, 7
    %v2804 = vsub.s32 %v2801, %v2803
    %v2805 = vrot.slane %v2783, %v2804
    %v2807 = vunpack.c.l.s4 1966171168
    %v2808 = vunpack.c.0.s8 %v2807
    %v2809 = vlaneseq
    %v2810 = vshrl.u32 %v2809, 7
    %v2811 = vsub.s32 %v2808, %v2810
    %v2812 = vrot.slane %v2784, %v2811
    %v2813 = vcombine.low %v2791, %v2798
    %v2814 = vcombine.low %v2805, %v2812
    %v2816 = vunpack.c.l.s4 1966171168
    %v2817 = vunpack.c.0.s8 %v2816
    %v2818 = vlaneseq
    %v2819 = vshrl.u32 %v2818, 7
    %v2820 = vsub.s32 %v2817, %v2819
    %v2821 = vrot.slane %v2813, %v2820
    %v2823 = vunpack.c.l.s4 1966171168
    %v2824 = vunpack.c.0.s8 %v2823
    %v2825 = vlaneseq
    %v2826 = vshrl.u32 %v2825, 7
    %v2827 = vsub.s32 %v2824, %v2826
    %v2828 = vrot.slane %v2814, %v2827
    %v2829 = vcombine.low %v2821, %v2828
    %v2831 = vmul.f32 %v2611, %v2829
    %v2833 = vlaneseq
    %v2834 = vshrl.u32 %v2833, 7
    %v2835 = vsub.s32 0, %v2834
    %v2836 = vrot.slane %v2831, %v2835
    %v2837 = vlaneseq
    %v2838 = vshrl.u32 %v2837, 7
    %v2839 = vsub.s32 1, %v2838
    %v2840 = vrot.slane %v2831, %v2839
    %v2841 = vlaneseq
    %v2842 = vshrl.u32 %v2841, 7
    %v2843 = vsub.s32 2, %v2842
    %v2844 = vrot.slane %v2831, %v2843
    %v2845 = vlaneseq
    %v2846 = vshrl.u32 %v2845, 7
    %v2847 = vsub.s32 3, %v2846
    %v2848 = vrot.slane %v2831, %v2847
    %v2849 = vlaneseq
    %v2850 = vshrl.u32 %v2849, 7
    %v2851 = vsub.s32 4, %v2850
    %v2852 = vrot.slane %v2831, %v2851
    %v2853 = vlaneseq
    %v2854 = vshrl.u32 %v2853, 7
    %v2855 = vsub.s32 5, %v2854
    %v2856 = vrot.slane %v2831, %v2855
    %v2857 = vlaneseq
    %v2858 = vshrl.u32 %v2857, 7
    %v2859 = vsub.s32 6, %v2858
    %v2860 = vrot.slane %v2831, %v2859
    %v2861 = vlaneseq
    %v2862 = vshrl.u32 %v2861, 7
    %v2863 = vsub.s32 7, %v2862
    %v2864 = vrot.slane %v2831, %v2863
    %v2873 = vmul.f32 %v2717, %v2836
    %v2874 = vmul.f32 %v2718, %v2840
    %v2875 = vmul.f32 %v2719, %v2844
    %v2876 = vmul.f32 %v2720, %v2848
    %v2877 = vmul.f32 %v2721, %v2852
    %v2878 = vmul.f32 %v2722, %v2856
    %v2879 = vmul.f32 %v2723, %v2860
    %v2880 = vmul.f32 %v2724, %v2864
    %v2889 = vcombine.low %v2873, %v2874
    %v2890 = vcombine.low %v2875, %v2876
    %v2891 = vcombine.low %v2877, %v2878
    %v2892 = vcombine.low %v2879, %v2880
    %v2894 = vunpack.c.l.s4 1966171168
    %v2895 = vunpack.c.0.s8 %v2894
    %v2896 = vlaneseq
    %v2897 = vshrl.u32 %v2896, 7
    %v2898 = vsub.s32 %v2895, %v2897
    %v2899 = vrot.slane %v2889, %v2898
    %v2901 = vunpack.c.l.s4 1966171168
    %v2902 = vunpack.c.0.s8 %v2901
    %v2903 = vlaneseq
    %v2904 = vshrl.u32 %v2903, 7
    %v2905 = vsub.s32 %v2902, %v2904
    %v2906 = vrot.slane %v2890, %v2905
    %v2908 = vunpack.c.l.s4 1966171168
    %v2909 = vunpack.c.0.s8 %v2908
    %v2910 = vlaneseq
    %v2911 = vshrl.u32 %v2910, 7
    %v2912 = vsub.s32 %v2909, %v2911
    %v2913 = vrot.slane %v2891, %v2912
    %v2915 = vunpack.c.l.s4 1966171168
    %v2916 = vunpack.c.0.s8 %v2915
    %v2917 = vlaneseq
    %v2918 = vshrl.u32 %v2917, 7
    %v2919 = vsub.s32 %v2916, %v2918
    %v2920 = vrot.slane %v2892, %v2919
    %v2921 = vcombine.low %v2899, %v2906
    %v2922 = vcombine.low %v2913, %v2920
    %v2924 = vunpack.c.l.s4 1966171168
    %v2925 = vunpack.c.0.s8 %v2924
    %v2926 = vlaneseq
    %v2927 = vshrl.u32 %v2926, 7
    %v2928 = vsub.s32 %v2925, %v2927
    %v2929 = vrot.slane %v2921, %v2928
    %v2931 = vunpack.c.l.s4 1966171168
    %v2932 = vunpack.c.0.s8 %v2931
    %v2933 = vlaneseq
    %v2934 = vshrl.u32 %v2933, 7
    %v2935 = vsub.s32 %v2932, %v2934
    %v2936 = vrot.slane %v2922, %v2935
    %v2937 = vcombine.low %v2929, %v2936
    %v2939 = vsub.f32 %v2612, %v2937
    %v2940 = vmul.f32 %v2603, %v2836
    %v2941 = vmul.f32 %v2604, %v2840
    %v2942 = vmul.f32 %v2605, %v2844
    %v2943 = vmul.f32 %v2606, %v2848
    %v2944 = vmul.f32 %v2607, %v2852
    %v2945 = vmul.f32 %v2608, %v2856
    %v2946 = vmul.f32 %v2609, %v2860
    %v2947 = vmul.f32 %v2610, %v2864
    %v2949 = vlaneseq
    %v2950 = vshrl.u32 %v2949, 7
    %v2951 = vsub.s32 0, %v2950
    %v2952 = vrot.slane %v2939, %v2951
    %v2953 = vlaneseq
    %v2954 = vshrl.u32 %v2953, 7
    %v2955 = vsub.s32 1, %v2954
    %v2956 = vrot.slane %v2939, %v2955
    %v2957 = vlaneseq
    %v2958 = vshrl.u32 %v2957, 7
    %v2959 = vsub.s32 2, %v2958
    %v2960 = vrot.slane %v2939, %v2959
    %v2961 = vlaneseq
    %v2962 = vshrl.u32 %v2961, 7
    %v2963 = vsub.s32 3, %v2962
    %v2964 = vrot.slane %v2939, %v2963
    %v2965 = vlaneseq
    %v2966 = vshrl.u32 %v2965, 7
    %v2967 = vsub.s32 4, %v2966
    %v2968 = vrot.slane %v2939, %v2967
    %v2969 = vlaneseq
    %v2970 = vshrl.u32 %v2969, 7
    %v2971 = vsub.s32 5, %v2970
    %v2972 = vrot.slane %v2939, %v2971
    %v2973 = vlaneseq
    %v2974 = vshrl.u32 %v2973, 7
    %v2975 = vsub.s32 6, %v2974
    %v2976 = vrot.slane %v2939, %v2975
    %v2977 = vlaneseq
    %v2978 = vshrl.u32 %v2977, 7
    %v2979 = vsub.s32 7, %v2978
    %v2980 = vrot.slane %v2939, %v2979
    %v2989 = vadd.f32 %v2940, %v2952
    %v2990 = vadd.f32 %v2941, %v2956
    %v2991 = vadd.f32 %v2942, %v2960
    %v2992 = vadd.f32 %v2943, %v2964
    %v2993 = vadd.f32 %v2944, %v2968
    %v2994 = vadd.f32 %v2945, %v2972
    %v2995 = vadd.f32 %v2946, %v2976
    %v2996 = vadd.f32 %v2947, %v2980
    %vm2997 = vcmp.gt.f32.partialorder %v2989, 0.0
    %vm2998 = vcmp.gt.f32.partialorder %v2990, 0.0
    %vm2999 = vcmp.gt.f32.partialorder %v2991, 0.0
    %vm3000 = vcmp.gt.f32.partialorder %v2992, 0.0
    %vm3001 = vcmp.gt.f32.partialorder %v2993, 0.0
    %vm3002 = vcmp.gt.f32.partialorder %v2994, 0.0
    %vm3003 = vcmp.gt.f32.partialorder %v2995, 0.0
    %vm3004 = vcmp.gt.f32.partialorder %v2996, 0.0
    %v3005 = vmul.f32 %v2989, 0.2
    %v3006 = vmul.f32 %v2990, 0.2
    %v3007 = vmul.f32 %v2991, 0.2
    %v3008 = vmul.f32 %v2992, 0.2
    %v3009 = vmul.f32 %v2993, 0.2
    %v3010 = vmul.f32 %v2994, 0.2
    %v3011 = vmul.f32 %v2995, 0.2
    %v3012 = vmul.f32 %v2996, 0.2
    %v3013 = vsel %vm2997, %v2989, %v3005
    %v3014 = vsel %vm2998, %v2990, %v3006
    %v3015 = vsel %vm2999, %v2991, %v3007
    %v3016 = vsel %vm3000, %v2992, %v3008
    %v3017 = vsel %vm3001, %v2993, %v3009
    %v3018 = vsel %vm3002, %v2994, %v3010
    %v3019 = vsel %vm3003, %v2995, %v3011
    %v3020 = vsel %vm3004, %v2996, %v3012
    %v3021 = vpack.c.bf16 %v3013, %v3013
    %v3022 = vpack.c.bf16 %v3014, %v3014
    %v3023 = vpack.c.bf16 %v3015, %v3015
    %v3024 = vpack.c.bf16 %v3016, %v3016
    %v3025 = vpack.c.bf16 %v3017, %v3017
    %v3026 = vpack.c.bf16 %v3018, %v3018
    %v3027 = vpack.c.bf16 %v3019, %v3019
    %v3028 = vpack.c.bf16 %v3020, %v3020
    %v3029 = vld [vmem:[#allocation10] sm:$0xff]
    %v3030 = vld [vmem:[#allocation10 + $0x8] sm:$0xff]
    %v3031 = vld [vmem:[#allocation10 + $0x10] sm:$0xff]
    %v3032 = vld [vmem:[#allocation10 + $0x18] sm:$0xff]
    %v3033 = vld [vmem:[#allocation10 + $0x20] sm:$0xff]
    %v3034 = vld [vmem:[#allocation10 + $0x28] sm:$0xff]
    %v3035 = vld [vmem:[#allocation10 + $0x30] sm:$0xff]
    %v3036 = vld [vmem:[#allocation10 + $0x38] sm:$0xff]
    %v3037 = vld [vmem:[#allocation10 + $0x40] sm:$0xff]
    %v3038 = vld [vmem:[#allocation10 + $0x48] sm:$0xff]
    %v3039 = vld [vmem:[#allocation10 + $0x50] sm:$0xff]
    %v3040 = vld [vmem:[#allocation10 + $0x58] sm:$0xff]
    %v3041 = vld [vmem:[#allocation10 + $0x60] sm:$0xff]
    %v3042 = vld [vmem:[#allocation10 + $0x68] sm:$0xff]
    %v3043 = vld [vmem:[#allocation10 + $0x70] sm:$0xff]
    %v3044 = vld [vmem:[#allocation10 + $0x78] sm:$0xff]
    %v3045 = vld [vmem:[#allocation10 + $0x80] sm:$0xff]
    %v3046 = vld [vmem:[#allocation10 + $0x88] sm:$0xff]
    %v3047 = vld [vmem:[#allocation10 + $0x90] sm:$0xff]
    %v3048 = vld [vmem:[#allocation10 + $0x98] sm:$0xff]
    %v3049 = vld [vmem:[#allocation10 + $0xa0] sm:$0xff]
    %v3050 = vld [vmem:[#allocation10 + $0xa8] sm:$0xff]
    %v3051 = vld [vmem:[#allocation10 + $0xb0] sm:$0xff]
    %v3052 = vld [vmem:[#allocation10 + $0xb8] sm:$0xff]
    %v3053 = vld [vmem:[#allocation10 + $0xc0] sm:$0xff]
    %v3054 = vld [vmem:[#allocation10 + $0xc8] sm:$0xff]
    %v3055 = vld [vmem:[#allocation10 + $0xd0] sm:$0xff]
    %v3056 = vld [vmem:[#allocation10 + $0xd8] sm:$0xff]
    %v3057 = vld [vmem:[#allocation10 + $0xe0] sm:$0xff]
    %v3058 = vld [vmem:[#allocation10 + $0xe8] sm:$0xff]
    %v3059 = vld [vmem:[#allocation10 + $0xf0] sm:$0xff]
    %v3060 = vld [vmem:[#allocation10 + $0xf8] sm:$0xff]
    %v3061 = vld [vmem:[#allocation10 + $0x100] sm:$0xff]
    %v3062 = vld [vmem:[#allocation10 + $0x108] sm:$0xff]
    %v3063 = vld [vmem:[#allocation10 + $0x110] sm:$0xff]
    %v3064 = vld [vmem:[#allocation10 + $0x118] sm:$0xff]
    %v3065 = vld [vmem:[#allocation10 + $0x120] sm:$0xff]
    %v3066 = vld [vmem:[#allocation10 + $0x128] sm:$0xff]
    %v3067 = vld [vmem:[#allocation10 + $0x130] sm:$0xff]
    %v3068 = vld [vmem:[#allocation10 + $0x138] sm:$0xff]
    %v3069 = vld [vmem:[#allocation10 + $0x140] sm:$0xff]
    %v3070 = vld [vmem:[#allocation10 + $0x148] sm:$0xff]
    %v3071 = vld [vmem:[#allocation10 + $0x150] sm:$0xff]
    %v3072 = vld [vmem:[#allocation10 + $0x158] sm:$0xff]
    %v3073 = vld [vmem:[#allocation10 + $0x160] sm:$0xff]
    %v3074 = vld [vmem:[#allocation10 + $0x168] sm:$0xff]
    %v3075 = vld [vmem:[#allocation10 + $0x170] sm:$0xff]
    %v3076 = vld [vmem:[#allocation10 + $0x178] sm:$0xff]
    %v3077 = vld [vmem:[#allocation10 + $0x180] sm:$0xff]
    %v3078 = vld [vmem:[#allocation10 + $0x188] sm:$0xff]
    %v3079 = vld [vmem:[#allocation10 + $0x190] sm:$0xff]
    %v3080 = vld [vmem:[#allocation10 + $0x198] sm:$0xff]
    %v3081 = vld [vmem:[#allocation10 + $0x1a0] sm:$0xff]
    %v3082 = vld [vmem:[#allocation10 + $0x1a8] sm:$0xff]
    %v3083 = vld [vmem:[#allocation10 + $0x1b0] sm:$0xff]
    %v3084 = vld [vmem:[#allocation10 + $0x1b8] sm:$0xff]
    %v3085 = vld [vmem:[#allocation10 + $0x1c0] sm:$0xff]
    %v3086 = vld [vmem:[#allocation10 + $0x1c8] sm:$0xff]
    %v3087 = vld [vmem:[#allocation10 + $0x1d0] sm:$0xff]
    %v3088 = vld [vmem:[#allocation10 + $0x1d8] sm:$0xff]
    %v3089 = vld [vmem:[#allocation10 + $0x1e0] sm:$0xff]
    %v3090 = vld [vmem:[#allocation10 + $0x1e8] sm:$0xff]
    %v3091 = vld [vmem:[#allocation10 + $0x1f0] sm:$0xff]
    %v3092 = vld [vmem:[#allocation10 + $0x1f8] sm:$0xff]
    %v3093 = vunpack.c.l.s8.bf16 %v3029
    %v3094 = vunpack.c.l.s8.bf16 %v3030
    %v3095 = vunpack.c.h.s8.bf16 %v3029
    %v3096 = vunpack.c.h.s8.bf16 %v3030
    %v3097 = vunpack.c.l.s8.bf16 %v3031
    %v3098 = vunpack.c.l.s8.bf16 %v3032
    %v3099 = vunpack.c.h.s8.bf16 %v3031
    %v3100 = vunpack.c.h.s8.bf16 %v3032
    %v3101 = vunpack.c.l.s8.bf16 %v3033
    %v3102 = vunpack.c.l.s8.bf16 %v3034
    %v3103 = vunpack.c.h.s8.bf16 %v3033
    %v3104 = vunpack.c.h.s8.bf16 %v3034
    %v3105 = vunpack.c.l.s8.bf16 %v3035
    %v3106 = vunpack.c.l.s8.bf16 %v3036
    %v3107 = vunpack.c.h.s8.bf16 %v3035
    %v3108 = vunpack.c.h.s8.bf16 %v3036
    %v3109 = vunpack.c.l.s8.bf16 %v3037
    %v3110 = vunpack.c.l.s8.bf16 %v3038
    %v3111 = vunpack.c.h.s8.bf16 %v3037
    %v3112 = vunpack.c.h.s8.bf16 %v3038
    %v3113 = vunpack.c.l.s8.bf16 %v3039
    %v3114 = vunpack.c.l.s8.bf16 %v3040
    %v3115 = vunpack.c.h.s8.bf16 %v3039
    %v3116 = vunpack.c.h.s8.bf16 %v3040
    %v3117 = vunpack.c.l.s8.bf16 %v3041
    %v3118 = vunpack.c.l.s8.bf16 %v3042
    %v3119 = vunpack.c.h.s8.bf16 %v3041
    %v3120 = vunpack.c.h.s8.bf16 %v3042
    %v3121 = vunpack.c.l.s8.bf16 %v3043
    %v3122 = vunpack.c.l.s8.bf16 %v3044
    %v3123 = vunpack.c.h.s8.bf16 %v3043
    %v3124 = vunpack.c.h.s8.bf16 %v3044
    %v3125 = vunpack.c.l.s8.bf16 %v3045
    %v3126 = vunpack.c.l.s8.bf16 %v3046
    %v3127 = vunpack.c.h.s8.bf16 %v3045
    %v3128 = vunpack.c.h.s8.bf16 %v3046
    %v3129 = vunpack.c.l.s8.bf16 %v3047
    %v3130 = vunpack.c.l.s8.bf16 %v3048
    %v3131 = vunpack.c.h.s8.bf16 %v3047
    %v3132 = vunpack.c.h.s8.bf16 %v3048
    %v3133 = vunpack.c.l.s8.bf16 %v3049
    %v3134 = vunpack.c.l.s8.bf16 %v3050
    %v3135 = vunpack.c.h.s8.bf16 %v3049
    %v3136 = vunpack.c.h.s8.bf16 %v3050
    %v3137 = vunpack.c.l.s8.bf16 %v3051
    %v3138 = vunpack.c.l.s8.bf16 %v3052
    %v3139 = vunpack.c.h.s8.bf16 %v3051
    %v3140 = vunpack.c.h.s8.bf16 %v3052
    %v3141 = vunpack.c.l.s8.bf16 %v3053
    %v3142 = vunpack.c.l.s8.bf16 %v3054
    %v3143 = vunpack.c.h.s8.bf16 %v3053
    %v3144 = vunpack.c.h.s8.bf16 %v3054
    %v3145 = vunpack.c.l.s8.bf16 %v3055
    %v3146 = vunpack.c.l.s8.bf16 %v3056
    %v3147 = vunpack.c.h.s8.bf16 %v3055
    %v3148 = vunpack.c.h.s8.bf16 %v3056
    %v3149 = vunpack.c.l.s8.bf16 %v3057
    %v3150 = vunpack.c.l.s8.bf16 %v3058
    %v3151 = vunpack.c.h.s8.bf16 %v3057
    %v3152 = vunpack.c.h.s8.bf16 %v3058
    %v3153 = vunpack.c.l.s8.bf16 %v3059
    %v3154 = vunpack.c.l.s8.bf16 %v3060
    %v3155 = vunpack.c.h.s8.bf16 %v3059
    %v3156 = vunpack.c.h.s8.bf16 %v3060
    %v3157 = vunpack.c.l.s8.bf16 %v3061
    %v3158 = vunpack.c.l.s8.bf16 %v3062
    %v3159 = vunpack.c.h.s8.bf16 %v3061
    %v3160 = vunpack.c.h.s8.bf16 %v3062
    %v3161 = vunpack.c.l.s8.bf16 %v3063
    %v3162 = vunpack.c.l.s8.bf16 %v3064
    %v3163 = vunpack.c.h.s8.bf16 %v3063
    %v3164 = vunpack.c.h.s8.bf16 %v3064
    %v3165 = vunpack.c.l.s8.bf16 %v3065
    %v3166 = vunpack.c.l.s8.bf16 %v3066
    %v3167 = vunpack.c.h.s8.bf16 %v3065
    %v3168 = vunpack.c.h.s8.bf16 %v3066
    %v3169 = vunpack.c.l.s8.bf16 %v3067
    %v3170 = vunpack.c.l.s8.bf16 %v3068
    %v3171 = vunpack.c.h.s8.bf16 %v3067
    %v3172 = vunpack.c.h.s8.bf16 %v3068
    %v3173 = vunpack.c.l.s8.bf16 %v3069
    %v3174 = vunpack.c.l.s8.bf16 %v3070
    %v3175 = vunpack.c.h.s8.bf16 %v3069
    %v3176 = vunpack.c.h.s8.bf16 %v3070
    %v3177 = vunpack.c.l.s8.bf16 %v3071
    %v3178 = vunpack.c.l.s8.bf16 %v3072
    %v3179 = vunpack.c.h.s8.bf16 %v3071
    %v3180 = vunpack.c.h.s8.bf16 %v3072
    %v3181 = vunpack.c.l.s8.bf16 %v3073
    %v3182 = vunpack.c.l.s8.bf16 %v3074
    %v3183 = vunpack.c.h.s8.bf16 %v3073
    %v3184 = vunpack.c.h.s8.bf16 %v3074
    %v3185 = vunpack.c.l.s8.bf16 %v3075
    %v3186 = vunpack.c.l.s8.bf16 %v3076
    %v3187 = vunpack.c.h.s8.bf16 %v3075
    %v3188 = vunpack.c.h.s8.bf16 %v3076
    %v3189 = vunpack.c.l.s8.bf16 %v3077
    %v3190 = vunpack.c.l.s8.bf16 %v3078
    %v3191 = vunpack.c.h.s8.bf16 %v3077
    %v3192 = vunpack.c.h.s8.bf16 %v3078
    %v3193 = vunpack.c.l.s8.bf16 %v3079
    %v3194 = vunpack.c.l.s8.bf16 %v3080
    %v3195 = vunpack.c.h.s8.bf16 %v3079
    %v3196 = vunpack.c.h.s8.bf16 %v3080
    %v3197 = vunpack.c.l.s8.bf16 %v3081
    %v3198 = vunpack.c.l.s8.bf16 %v3082
    %v3199 = vunpack.c.h.s8.bf16 %v3081
    %v3200 = vunpack.c.h.s8.bf16 %v3082
    %v3201 = vunpack.c.l.s8.bf16 %v3083
    %v3202 = vunpack.c.l.s8.bf16 %v3084
    %v3203 = vunpack.c.h.s8.bf16 %v3083
    %v3204 = vunpack.c.h.s8.bf16 %v3084
    %v3205 = vunpack.c.l.s8.bf16 %v3085
    %v3206 = vunpack.c.l.s8.bf16 %v3086
    %v3207 = vunpack.c.h.s8.bf16 %v3085
    %v3208 = vunpack.c.h.s8.bf16 %v3086
    %v3209 = vunpack.c.l.s8.bf16 %v3087
    %v3210 = vunpack.c.l.s8.bf16 %v3088
    %v3211 = vunpack.c.h.s8.bf16 %v3087
    %v3212 = vunpack.c.h.s8.bf16 %v3088
    %v3213 = vunpack.c.l.s8.bf16 %v3089
    %v3214 = vunpack.c.l.s8.bf16 %v3090
    %v3215 = vunpack.c.h.s8.bf16 %v3089
    %v3216 = vunpack.c.h.s8.bf16 %v3090
    %v3217 = vunpack.c.l.s8.bf16 %v3091
    %v3218 = vunpack.c.l.s8.bf16 %v3092
    %v3219 = vunpack.c.h.s8.bf16 %v3091
    %v3220 = vunpack.c.h.s8.bf16 %v3092
    %3221 = vmatprep.subr.bf16.mxu0 %v3108
    %3222 = vmatpush1.bf16.msra.mxu0 %v3107
    %3223 = vmatprep.subr.bf16.mxu0 %v3106
    %3224 = vmatpush1.bf16.msra.mxu0 %v3105
    %3225 = vmatprep.subr.bf16.mxu0 %v3104
    %3226 = vmatpush1.bf16.msra.mxu0 %v3103
    %3227 = vmatprep.subr.bf16.mxu0 %v3102
    %3228 = vmatpush1.bf16.msra.mxu0 %v3101
    %3229 = vmatprep.subr.bf16.mxu0 %v3100
    %3230 = vmatpush1.bf16.msra.mxu0 %v3099
    %3231 = vmatprep.subr.bf16.mxu0 %v3098
    %3232 = vmatpush1.bf16.msra.mxu0 %v3097
    %3233 = vmatprep.subr.bf16.mxu0 %v3096
    %3234 = vmatpush1.bf16.msra.mxu0 %v3095
    %3235 = vmatprep.subr.bf16.mxu0 %v3094
    %3236 = vmatpush1.bf16.msra.mxu0 %v3093
    %3237 = vmatprep.subr.bf16.mxu0 %v3124
    %3238 = vmatpush2.bf16.msra.mxu0 %v3123
    %3239 = vmatprep.subr.bf16.mxu0 %v3122
    %3240 = vmatpush2.bf16.msra.mxu0 %v3121
    %3241 = vmatprep.subr.bf16.mxu0 %v3120
    %3242 = vmatpush2.bf16.msra.mxu0 %v3119
    %3243 = vmatprep.subr.bf16.mxu0 %v3118
    %3244 = vmatpush2.bf16.msra.mxu0 %v3117
    %3245 = vmatprep.subr.bf16.mxu0 %v3116
    %3246 = vmatpush2.bf16.msra.mxu0 %v3115
    %3247 = vmatprep.subr.bf16.mxu0 %v3114
    %3248 = vmatpush2.bf16.msra.mxu0 %v3113
    %3249 = vmatprep.subr.bf16.mxu0 %v3112
    %3250 = vmatpush2.bf16.msra.mxu0 %v3111
    %3251 = vmatprep.subr.bf16.mxu0 %v3110
    %3252 = vmatpush2.bf16.msra.mxu0 %v3109
    %3253 = vmatprep.mubr.bf16.mxu0 %v3022
    %3254 = vmatmul.mubr.bf16.gmra.mxu0 %v3021
    %v3255 = vpop.f32.mrf.mxu0
    %v3256 = vadd.f32 0.0, %v3255
    %v3257 = vpop.f32.mrf.mxu0
    %v3258 = vadd.f32 0.0, %v3257
    %v3259 = vpop.f32.mrf.mxu0
    %v3260 = vpop.f32.mrf.mxu0
    %3261 = vdwg.mxu0
    %3262 = vmatprep.subr.bf16.mxu0 %v3140
    %3263 = vmatpush1.bf16.msra.mxu0 %v3139
    %3264 = vmatprep.subr.bf16.mxu0 %v3138
    %3265 = vmatpush1.bf16.msra.mxu0 %v3137
    %3266 = vmatprep.subr.bf16.mxu0 %v3136
    %3267 = vmatpush1.bf16.msra.mxu0 %v3135
    %3268 = vmatprep.subr.bf16.mxu0 %v3134
    %3269 = vmatpush1.bf16.msra.mxu0 %v3133
    %3270 = vmatprep.subr.bf16.mxu0 %v3132
    %3271 = vmatpush1.bf16.msra.mxu0 %v3131
    %3272 = vmatprep.subr.bf16.mxu0 %v3130
    %3273 = vmatpush1.bf16.msra.mxu0 %v3129
    %3274 = vmatprep.subr.bf16.mxu0 %v3128
    %3275 = vmatpush1.bf16.msra.mxu0 %v3127
    %3276 = vmatprep.subr.bf16.mxu0 %v3126
    %3277 = vmatpush1.bf16.msra.mxu0 %v3125
    %3278 = vmatprep.subr.bf16.mxu0 %v3156
    %3279 = vmatpush2.bf16.msra.mxu0 %v3155
    %3280 = vmatprep.subr.bf16.mxu0 %v3154
    %3281 = vmatpush2.bf16.msra.mxu0 %v3153
    %3282 = vmatprep.subr.bf16.mxu0 %v3152
    %3283 = vmatpush2.bf16.msra.mxu0 %v3151
    %3284 = vmatprep.subr.bf16.mxu0 %v3150
    %3285 = vmatpush2.bf16.msra.mxu0 %v3149
    %3286 = vmatprep.subr.bf16.mxu0 %v3148
    %3287 = vmatpush2.bf16.msra.mxu0 %v3147
    %3288 = vmatprep.subr.bf16.mxu0 %v3146
    %3289 = vmatpush2.bf16.msra.mxu0 %v3145
    %3290 = vmatprep.subr.bf16.mxu0 %v3144
    %3291 = vmatpush2.bf16.msra.mxu0 %v3143
    %3292 = vmatprep.subr.bf16.mxu0 %v3142
    %3293 = vmatpush2.bf16.msra.mxu0 %v3141
    %3294 = vmatprep.mubr.bf16.mxu0 %v3024
    %3295 = vmatmul.mubr.bf16.gmra.mxu0 %v3023
    %v3296 = vpop.f32.mrf.mxu0
    %v3297 = vadd.f32 %v3256, %v3296
    %v3298 = vpop.f32.mrf.mxu0
    %v3299 = vadd.f32 %v3258, %v3298
    %v3300 = vpop.f32.mrf.mxu0
    %v3301 = vpop.f32.mrf.mxu0
    %3302 = vdwg.mxu0
    %3303 = vmatprep.subr.bf16.mxu0 %v3172
    %3304 = vmatpush1.bf16.msra.mxu0 %v3171
    %3305 = vmatprep.subr.bf16.mxu0 %v3170
    %3306 = vmatpush1.bf16.msra.mxu0 %v3169
    %3307 = vmatprep.subr.bf16.mxu0 %v3168
    %3308 = vmatpush1.bf16.msra.mxu0 %v3167
    %3309 = vmatprep.subr.bf16.mxu0 %v3166
    %3310 = vmatpush1.bf16.msra.mxu0 %v3165
    %3311 = vmatprep.subr.bf16.mxu0 %v3164
    %3312 = vmatpush1.bf16.msra.mxu0 %v3163
    %3313 = vmatprep.subr.bf16.mxu0 %v3162
    %3314 = vmatpush1.bf16.msra.mxu0 %v3161
    %3315 = vmatprep.subr.bf16.mxu0 %v3160
    %3316 = vmatpush1.bf16.msra.mxu0 %v3159
    %3317 = vmatprep.subr.bf16.mxu0 %v3158
    %3318 = vmatpush1.bf16.msra.mxu0 %v3157
    %3319 = vmatprep.subr.bf16.mxu0 %v3188
    %3320 = vmatpush2.bf16.msra.mxu0 %v3187
    %3321 = vmatprep.subr.bf16.mxu0 %v3186
    %3322 = vmatpush2.bf16.msra.mxu0 %v3185
    %3323 = vmatprep.subr.bf16.mxu0 %v3184
    %3324 = vmatpush2.bf16.msra.mxu0 %v3183
    %3325 = vmatprep.subr.bf16.mxu0 %v3182
    %3326 = vmatpush2.bf16.msra.mxu0 %v3181
    %3327 = vmatprep.subr.bf16.mxu0 %v3180
    %3328 = vmatpush2.bf16.msra.mxu0 %v3179
    %3329 = vmatprep.subr.bf16.mxu0 %v3178
    %3330 = vmatpush2.bf16.msra.mxu0 %v3177
    %3331 = vmatprep.subr.bf16.mxu0 %v3176
    %3332 = vmatpush2.bf16.msra.mxu0 %v3175
    %3333 = vmatprep.subr.bf16.mxu0 %v3174
    %3334 = vmatpush2.bf16.msra.mxu0 %v3173
    %3335 = vmatprep.mubr.bf16.mxu0 %v3026
    %3336 = vmatmul.mubr.bf16.gmra.mxu0 %v3025
    %v3337 = vpop.f32.mrf.mxu0
    %v3338 = vadd.f32 %v3297, %v3337
    %v3339 = vpop.f32.mrf.mxu0
    %v3340 = vadd.f32 %v3299, %v3339
    %v3341 = vpop.f32.mrf.mxu0
    %v3342 = vpop.f32.mrf.mxu0
    %3343 = vdwg.mxu0
    %3344 = vmatprep.subr.bf16.mxu0 %v3204
    %3345 = vmatpush1.bf16.msra.mxu0 %v3203
    %3346 = vmatprep.subr.bf16.mxu0 %v3202
    %3347 = vmatpush1.bf16.msra.mxu0 %v3201
    %3348 = vmatprep.subr.bf16.mxu0 %v3200
    %3349 = vmatpush1.bf16.msra.mxu0 %v3199
    %3350 = vmatprep.subr.bf16.mxu0 %v3198
    %3351 = vmatpush1.bf16.msra.mxu0 %v3197
    %3352 = vmatprep.subr.bf16.mxu0 %v3196
    %3353 = vmatpush1.bf16.msra.mxu0 %v3195
    %3354 = vmatprep.subr.bf16.mxu0 %v3194
    %3355 = vmatpush1.bf16.msra.mxu0 %v3193
    %3356 = vmatprep.subr.bf16.mxu0 %v3192
    %3357 = vmatpush1.bf16.msra.mxu0 %v3191
    %3358 = vmatprep.subr.bf16.mxu0 %v3190
    %3359 = vmatpush1.bf16.msra.mxu0 %v3189
    %3360 = vmatprep.subr.bf16.mxu0 %v3220
    %3361 = vmatpush2.bf16.msra.mxu0 %v3219
    %3362 = vmatprep.subr.bf16.mxu0 %v3218
    %3363 = vmatpush2.bf16.msra.mxu0 %v3217
    %3364 = vmatprep.subr.bf16.mxu0 %v3216
    %3365 = vmatpush2.bf16.msra.mxu0 %v3215
    %3366 = vmatprep.subr.bf16.mxu0 %v3214
    %3367 = vmatpush2.bf16.msra.mxu0 %v3213
    %3368 = vmatprep.subr.bf16.mxu0 %v3212
    %3369 = vmatpush2.bf16.msra.mxu0 %v3211
    %3370 = vmatprep.subr.bf16.mxu0 %v3210
    %3371 = vmatpush2.bf16.msra.mxu0 %v3209
    %3372 = vmatprep.subr.bf16.mxu0 %v3208
    %3373 = vmatpush2.bf16.msra.mxu0 %v3207
    %3374 = vmatprep.subr.bf16.mxu0 %v3206
    %3375 = vmatpush2.bf16.msra.mxu0 %v3205
    %3376 = vmatprep.mubr.bf16.mxu0 %v3028
    %3377 = vmatmul.mubr.bf16.gmra.mxu0 %v3027
    %v3378 = vpop.f32.mrf.mxu0
    %v3379 = vadd.f32 %v3338, %v3378
    %v3380 = vpop.f32.mrf.mxu0
    %v3381 = vadd.f32 %v3340, %v3380
    %v3382 = vpop.f32.mrf.mxu0
    %v3383 = vpop.f32.mrf.mxu0
    %3384 = vdwg.mxu0
    %v3385 = vld [vmem:[#allocation12 + $0x40] sm:$0x3]
    %v3387 = vlaneseq
    %v3388 = vshrl.u32 %v3387, 7
    %v3389 = vsub.s32 0, %v3388
    %v3390 = vrot.slane %v3385, %v3389
    %v3391 = vlaneseq
    %v3392 = vshrl.u32 %v3391, 7
    %v3393 = vsub.s32 1, %v3392
    %v3394 = vrot.slane %v3385, %v3393
    %v3397 = vmul.f32 %v3379, %v3390
    %v3398 = vmul.f32 %v3381, %v3394
    %v3399 = vld [vmem:[#allocation12 + $0x3e] sm:$0x3]
    %v3401 = vlaneseq
    %v3402 = vshrl.u32 %v3401, 7
    %v3403 = vsub.s32 0, %v3402
    %v3404 = vrot.slane %v3399, %v3403
    %v3405 = vlaneseq
    %v3406 = vshrl.u32 %v3405, 7
    %v3407 = vsub.s32 1, %v3406
    %v3408 = vrot.slane %v3399, %v3407
    %v3411 = vadd.f32 %v3397, %v3404
    %v3412 = vadd.f32 %v3398, %v3408
    %v3413 = vtanh.pop %v3411
    %v3414 = vtanh.pop %v3412
    %3415 = vst [vmem:[%s13] sm:$0xff] %v3413
    %3416 = vst [vmem:[%s13 + $0x8] sm:$0xff] %v3414
    // Predicated region
    $region82: #{generator_forward.1} parent=1 // pred_check
      _
    $region83: #{generator_forward.1} parent=1 // pred_check_branch
      %3418 = sbr.rel (0) target = $region85
    $region84: #{generator_forward.1} parent=1 // pred_region
      _
    $region85: #{generator_forward.1} parent=1 // pred_fallthru
      _
    // Predicated region
    $region86: #{generator_forward.1} parent=1 // pred_check
      _
    $region87: #{generator_forward.1} parent=1 // pred_check_branch
      %3420 = sbr.rel (0) target = $region89
    $region88: #{generator_forward.1} parent=1 // pred_region
      _
    $region89: #{generator_forward.1} parent=1 // pred_fallthru
      _
    %3421 = vsyncpa [#allocation3], 1
    %3422 = vsyncpa [#allocation5], 1
    %3423 = vsyncpa [#allocation8], 1
    %3424 = vsyncpa [#allocation11], 1

</llo_original>
